<compile_context>
chip_gen: v6e
topology: v6e:2x2x1
jax: 0.10.0
libtpu: 0.0.40
codegen_flags: <defaults>
</compile_context>

<pallas_src>
import functools
import math

import jax
import jax.numpy as jnp
from jax.experimental import pallas as pl
from jax.experimental.pallas import tpu as pltpu


# ----------------------------------------------------------------------------
# helpers: padding of hidden/gate dimensions to lane-friendly sizes
# ----------------------------------------------------------------------------
def _round_up(x, m):
    return ((x + m - 1) // m) * m


def _pad_gate_rows(w, H, Hp):
    """(4H, X) -> (4Hp, X): gate k occupies rows [k*Hp, k*Hp+H), rest zero."""
    if Hp == H:
        return w
    X = w.shape[1]
    out = jnp.zeros((4 * Hp, X), w.dtype)
    for k in range(4):
        out = out.at[k * Hp:k * Hp + H].set(w[k * H:(k + 1) * H])
    return out


def _pad_gate_vec(b, H, Hp):
    """(4H,) -> (1, 1, 4Hp) with gate k at [k*Hp, k*Hp+H)."""
    if Hp != H:
        out = jnp.zeros((4 * Hp,), b.dtype)
        for k in range(4):
            out = out.at[k * Hp:k * Hp + H].set(b[k * H:(k + 1) * H])
        b = out
    return b.reshape(1, 1, 4 * Hp)


def _prep_whh(w_hh, H, Hp):
    """(4H, H) -> (Hp, 4Hp) transposed, gate-block padded with zeros."""
    w = _pad_gate_rows(w_hh, H, Hp)                 # (4Hp, H)
    if Hp != H:
        w = jnp.pad(w, ((0, 0), (0, Hp - H)))       # (4Hp, Hp)
    return jnp.transpose(w)                         # (Hp, 4Hp)


def _prep_wih_half(w_half, H, Hp):
    """(4H, H) column-half of a layer>0 w_ih -> (4Hp, Hp), zero padded."""
    w = _pad_gate_rows(w_half, H, Hp)
    if Hp != H:
        w = jnp.pad(w, ((0, 0), (0, Hp - H)))
    return w


# ----------------------------------------------------------------------------
# Pallas kernel: one LSTM layer, BOTH directions, one time-block per grid step.
# ----------------------------------------------------------------------------
def bilstm_layer_kernel(len_ref, gf_ref, gb_ref, whhf_ref, whhb_ref,
                        yf_ref, yb_ref, hN_ref, cN_ref,
                        hf, cf, hb, cb, *, tb_size, hidden):
    nb = pl.num_programs(0)
    tb = pl.program_id(0)
    H = hidden

    @pl.when(tb == 0)
    def _init():
        hf[...] = jnp.zeros_like(hf)
        cf[...] = jnp.zeros_like(cf)
        hb[...] = jnp.zeros_like(hb)
        cb[...] = jnp.zeros_like(cb)

    lengths = len_ref[...]                      # (Np, 1) int32
    base_f = tb * tb_size                       # first fwd time in this block
    base_b = (nb - 1 - tb) * tb_size            # first time in mirrored block

    # hoist weight loads out of the inner loop
    whh_f = whhf_ref[...]                       # (Hp, 4Hp)
    whh_b = whhb_ref[...]

    def cell(g_pre, h_prev, c_prev, whh):
        g = g_pre + jnp.dot(h_prev, whh, preferred_element_type=jnp.float32)
        i_g = jax.nn.sigmoid(g[:, 0 * H:1 * H])
        f_g = jax.nn.sigmoid(g[:, 1 * H:2 * H])
        g_g = jnp.tanh(g[:, 2 * H:3 * H])
        o_g = jax.nn.sigmoid(g[:, 3 * H:4 * H])
        c_new = f_g * c_prev + i_g * g_g
        h_new = o_g * jnp.tanh(c_new)
        return h_new, c_new

    def step(j, carry):
        # ---- forward direction, global time t = base_f + j (ascending)
        h_new, c_new = cell(gf_ref[j], hf[...], cf[...], whh_f)
        m = lengths > (base_f + j)                           # (Np, 1) bool
        hf[...] = jnp.where(m, h_new, hf[...])
        cf[...] = jnp.where(m, c_new, cf[...])
        yf_ref[j] = jnp.where(m, h_new, 0.0)                 # zeros at padding

        # ---- backward direction, global time t = base_b + (TB-1-j) (descending)
        jb = tb_size - 1 - j
        h_new, c_new = cell(gb_ref[jb], hb[...], cb[...], whh_b)
        m = lengths > (base_b + jb)
        hb[...] = jnp.where(m, h_new, hb[...])
        cb[...] = jnp.where(m, c_new, cb[...])
        yb_ref[jb] = jnp.where(m, h_new, 0.0)
        return carry

    jax.lax.fori_loop(0, tb_size, step, 0, unroll=True)

    # resident outputs: one (cheap) write per grid step, final step wins
    hN_ref[0] = hf[...]
    hN_ref[1] = hb[...]
    cN_ref[0] = cf[...]
    cN_ref[1] = cb[...]


def run_bilstm_layer(lengths, gates_f, gates_b, whhf_t, whhb_t, *, TB):
    """gates_*: (T_pad, Np, 4Hp) f32 pre-computed input projections (+bias).
    Returns y_f, y_b: (T_pad, Np, Hp); hN, cN: (2, Np, Hp)."""
    T_pad, Np, G = gates_f.shape
    Hp = G // 4
    NB = T_pad // TB

    kern = functools.partial(bilstm_layer_kernel, tb_size=TB, hidden=Hp)

    y_f, y_b, hN, cN = pl.pallas_call(
        kern,
        out_shape=(
            jax.ShapeDtypeStruct((T_pad, Np, Hp), jnp.float32),
            jax.ShapeDtypeStruct((T_pad, Np, Hp), jnp.float32),
            jax.ShapeDtypeStruct((2, Np, Hp), jnp.float32),
            jax.ShapeDtypeStruct((2, Np, Hp), jnp.float32),
        ),
        grid=(NB,),
        in_specs=[
            pl.BlockSpec((Np, 1), lambda tb: (0, 0)),                  # lengths
            pl.BlockSpec((TB, Np, G), lambda tb: (tb, 0, 0)),          # fwd gates
            pl.BlockSpec((TB, Np, G), lambda tb: (NB - 1 - tb, 0, 0)),  # bwd gates
            pl.BlockSpec((Hp, G), lambda tb: (0, 0)),                  # W_hh_f^T
            pl.BlockSpec((Hp, G), lambda tb: (0, 0)),                  # W_hh_b^T
        ],
        out_specs=(
            pl.BlockSpec((TB, Np, Hp), lambda tb: (tb, 0, 0)),          # y_fwd
            pl.BlockSpec((TB, Np, Hp), lambda tb: (NB - 1 - tb, 0, 0)),  # y_bwd
            pl.BlockSpec((2, Np, Hp), lambda tb: (0, 0, 0)),            # h_N
            pl.BlockSpec((2, Np, Hp), lambda tb: (0, 0, 0)),            # c_N
        ),
        scratch_shapes=[pltpu.VMEM((Np, Hp), jnp.float32)] * 4,
        compiler_params=pltpu.CompilerParams(
            dimension_semantics=("arbitrary",)),
    )(lengths, gates_f, gates_b, whhf_t, whhb_t)
    return y_f, y_b, hN, cN


# ----------------------------------------------------------------------------
# Encoder wrapper (multi-layer, bidirectional)
# ----------------------------------------------------------------------------
def init_encoder_params(key, input_size, hidden_size, num_layers,
                        bidirectional=True):
    num_dirs = 2 if bidirectional else 1
    bound = 1.0 / math.sqrt(hidden_size)
    params = []
    for layer in range(num_layers):
        in_dim = input_size if layer == 0 else hidden_size * num_dirs
        layer_p = []
        for _d in range(num_dirs):
            key, k1, k2, k3, k4 = jax.random.split(key, 5)
            w_ih = jax.random.uniform(k1, (4 * hidden_size, in_dim),
                                      jnp.float32, -bound, bound)
            w_hh = jax.random.uniform(k2, (4 * hidden_size, hidden_size),
                                      jnp.float32, -bound, bound)
            b_ih = jax.random.uniform(k3, (4 * hidden_size,),
                                      jnp.float32, -bound, bound)
            b_hh = jax.random.uniform(k4, (4 * hidden_size,),
                                      jnp.float32, -bound, bound)
            layer_p.append((w_ih, w_hh, b_ih, b_hh))
        params.append(layer_p)
    return params


def encoder_forward(params, padded_input, input_lengths, *, time_block=32):
    """padded_input: (N, T, D) f32, input_lengths: (N,) int (sorted desc)."""
    N, T, _D = padded_input.shape
    H = params[0][0][1].shape[1]                     # w_hh: (4H, H)
    Hp = _round_up(H, 128)                           # lane-aligned hidden
    Np = _round_up(N, 8)                             # sublane-aligned batch
    TB = min(time_block, _round_up(T, 8))            # timesteps per grid step
    T_pad = _round_up(T, TB)
    prec = jax.lax.Precision.HIGHEST                 # for wrapper-side matmuls

    # pad batch / time (padded rows get length 0 -> fully masked in-kernel)
    x = jnp.pad(padded_input, ((0, Np - N), (0, T_pad - T), (0, 0)))
    lengths = jnp.pad(input_lengths.astype(jnp.int32),
                      (0, Np - N)).reshape(Np, 1)

    y_f = y_b = None
    h_list, c_list = [], []
    for li, layer_p in enumerate(params):
        (wih_f, whh_f, bih_f, bhh_f) = layer_p[0]
        (wih_b, whh_b, bih_b, bhh_b) = layer_p[1]
        bf = _pad_gate_vec(bih_f + bhh_f, H, Hp)     # (1,1,4Hp)
        bb = _pad_gate_vec(bih_b + bhh_b, H, Hp)

        # --- hoisted input projection: one big matmul over ALL timesteps,
        #     producing time-major pre-gates (T_pad, Np, 4Hp).
        if li == 0:
            wf = _pad_gate_rows(wih_f, H, Hp)        # (4Hp, D)
            wb = _pad_gate_rows(wih_b, H, Hp)
            gates_f = jnp.einsum('ntd,gd->tng', x, wf, precision=prec) + bf
            gates_b = jnp.einsum('ntd,gd->tng', x, wb, precision=prec) + bb
        else:
            # consume fwd/bwd halves separately -> no (T,N,2H) concat needed
            wf_f = _prep_wih_half(wih_f[:, :H], H, Hp)
            wf_b = _prep_wih_half(wih_f[:, H:], H, Hp)
            wb_f = _prep_wih_half(wih_b[:, :H], H, Hp)
            wb_b = _prep_wih_half(wih_b[:, H:], H, Hp)
            gates_f = (jnp.einsum('tnh,gh->tng', y_f, wf_f, precision=prec)
                       + jnp.einsum('tnh,gh->tng', y_b, wf_b, precision=prec)
                       + bf)
            gates_b = (jnp.einsum('tnh,gh->tng', y_f, wb_f, precision=prec)
                       + jnp.einsum('tnh,gh->tng', y_b, wb_b, precision=prec)
                       + bb)

        whhf_t = _prep_whh(whh_f, H, Hp)             # (Hp, 4Hp)
        whhb_t = _prep_whh(whh_b, H, Hp)

        y_f, y_b, hN, cN = run_bilstm_layer(lengths, gates_f, gates_b,
                                            whhf_t, whhb_t, TB=TB)
        h_list.append(hN)
        c_list.append(cN)

    # single final concat/transpose (required by the module's output format)
    out_tnh = jnp.concatenate([y_f[:T, :N, :H], y_b[:T, :N, :H]], axis=-1)
    output = jnp.transpose(out_tnh, (1, 0, 2))               # (N, T, 2H)
    h_n = jnp.concatenate([h[:, :N, :H] for h in h_list], axis=0)
    c_n = jnp.concatenate([c[:, :N, :H] for c in c_list], axis=0)
    return output, (h_n, c_n)


# ----------------------------------------------------------------------------
# Pure-JAX reference (lax.scan) used only for correctness checking
# ----------------------------------------------------------------------------
def _ref_lstm_dir(x_tnd, lengths, w_ih, w_hh, b_ih, b_hh, reverse):
    T, N, _D = x_tnd.shape
    H = w_hh.shape[1]

    def cell(carry, inp):
        h, c = carry
        x_t, t = inp
        gates = (jnp.dot(x_t, w_ih.T, precision=jax.lax.Precision.HIGHEST)
                 + jnp.dot(h, w_hh.T, precision=jax.lax.Precision.HIGHEST)
                 + b_ih + b_hh)
        i_g, f_g, g_g, o_g = jnp.split(gates, 4, axis=-1)
        i_g = jax.nn.sigmoid(i_g)
        f_g = jax.nn.sigmoid(f_g)
        g_g = jnp.tanh(g_g)
        o_g = jax.nn.sigmoid(o_g)
        c_new = f_g * c + i_g * g_g
        h_new = o_g * jnp.tanh(c_new)
        mask = (lengths > t)[:, None]
        h_u = jnp.where(mask, h_new, h)
        c_u = jnp.where(mask, c_new, c)
        y = jnp.where(mask, h_new, 0.0)
        return (h_u, c_u), y

    ts = jnp.arange(T)
    xs = x_tnd
    if reverse:
        ts = ts[::-1]
        xs = xs[::-1]
    (hN, cN), ys = jax.lax.scan(cell,
                                (jnp.zeros((N, H), jnp.float32),
                                 jnp.zeros((N, H), jnp.float32)),
                                (xs, ts))
    if reverse:
        ys = ys[::-1]
    return ys, hN, cN


def _ref_encoder(params, padded_input, input_lengths):
    x = jnp.transpose(padded_input, (1, 0, 2))
    lengths = input_lengths.astype(jnp.int32)
    h_list, c_list = [], []
    for layer_p in params:
        outs = []
        for d, (w_ih, w_hh, b_ih, b_hh) in enumerate(layer_p):
            y, hN, cN = _ref_lstm_dir(x, lengths, w_ih, w_hh, b_ih, b_hh,
                                      reverse=(d == 1))
            outs.append(y)
            h_list.append(hN)
            c_list.append(cN)
        x = jnp.concatenate(outs, axis=-1)
    return (jnp.transpose(x, (1, 0, 2)),
            (jnp.stack(h_list, 0), jnp.stack(c_list, 0)))


# ----------------------------------------------------------------------------
if __name__ == "__main__":
    # Small, module-consistent shapes: N x T x D input, 3-layer BiLSTM.
    batch, seq_len = 4, 8
    input_size, hidden_size, num_layers = 16, 32, 3

    key = jax.random.PRNGKey(0)
    key, kx, kp = jax.random.split(key, 3)
    padded_input = jax.random.normal(kx, (batch, seq_len, input_size),
                                     dtype=jnp.float32)
    # pack_padded_sequence default expects lengths sorted in decreasing order.
    input_lengths = jnp.array([8, 6, 5, 3], dtype=jnp.int32)

    params = init_encoder_params(kp, input_size, hidden_size, num_layers,
                                 bidirectional=True)

    fwd = jax.jit(encoder_forward)
    output, (h_n, c_n) = fwd(params, padded_input, input_lengths)
    jax.block_until_ready((output, h_n, c_n))

    # sanity check against the pure-JAX reference of the same semantics
    ref_out, (ref_h, ref_c) = _ref_encoder(params, padded_input, input_lengths)
    assert output.shape == (batch, seq_len, 2 * hidden_size)
    assert h_n.shape == (num_layers * 2, batch, hidden_size)
    assert c_n.shape == (num_layers * 2, batch, hidden_size)
    assert jnp.allclose(output, ref_out, atol=1e-2, rtol=1e-2)
    assert jnp.allclose(h_n, ref_h, atol=1e-2, rtol=1e-2)
    assert jnp.allclose(c_n, ref_c, atol=1e-2, rtol=1e-2)

    print("KERNEL_OK")
</pallas_src>

<mosaic_0001>
module attributes {stable_mosaic.version = 11 : i64} {
  func.func @bilstm_layer_kernel(%arg0: i32, %arg1: memref<8x1xi32, #tpu.memory_space<vmem>>, %arg2: memref<8x8x512xf32, #tpu.memory_space<vmem>>, %arg3: memref<8x8x512xf32, #tpu.memory_space<vmem>>, %arg4: memref<128x512xf32, #tpu.memory_space<vmem>>, %arg5: memref<128x512xf32, #tpu.memory_space<vmem>>, %arg6: memref<8x8x128xf32, #tpu.memory_space<vmem>>, %arg7: memref<8x8x128xf32, #tpu.memory_space<vmem>>, %arg8: memref<2x8x128xf32, #tpu.memory_space<vmem>>, %arg9: memref<2x8x128xf32, #tpu.memory_space<vmem>>, %arg10: memref<8x128xf32, #tpu.memory_space<vmem>>, %arg11: memref<8x128xf32, #tpu.memory_space<vmem>>, %arg12: memref<8x128xf32, #tpu.memory_space<vmem>>, %arg13: memref<8x128xf32, #tpu.memory_space<vmem>>) attributes {dimension_semantics = [#tpu.dimension_semantics<arbitrary>], iteration_bounds = array<i64: 1>, scalar_prefetch = 0 : i64, scratch_operands = 4 : i64, tpu.core_type = #tpu.core_type<tc>, window_params = [{pipeline_mode = #tpu.pipeline_mode<synchronous>, transform_indices = @transform_0, window_bounds = array<i64: 8, 1>}, {transform_indices = @transform_1, window_bounds = array<i64: 8, 8, 512>}, {transform_indices = @transform_2, window_bounds = array<i64: 8, 8, 512>}, {pipeline_mode = #tpu.pipeline_mode<synchronous>, transform_indices = @transform_3, window_bounds = array<i64: 128, 512>}, {pipeline_mode = #tpu.pipeline_mode<synchronous>, transform_indices = @transform_4, window_bounds = array<i64: 128, 512>}, {transform_indices = @transform_5, window_bounds = array<i64: 8, 8, 128>}, {transform_indices = @transform_6, window_bounds = array<i64: 8, 8, 128>}, {pipeline_mode = #tpu.pipeline_mode<synchronous>, transform_indices = @transform_7, window_bounds = array<i64: 2, 8, 128>}, {pipeline_mode = #tpu.pipeline_mode<synchronous>, transform_indices = @transform_8, window_bounds = array<i64: 2, 8, 128>}]} {
    %c0_i32 = arith.constant 0 : i32
    %0 = arith.cmpi eq, %arg0, %c0_i32 : i32
    %1 = arith.extui %0 : i1 to i32
    %c0_i32_0 = arith.constant 0 : i32
    %2 = arith.cmpi ne, %1, %c0_i32_0 : i32
    scf.if %2 {
      %cst_372 = arith.constant 0.000000e+00 : f32
      %881 = vector.broadcast %cst_372 : f32 to vector<8x128xf32>
      %c0_373 = arith.constant 0 : index
      %c0_374 = arith.constant 0 : index
      %882 = vector.load %arg10[%c0_373, %c0_374] : memref<8x128xf32, #tpu.memory_space<vmem>>, vector<8x128xf32>
      tpu.vector_store %arg10[%c0_373, %c0_374], %881 {strides = array<i32>} : memref<8x128xf32, #tpu.memory_space<vmem>>, vector<8x128xf32>,
      %cst_375 = arith.constant 0.000000e+00 : f32
      %883 = vector.broadcast %cst_375 : f32 to vector<8x128xf32>
      %c0_376 = arith.constant 0 : index
      %c0_377 = arith.constant 0 : index
      %884 = vector.load %arg11[%c0_376, %c0_377] : memref<8x128xf32, #tpu.memory_space<vmem>>, vector<8x128xf32>
      tpu.vector_store %arg11[%c0_376, %c0_377], %883 {strides = array<i32>} : memref<8x128xf32, #tpu.memory_space<vmem>>, vector<8x128xf32>,
      %cst_378 = arith.constant 0.000000e+00 : f32
      %885 = vector.broadcast %cst_378 : f32 to vector<8x128xf32>
      %c0_379 = arith.constant 0 : index
      %c0_380 = arith.constant 0 : index
      %886 = vector.load %arg12[%c0_379, %c0_380] : memref<8x128xf32, #tpu.memory_space<vmem>>, vector<8x128xf32>
      tpu.vector_store %arg12[%c0_379, %c0_380], %885 {strides = array<i32>} : memref<8x128xf32, #tpu.memory_space<vmem>>, vector<8x128xf32>,
      %cst_381 = arith.constant 0.000000e+00 : f32
      %887 = vector.broadcast %cst_381 : f32 to vector<8x128xf32>
      %c0_382 = arith.constant 0 : index
      %c0_383 = arith.constant 0 : index
      %888 = vector.load %arg13[%c0_382, %c0_383] : memref<8x128xf32, #tpu.memory_space<vmem>>, vector<8x128xf32>
      tpu.vector_store %arg13[%c0_382, %c0_383], %887 {strides = array<i32>} : memref<8x128xf32, #tpu.memory_space<vmem>>, vector<8x128xf32>,
    } else {
    }
    %c0 = arith.constant 0 : index
    %c0_1 = arith.constant 0 : index
    %3 = vector.load %arg1[%c0, %c0_1] : memref<8x1xi32, #tpu.memory_space<vmem>>, vector<8x1xi32>
    %c8_i32 = arith.constant 8 : i32
    %4 = arith.muli %arg0, %c8_i32 : i32
    %c0_i32_2 = arith.constant 0 : i32
    %5 = arith.subi %c0_i32_2, %arg0 : i32
    %c8_i32_3 = arith.constant 8 : i32
    %6 = arith.muli %5, %c8_i32_3 : i32
    %c0_4 = arith.constant 0 : index
    %c0_5 = arith.constant 0 : index
    %7 = vector.load %arg4[%c0_4, %c0_5] : memref<128x512xf32, #tpu.memory_space<vmem>>, vector<128x512xf32>
    %c0_6 = arith.constant 0 : index
    %c0_7 = arith.constant 0 : index
    %8 = vector.load %arg5[%c0_6, %c0_7] : memref<128x512xf32, #tpu.memory_space<vmem>>, vector<128x512xf32>
    %c0_i32_8 = arith.constant 0 : i32
    %9 = arith.index_cast %c0_i32_8 : i32 to index
    %c0_9 = arith.constant 0 : index
    %c0_10 = arith.constant 0 : index
    %10 = vector.load %arg2[%9, %c0_9, %c0_10] : memref<8x8x512xf32, #tpu.memory_space<vmem>>, vector<1x8x512xf32>
    %11 = vector.shape_cast %10 : vector<1x8x512xf32> to vector<8x512xf32>
    %c0_11 = arith.constant 0 : index
    %c0_12 = arith.constant 0 : index
    %12 = vector.load %arg10[%c0_11, %c0_12] : memref<8x128xf32, #tpu.memory_space<vmem>>, vector<8x128xf32>
    %c0_13 = arith.constant 0 : index
    %c0_14 = arith.constant 0 : index
    %13 = vector.load %arg11[%c0_13, %c0_14] : memref<8x128xf32, #tpu.memory_space<vmem>>, vector<8x128xf32>
    %cst = arith.constant dense<0.000000e+00> : vector<8x512xf32>
    %14 = tpu.matmul %12, %7, %cst {dimension_numbers = #tpu.dot_dimension_numbers<[1], [0], [0], [1], [0, 0, 1, 1], [], []>} : vector<8x128xf32>, vector<128x512xf32>, vector<8x512xf32> -> vector<8x512xf32>
    %15 = arith.addf %11, %14 : vector<8x512xf32>
    %16 = vector.extract_strided_slice %15 {offsets = [0, 0], sizes = [8, 128], strides = [1, 1]} : vector<8x512xf32> to vector<8x128xf32>
    %17 = arith.negf %16 : vector<8x128xf32>
    %18 = math.exp %17 : vector<8x128xf32>
    %cst_15 = arith.constant 1.000000e+00 : f32
    %19 = vector.broadcast %cst_15 : f32 to vector<8x128xf32>
    %20 = arith.addf %19, %18 : vector<8x128xf32>
    %21 = arith.divf %19, %20 : vector<8x128xf32>
    %22 = vector.extract_strided_slice %15 {offsets = [0, 128], sizes = [8, 128], strides = [1, 1]} : vector<8x512xf32> to vector<8x128xf32>
    %23 = arith.negf %22 : vector<8x128xf32>
    %24 = math.exp %23 : vector<8x128xf32>
    %cst_16 = arith.constant 1.000000e+00 : f32
    %25 = vector.broadcast %cst_16 : f32 to vector<8x128xf32>
    %26 = arith.addf %25, %24 : vector<8x128xf32>
    %27 = arith.divf %25, %26 : vector<8x128xf32>
    %28 = vector.extract_strided_slice %15 {offsets = [0, 256], sizes = [8, 128], strides = [1, 1]} : vector<8x512xf32> to vector<8x128xf32>
    %29 = math.tanh %28 : vector<8x128xf32>
    %30 = vector.extract_strided_slice %15 {offsets = [0, 384], sizes = [8, 128], strides = [1, 1]} : vector<8x512xf32> to vector<8x128xf32>
    %31 = arith.negf %30 : vector<8x128xf32>
    %32 = math.exp %31 : vector<8x128xf32>
    %cst_17 = arith.constant 1.000000e+00 : f32
    %33 = vector.broadcast %cst_17 : f32 to vector<8x128xf32>
    %34 = arith.addf %33, %32 : vector<8x128xf32>
    %35 = arith.divf %33, %34 : vector<8x128xf32>
    %36 = arith.mulf %27, %13 : vector<8x128xf32>
    %37 = arith.mulf %21, %29 : vector<8x128xf32>
    %38 = arith.addf %36, %37 : vector<8x128xf32>
    %39 = math.tanh %38 : vector<8x128xf32>
    %40 = arith.mulf %35, %39 : vector<8x128xf32>
    %41 = arith.addi %4, %c0_i32_8 : i32
    %42 = vector.broadcast %41 : i32 to vector<8x1xi32>
    %43 = arith.cmpi sgt, %3, %42 : vector<8x1xi32>
    %c0_18 = arith.constant 0 : index
    %c0_19 = arith.constant 0 : index
    %44 = vector.load %arg10[%c0_18, %c0_19] : memref<8x128xf32, #tpu.memory_space<vmem>>, vector<8x128xf32>
    %45 = vector.shape_cast %43 : vector<8x1xi1> to vector<8x1xi1>
    %46 = vector.broadcast %45 : vector<8x1xi1> to vector<8x128xi1>
    %47 = arith.select %46, %40, %44 : vector<8x128xi1>, vector<8x128xf32>
    %c0_20 = arith.constant 0 : index
    %c0_21 = arith.constant 0 : index
    %48 = vector.load %arg10[%c0_20, %c0_21] : memref<8x128xf32, #tpu.memory_space<vmem>>, vector<8x128xf32>
    tpu.vector_store %arg10[%c0_20, %c0_21], %47 {strides = array<i32>} : memref<8x128xf32, #tpu.memory_space<vmem>>, vector<8x128xf32>,
    %c0_22 = arith.constant 0 : index
    %c0_23 = arith.constant 0 : index
    %49 = vector.load %arg11[%c0_22, %c0_23] : memref<8x128xf32, #tpu.memory_space<vmem>>, vector<8x128xf32>
    %50 = vector.shape_cast %43 : vector<8x1xi1> to vector<8x1xi1>
    %51 = vector.broadcast %50 : vector<8x1xi1> to vector<8x128xi1>
    %52 = arith.select %51, %38, %49 : vector<8x128xi1>, vector<8x128xf32>
    %c0_24 = arith.constant 0 : index
    %c0_25 = arith.constant 0 : index
    %53 = vector.load %arg11[%c0_24, %c0_25] : memref<8x128xf32, #tpu.memory_space<vmem>>, vector<8x128xf32>
    tpu.vector_store %arg11[%c0_24, %c0_25], %52 {strides = array<i32>} : memref<8x128xf32, #tpu.memory_space<vmem>>, vector<8x128xf32>,
    %cst_26 = arith.constant 0.000000e+00 : f32
    %54 = vector.shape_cast %43 : vector<8x1xi1> to vector<8x1xi1>
    %55 = vector.broadcast %54 : vector<8x1xi1> to vector<8x128xi1>
    %56 = vector.broadcast %cst_26 : f32 to vector<8x128xf32>
    %57 = arith.select %55, %40, %56 : vector<8x128xi1>, vector<8x128xf32>
    %58 = arith.index_cast %c0_i32_8 : i32 to index
    %c0_27 = arith.constant 0 : index
    %c0_28 = arith.constant 0 : index
    %59 = vector.load %arg6[%58, %c0_27, %c0_28] : memref<8x8x128xf32, #tpu.memory_space<vmem>>, vector<1x8x128xf32>
    %60 = vector.shape_cast %59 : vector<1x8x128xf32> to vector<8x128xf32>
    %61 = vector.shape_cast %57 : vector<8x128xf32> to vector<1x8x128xf32>
    tpu.vector_store %arg6[%58, %c0_27, %c0_28], %61 {strides = array<i32>} : memref<8x8x128xf32, #tpu.memory_space<vmem>>, vector<1x8x128xf32>,
    %c7_i32 = arith.constant 7 : i32
    %62 = arith.subi %c7_i32, %c0_i32_8 : i32
    %63 = arith.index_cast %62 : i32 to index
    %c0_29 = arith.constant 0 : index
    %c0_30 = arith.constant 0 : index
    %64 = vector.load %arg3[%63, %c0_29, %c0_30] : memref<8x8x512xf32, #tpu.memory_space<vmem>>, vector<1x8x512xf32>
    %65 = vector.shape_cast %64 : vector<1x8x512xf32> to vector<8x512xf32>
    %c0_31 = arith.constant 0 : index
    %c0_32 = arith.constant 0 : index
    %66 = vector.load %arg12[%c0_31, %c0_32] : memref<8x128xf32, #tpu.memory_space<vmem>>, vector<8x128xf32>
    %c0_33 = arith.constant 0 : index
    %c0_34 = arith.constant 0 : index
    %67 = vector.load %arg13[%c0_33, %c0_34] : memref<8x128xf32, #tpu.memory_space<vmem>>, vector<8x128xf32>
    %cst_35 = arith.constant dense<0.000000e+00> : vector<8x512xf32>
    %68 = tpu.matmul %66, %8, %cst_35 {dimension_numbers = #tpu.dot_dimension_numbers<[1], [0], [0], [1], [0, 0, 1, 1], [], []>} : vector<8x128xf32>, vector<128x512xf32>, vector<8x512xf32> -> vector<8x512xf32>
    %69 = arith.addf %65, %68 : vector<8x512xf32>
    %70 = vector.extract_strided_slice %69 {offsets = [0, 0], sizes = [8, 128], strides = [1, 1]} : vector<8x512xf32> to vector<8x128xf32>
    %71 = arith.negf %70 : vector<8x128xf32>
    %72 = math.exp %71 : vector<8x128xf32>
    %cst_36 = arith.constant 1.000000e+00 : f32
    %73 = vector.broadcast %cst_36 : f32 to vector<8x128xf32>
    %74 = arith.addf %73, %72 : vector<8x128xf32>
    %75 = arith.divf %73, %74 : vector<8x128xf32>
    %76 = vector.extract_strided_slice %69 {offsets = [0, 128], sizes = [8, 128], strides = [1, 1]} : vector<8x512xf32> to vector<8x128xf32>
    %77 = arith.negf %76 : vector<8x128xf32>
    %78 = math.exp %77 : vector<8x128xf32>
    %cst_37 = arith.constant 1.000000e+00 : f32
    %79 = vector.broadcast %cst_37 : f32 to vector<8x128xf32>
    %80 = arith.addf %79, %78 : vector<8x128xf32>
    %81 = arith.divf %79, %80 : vector<8x128xf32>
    %82 = vector.extract_strided_slice %69 {offsets = [0, 256], sizes = [8, 128], strides = [1, 1]} : vector<8x512xf32> to vector<8x128xf32>
    %83 = math.tanh %82 : vector<8x128xf32>
    %84 = vector.extract_strided_slice %69 {offsets = [0, 384], sizes = [8, 128], strides = [1, 1]} : vector<8x512xf32> to vector<8x128xf32>
    %85 = arith.negf %84 : vector<8x128xf32>
    %86 = math.exp %85 : vector<8x128xf32>
    %cst_38 = arith.constant 1.000000e+00 : f32
    %87 = vector.broadcast %cst_38 : f32 to vector<8x128xf32>
    %88 = arith.addf %87, %86 : vector<8x128xf32>
    %89 = arith.divf %87, %88 : vector<8x128xf32>
    %90 = arith.mulf %81, %67 : vector<8x128xf32>
    %91 = arith.mulf %75, %83 : vector<8x128xf32>
    %92 = arith.addf %90, %91 : vector<8x128xf32>
    %93 = math.tanh %92 : vector<8x128xf32>
    %94 = arith.mulf %89, %93 : vector<8x128xf32>
    %95 = arith.addi %6, %62 : i32
    %96 = vector.broadcast %95 : i32 to vector<8x1xi32>
    %97 = arith.cmpi sgt, %3, %96 : vector<8x1xi32>
    %c0_39 = arith.constant 0 : index
    %c0_40 = arith.constant 0 : index
    %98 = vector.load %arg12[%c0_39, %c0_40] : memref<8x128xf32, #tpu.memory_space<vmem>>, vector<8x128xf32>
    %99 = vector.shape_cast %97 : vector<8x1xi1> to vector<8x1xi1>
    %100 = vector.broadcast %99 : vector<8x1xi1> to vector<8x128xi1>
    %101 = arith.select %100, %94, %98 : vector<8x128xi1>, vector<8x128xf32>
    %c0_41 = arith.constant 0 : index
    %c0_42 = arith.constant 0 : index
    %102 = vector.load %arg12[%c0_41, %c0_42] : memref<8x128xf32, #tpu.memory_space<vmem>>, vector<8x128xf32>
    tpu.vector_store %arg12[%c0_41, %c0_42], %101 {strides = array<i32>} : memref<8x128xf32, #tpu.memory_space<vmem>>, vector<8x128xf32>,
    %c0_43 = arith.constant 0 : index
    %c0_44 = arith.constant 0 : index
    %103 = vector.load %arg13[%c0_43, %c0_44] : memref<8x128xf32, #tpu.memory_space<vmem>>, vector<8x128xf32>
    %104 = vector.shape_cast %97 : vector<8x1xi1> to vector<8x1xi1>
    %105 = vector.broadcast %104 : vector<8x1xi1> to vector<8x128xi1>
    %106 = arith.select %105, %92, %103 : vector<8x128xi1>, vector<8x128xf32>
    %c0_45 = arith.constant 0 : index
    %c0_46 = arith.constant 0 : index
    %107 = vector.load %arg13[%c0_45, %c0_46] : memref<8x128xf32, #tpu.memory_space<vmem>>, vector<8x128xf32>
    tpu.vector_store %arg13[%c0_45, %c0_46], %106 {strides = array<i32>} : memref<8x128xf32, #tpu.memory_space<vmem>>, vector<8x128xf32>,
    %cst_47 = arith.constant 0.000000e+00 : f32
    %108 = vector.shape_cast %97 : vector<8x1xi1> to vector<8x1xi1>
    %109 = vector.broadcast %108 : vector<8x1xi1> to vector<8x128xi1>
    %110 = vector.broadcast %cst_47 : f32 to vector<8x128xf32>
    %111 = arith.select %109, %94, %110 : vector<8x128xi1>, vector<8x128xf32>
    %112 = arith.index_cast %62 : i32 to index
    %c0_48 = arith.constant 0 : index
    %c0_49 = arith.constant 0 : index
    %113 = vector.load %arg7[%112, %c0_48, %c0_49] : memref<8x8x128xf32, #tpu.memory_space<vmem>>, vector<1x8x128xf32>
    %114 = vector.shape_cast %113 : vector<1x8x128xf32> to vector<8x128xf32>
    %115 = vector.shape_cast %111 : vector<8x128xf32> to vector<1x8x128xf32>
    tpu.vector_store %arg7[%112, %c0_48, %c0_49], %115 {strides = array<i32>} : memref<8x8x128xf32, #tpu.memory_space<vmem>>, vector<1x8x128xf32>,
    %c1_i32 = arith.constant 1 : i32
    %116 = arith.index_cast %c1_i32 : i32 to index
    %c0_50 = arith.constant 0 : index
    %c0_51 = arith.constant 0 : index
    %117 = vector.load %arg2[%116, %c0_50, %c0_51] : memref<8x8x512xf32, #tpu.memory_space<vmem>>, vector<1x8x512xf32>
    %118 = vector.shape_cast %117 : vector<1x8x512xf32> to vector<8x512xf32>
    %c0_52 = arith.constant 0 : index
    %c0_53 = arith.constant 0 : index
    %119 = vector.load %arg10[%c0_52, %c0_53] : memref<8x128xf32, #tpu.memory_space<vmem>>, vector<8x128xf32>
    %c0_54 = arith.constant 0 : index
    %c0_55 = arith.constant 0 : index
    %120 = vector.load %arg11[%c0_54, %c0_55] : memref<8x128xf32, #tpu.memory_space<vmem>>, vector<8x128xf32>
    %cst_56 = arith.constant dense<0.000000e+00> : vector<8x512xf32>
    %121 = tpu.matmul %119, %7, %cst_56 {dimension_numbers = #tpu.dot_dimension_numbers<[1], [0], [0], [1], [0, 0, 1, 1], [], []>} : vector<8x128xf32>, vector<128x512xf32>, vector<8x512xf32> -> vector<8x512xf32>
    %122 = arith.addf %118, %121 : vector<8x512xf32>
    %123 = vector.extract_strided_slice %122 {offsets = [0, 0], sizes = [8, 128], strides = [1, 1]} : vector<8x512xf32> to vector<8x128xf32>
    %124 = arith.negf %123 : vector<8x128xf32>
    %125 = math.exp %124 : vector<8x128xf32>
    %cst_57 = arith.constant 1.000000e+00 : f32
    %126 = vector.broadcast %cst_57 : f32 to vector<8x128xf32>
    %127 = arith.addf %126, %125 : vector<8x128xf32>
    %128 = arith.divf %126, %127 : vector<8x128xf32>
    %129 = vector.extract_strided_slice %122 {offsets = [0, 128], sizes = [8, 128], strides = [1, 1]} : vector<8x512xf32> to vector<8x128xf32>
    %130 = arith.negf %129 : vector<8x128xf32>
    %131 = math.exp %130 : vector<8x128xf32>
    %cst_58 = arith.constant 1.000000e+00 : f32
    %132 = vector.broadcast %cst_58 : f32 to vector<8x128xf32>
    %133 = arith.addf %132, %131 : vector<8x128xf32>
    %134 = arith.divf %132, %133 : vector<8x128xf32>
    %135 = vector.extract_strided_slice %122 {offsets = [0, 256], sizes = [8, 128], strides = [1, 1]} : vector<8x512xf32> to vector<8x128xf32>
    %136 = math.tanh %135 : vector<8x128xf32>
    %137 = vector.extract_strided_slice %122 {offsets = [0, 384], sizes = [8, 128], strides = [1, 1]} : vector<8x512xf32> to vector<8x128xf32>
    %138 = arith.negf %137 : vector<8x128xf32>
    %139 = math.exp %138 : vector<8x128xf32>
    %cst_59 = arith.constant 1.000000e+00 : f32
    %140 = vector.broadcast %cst_59 : f32 to vector<8x128xf32>
    %141 = arith.addf %140, %139 : vector<8x128xf32>
    %142 = arith.divf %140, %141 : vector<8x128xf32>
    %143 = arith.mulf %134, %120 : vector<8x128xf32>
    %144 = arith.mulf %128, %136 : vector<8x128xf32>
    %145 = arith.addf %143, %144 : vector<8x128xf32>
    %146 = math.tanh %145 : vector<8x128xf32>
    %147 = arith.mulf %142, %146 : vector<8x128xf32>
    %148 = arith.addi %4, %c1_i32 : i32
    %149 = vector.broadcast %148 : i32 to vector<8x1xi32>
    %150 = arith.cmpi sgt, %3, %149 : vector<8x1xi32>
    %c0_60 = arith.constant 0 : index
    %c0_61 = arith.constant 0 : index
    %151 = vector.load %arg10[%c0_60, %c0_61] : memref<8x128xf32, #tpu.memory_space<vmem>>, vector<8x128xf32>
    %152 = vector.shape_cast %150 : vector<8x1xi1> to vector<8x1xi1>
    %153 = vector.broadcast %152 : vector<8x1xi1> to vector<8x128xi1>
    %154 = arith.select %153, %147, %151 : vector<8x128xi1>, vector<8x128xf32>
    %c0_62 = arith.constant 0 : index
    %c0_63 = arith.constant 0 : index
    %155 = vector.load %arg10[%c0_62, %c0_63] : memref<8x128xf32, #tpu.memory_space<vmem>>, vector<8x128xf32>
    tpu.vector_store %arg10[%c0_62, %c0_63], %154 {strides = array<i32>} : memref<8x128xf32, #tpu.memory_space<vmem>>, vector<8x128xf32>,
    %c0_64 = arith.constant 0 : index
    %c0_65 = arith.constant 0 : index
    %156 = vector.load %arg11[%c0_64, %c0_65] : memref<8x128xf32, #tpu.memory_space<vmem>>, vector<8x128xf32>
    %157 = vector.shape_cast %150 : vector<8x1xi1> to vector<8x1xi1>
    %158 = vector.broadcast %157 : vector<8x1xi1> to vector<8x128xi1>
    %159 = arith.select %158, %145, %156 : vector<8x128xi1>, vector<8x128xf32>
    %c0_66 = arith.constant 0 : index
    %c0_67 = arith.constant 0 : index
    %160 = vector.load %arg11[%c0_66, %c0_67] : memref<8x128xf32, #tpu.memory_space<vmem>>, vector<8x128xf32>
    tpu.vector_store %arg11[%c0_66, %c0_67], %159 {strides = array<i32>} : memref<8x128xf32, #tpu.memory_space<vmem>>, vector<8x128xf32>,
    %cst_68 = arith.constant 0.000000e+00 : f32
    %161 = vector.shape_cast %150 : vector<8x1xi1> to vector<8x1xi1>
    %162 = vector.broadcast %161 : vector<8x1xi1> to vector<8x128xi1>
    %163 = vector.broadcast %cst_68 : f32 to vector<8x128xf32>
    %164 = arith.select %162, %147, %163 : vector<8x128xi1>, vector<8x128xf32>
    %165 = arith.index_cast %c1_i32 : i32 to index
    %c0_69 = arith.constant 0 : index
    %c0_70 = arith.constant 0 : index
    %166 = vector.load %arg6[%165, %c0_69, %c0_70] : memref<8x8x128xf32, #tpu.memory_space<vmem>>, vector<1x8x128xf32>
    %167 = vector.shape_cast %166 : vector<1x8x128xf32> to vector<8x128xf32>
    %168 = vector.shape_cast %164 : vector<8x128xf32> to vector<1x8x128xf32>
    tpu.vector_store %arg6[%165, %c0_69, %c0_70], %168 {strides = array<i32>} : memref<8x8x128xf32, #tpu.memory_space<vmem>>, vector<1x8x128xf32>,
    %c7_i32_71 = arith.constant 7 : i32
    %169 = arith.subi %c7_i32_71, %c1_i32 : i32
    %170 = arith.index_cast %169 : i32 to index
    %c0_72 = arith.constant 0 : index
    %c0_73 = arith.constant 0 : index
    %171 = vector.load %arg3[%170, %c0_72, %c0_73] : memref<8x8x512xf32, #tpu.memory_space<vmem>>, vector<1x8x512xf32>
    %172 = vector.shape_cast %171 : vector<1x8x512xf32> to vector<8x512xf32>
    %c0_74 = arith.constant 0 : index
    %c0_75 = arith.constant 0 : index
    %173 = vector.load %arg12[%c0_74, %c0_75] : memref<8x128xf32, #tpu.memory_space<vmem>>, vector<8x128xf32>
    %c0_76 = arith.constant 0 : index
    %c0_77 = arith.constant 0 : index
    %174 = vector.load %arg13[%c0_76, %c0_77] : memref<8x128xf32, #tpu.memory_space<vmem>>, vector<8x128xf32>
    %cst_78 = arith.constant dense<0.000000e+00> : vector<8x512xf32>
    %175 = tpu.matmul %173, %8, %cst_78 {dimension_numbers = #tpu.dot_dimension_numbers<[1], [0], [0], [1], [0, 0, 1, 1], [], []>} : vector<8x128xf32>, vector<128x512xf32>, vector<8x512xf32> -> vector<8x512xf32>
    %176 = arith.addf %172, %175 : vector<8x512xf32>
    %177 = vector.extract_strided_slice %176 {offsets = [0, 0], sizes = [8, 128], strides = [1, 1]} : vector<8x512xf32> to vector<8x128xf32>
    %178 = arith.negf %177 : vector<8x128xf32>
    %179 = math.exp %178 : vector<8x128xf32>
    %cst_79 = arith.constant 1.000000e+00 : f32
    %180 = vector.broadcast %cst_79 : f32 to vector<8x128xf32>
    %181 = arith.addf %180, %179 : vector<8x128xf32>
    %182 = arith.divf %180, %181 : vector<8x128xf32>
    %183 = vector.extract_strided_slice %176 {offsets = [0, 128], sizes = [8, 128], strides = [1, 1]} : vector<8x512xf32> to vector<8x128xf32>
    %184 = arith.negf %183 : vector<8x128xf32>
    %185 = math.exp %184 : vector<8x128xf32>
    %cst_80 = arith.constant 1.000000e+00 : f32
    %186 = vector.broadcast %cst_80 : f32 to vector<8x128xf32>
    %187 = arith.addf %186, %185 : vector<8x128xf32>
    %188 = arith.divf %186, %187 : vector<8x128xf32>
    %189 = vector.extract_strided_slice %176 {offsets = [0, 256], sizes = [8, 128], strides = [1, 1]} : vector<8x512xf32> to vector<8x128xf32>
    %190 = math.tanh %189 : vector<8x128xf32>
    %191 = vector.extract_strided_slice %176 {offsets = [0, 384], sizes = [8, 128], strides = [1, 1]} : vector<8x512xf32> to vector<8x128xf32>
    %192 = arith.negf %191 : vector<8x128xf32>
    %193 = math.exp %192 : vector<8x128xf32>
    %cst_81 = arith.constant 1.000000e+00 : f32
    %194 = vector.broadcast %cst_81 : f32 to vector<8x128xf32>
    %195 = arith.addf %194, %193 : vector<8x128xf32>
    %196 = arith.divf %194, %195 : vector<8x128xf32>
    %197 = arith.mulf %188, %174 : vector<8x128xf32>
    %198 = arith.mulf %182, %190 : vector<8x128xf32>
    %199 = arith.addf %197, %198 : vector<8x128xf32>
    %200 = math.tanh %199 : vector<8x128xf32>
    %201 = arith.mulf %196, %200 : vector<8x128xf32>
    %202 = arith.addi %6, %169 : i32
    %203 = vector.broadcast %202 : i32 to vector<8x1xi32>
    %204 = arith.cmpi sgt, %3, %203 : vector<8x1xi32>
    %c0_82 = arith.constant 0 : index
    %c0_83 = arith.constant 0 : index
    %205 = vector.load %arg12[%c0_82, %c0_83] : memref<8x128xf32, #tpu.memory_space<vmem>>, vector<8x128xf32>
    %206 = vector.shape_cast %204 : vector<8x1xi1> to vector<8x1xi1>
    %207 = vector.broadcast %206 : vector<8x1xi1> to vector<8x128xi1>
    %208 = arith.select %207, %201, %205 : vector<8x128xi1>, vector<8x128xf32>
    %c0_84 = arith.constant 0 : index
    %c0_85 = arith.constant 0 : index
    %209 = vector.load %arg12[%c0_84, %c0_85] : memref<8x128xf32, #tpu.memory_space<vmem>>, vector<8x128xf32>
    tpu.vector_store %arg12[%c0_84, %c0_85], %208 {strides = array<i32>} : memref<8x128xf32, #tpu.memory_space<vmem>>, vector<8x128xf32>,
    %c0_86 = arith.constant 0 : index
    %c0_87 = arith.constant 0 : index
    %210 = vector.load %arg13[%c0_86, %c0_87] : memref<8x128xf32, #tpu.memory_space<vmem>>, vector<8x128xf32>
    %211 = vector.shape_cast %204 : vector<8x1xi1> to vector<8x1xi1>
    %212 = vector.broadcast %211 : vector<8x1xi1> to vector<8x128xi1>
    %213 = arith.select %212, %199, %210 : vector<8x128xi1>, vector<8x128xf32>
    %c0_88 = arith.constant 0 : index
    %c0_89 = arith.constant 0 : index
    %214 = vector.load %arg13[%c0_88, %c0_89] : memref<8x128xf32, #tpu.memory_space<vmem>>, vector<8x128xf32>
    tpu.vector_store %arg13[%c0_88, %c0_89], %213 {strides = array<i32>} : memref<8x128xf32, #tpu.memory_space<vmem>>, vector<8x128xf32>,
    %cst_90 = arith.constant 0.000000e+00 : f32
    %215 = vector.shape_cast %204 : vector<8x1xi1> to vector<8x1xi1>
    %216 = vector.broadcast %215 : vector<8x1xi1> to vector<8x128xi1>
    %217 = vector.broadcast %cst_90 : f32 to vector<8x128xf32>
    %218 = arith.select %216, %201, %217 : vector<8x128xi1>, vector<8x128xf32>
    %219 = arith.index_cast %169 : i32 to index
    %c0_91 = arith.constant 0 : index
    %c0_92 = arith.constant 0 : index
    %220 = vector.load %arg7[%219, %c0_91, %c0_92] : memref<8x8x128xf32, #tpu.memory_space<vmem>>, vector<1x8x128xf32>
    %221 = vector.shape_cast %220 : vector<1x8x128xf32> to vector<8x128xf32>
    %222 = vector.shape_cast %218 : vector<8x128xf32> to vector<1x8x128xf32>
    tpu.vector_store %arg7[%219, %c0_91, %c0_92], %222 {strides = array<i32>} : memref<8x8x128xf32, #tpu.memory_space<vmem>>, vector<1x8x128xf32>,
    %c2_i32 = arith.constant 2 : i32
    %223 = arith.index_cast %c2_i32 : i32 to index
    %c0_93 = arith.constant 0 : index
    %c0_94 = arith.constant 0 : index
    %224 = vector.load %arg2[%223, %c0_93, %c0_94] : memref<8x8x512xf32, #tpu.memory_space<vmem>>, vector<1x8x512xf32>
    %225 = vector.shape_cast %224 : vector<1x8x512xf32> to vector<8x512xf32>
    %c0_95 = arith.constant 0 : index
    %c0_96 = arith.constant 0 : index
    %226 = vector.load %arg10[%c0_95, %c0_96] : memref<8x128xf32, #tpu.memory_space<vmem>>, vector<8x128xf32>
    %c0_97 = arith.constant 0 : index
    %c0_98 = arith.constant 0 : index
    %227 = vector.load %arg11[%c0_97, %c0_98] : memref<8x128xf32, #tpu.memory_space<vmem>>, vector<8x128xf32>
    %cst_99 = arith.constant dense<0.000000e+00> : vector<8x512xf32>
    %228 = tpu.matmul %226, %7, %cst_99 {dimension_numbers = #tpu.dot_dimension_numbers<[1], [0], [0], [1], [0, 0, 1, 1], [], []>} : vector<8x128xf32>, vector<128x512xf32>, vector<8x512xf32> -> vector<8x512xf32>
    %229 = arith.addf %225, %228 : vector<8x512xf32>
    %230 = vector.extract_strided_slice %229 {offsets = [0, 0], sizes = [8, 128], strides = [1, 1]} : vector<8x512xf32> to vector<8x128xf32>
    %231 = arith.negf %230 : vector<8x128xf32>
    %232 = math.exp %231 : vector<8x128xf32>
    %cst_100 = arith.constant 1.000000e+00 : f32
    %233 = vector.broadcast %cst_100 : f32 to vector<8x128xf32>
    %234 = arith.addf %233, %232 : vector<8x128xf32>
    %235 = arith.divf %233, %234 : vector<8x128xf32>
    %236 = vector.extract_strided_slice %229 {offsets = [0, 128], sizes = [8, 128], strides = [1, 1]} : vector<8x512xf32> to vector<8x128xf32>
    %237 = arith.negf %236 : vector<8x128xf32>
    %238 = math.exp %237 : vector<8x128xf32>
    %cst_101 = arith.constant 1.000000e+00 : f32
    %239 = vector.broadcast %cst_101 : f32 to vector<8x128xf32>
    %240 = arith.addf %239, %238 : vector<8x128xf32>
    %241 = arith.divf %239, %240 : vector<8x128xf32>
    %242 = vector.extract_strided_slice %229 {offsets = [0, 256], sizes = [8, 128], strides = [1, 1]} : vector<8x512xf32> to vector<8x128xf32>
    %243 = math.tanh %242 : vector<8x128xf32>
    %244 = vector.extract_strided_slice %229 {offsets = [0, 384], sizes = [8, 128], strides = [1, 1]} : vector<8x512xf32> to vector<8x128xf32>
    %245 = arith.negf %244 : vector<8x128xf32>
    %246 = math.exp %245 : vector<8x128xf32>
    %cst_102 = arith.constant 1.000000e+00 : f32
    %247 = vector.broadcast %cst_102 : f32 to vector<8x128xf32>
    %248 = arith.addf %247, %246 : vector<8x128xf32>
    %249 = arith.divf %247, %248 : vector<8x128xf32>
    %250 = arith.mulf %241, %227 : vector<8x128xf32>
    %251 = arith.mulf %235, %243 : vector<8x128xf32>
    %252 = arith.addf %250, %251 : vector<8x128xf32>
    %253 = math.tanh %252 : vector<8x128xf32>
    %254 = arith.mulf %249, %253 : vector<8x128xf32>
    %255 = arith.addi %4, %c2_i32 : i32
    %256 = vector.broadcast %255 : i32 to vector<8x1xi32>
    %257 = arith.cmpi sgt, %3, %256 : vector<8x1xi32>
    %c0_103 = arith.constant 0 : index
    %c0_104 = arith.constant 0 : index
    %258 = vector.load %arg10[%c0_103, %c0_104] : memref<8x128xf32, #tpu.memory_space<vmem>>, vector<8x128xf32>
    %259 = vector.shape_cast %257 : vector<8x1xi1> to vector<8x1xi1>
    %260 = vector.broadcast %259 : vector<8x1xi1> to vector<8x128xi1>
    %261 = arith.select %260, %254, %258 : vector<8x128xi1>, vector<8x128xf32>
    %c0_105 = arith.constant 0 : index
    %c0_106 = arith.constant 0 : index
    %262 = vector.load %arg10[%c0_105, %c0_106] : memref<8x128xf32, #tpu.memory_space<vmem>>, vector<8x128xf32>
    tpu.vector_store %arg10[%c0_105, %c0_106], %261 {strides = array<i32>} : memref<8x128xf32, #tpu.memory_space<vmem>>, vector<8x128xf32>,
    %c0_107 = arith.constant 0 : index
    %c0_108 = arith.constant 0 : index
    %263 = vector.load %arg11[%c0_107, %c0_108] : memref<8x128xf32, #tpu.memory_space<vmem>>, vector<8x128xf32>
    %264 = vector.shape_cast %257 : vector<8x1xi1> to vector<8x1xi1>
    %265 = vector.broadcast %264 : vector<8x1xi1> to vector<8x128xi1>
    %266 = arith.select %265, %252, %263 : vector<8x128xi1>, vector<8x128xf32>
    %c0_109 = arith.constant 0 : index
    %c0_110 = arith.constant 0 : index
    %267 = vector.load %arg11[%c0_109, %c0_110] : memref<8x128xf32, #tpu.memory_space<vmem>>, vector<8x128xf32>
    tpu.vector_store %arg11[%c0_109, %c0_110], %266 {strides = array<i32>} : memref<8x128xf32, #tpu.memory_space<vmem>>, vector<8x128xf32>,
    %cst_111 = arith.constant 0.000000e+00 : f32
    %268 = vector.shape_cast %257 : vector<8x1xi1> to vector<8x1xi1>
    %269 = vector.broadcast %268 : vector<8x1xi1> to vector<8x128xi1>
    %270 = vector.broadcast %cst_111 : f32 to vector<8x128xf32>
    %271 = arith.select %269, %254, %270 : vector<8x128xi1>, vector<8x128xf32>
    %272 = arith.index_cast %c2_i32 : i32 to index
    %c0_112 = arith.constant 0 : index
    %c0_113 = arith.constant 0 : index
    %273 = vector.load %arg6[%272, %c0_112, %c0_113] : memref<8x8x128xf32, #tpu.memory_space<vmem>>, vector<1x8x128xf32>
    %274 = vector.shape_cast %273 : vector<1x8x128xf32> to vector<8x128xf32>
    %275 = vector.shape_cast %271 : vector<8x128xf32> to vector<1x8x128xf32>
    tpu.vector_store %arg6[%272, %c0_112, %c0_113], %275 {strides = array<i32>} : memref<8x8x128xf32, #tpu.memory_space<vmem>>, vector<1x8x128xf32>,
    %c7_i32_114 = arith.constant 7 : i32
    %276 = arith.subi %c7_i32_114, %c2_i32 : i32
    %277 = arith.index_cast %276 : i32 to index
    %c0_115 = arith.constant 0 : index
    %c0_116 = arith.constant 0 : index
    %278 = vector.load %arg3[%277, %c0_115, %c0_116] : memref<8x8x512xf32, #tpu.memory_space<vmem>>, vector<1x8x512xf32>
    %279 = vector.shape_cast %278 : vector<1x8x512xf32> to vector<8x512xf32>
    %c0_117 = arith.constant 0 : index
    %c0_118 = arith.constant 0 : index
    %280 = vector.load %arg12[%c0_117, %c0_118] : memref<8x128xf32, #tpu.memory_space<vmem>>, vector<8x128xf32>
    %c0_119 = arith.constant 0 : index
    %c0_120 = arith.constant 0 : index
    %281 = vector.load %arg13[%c0_119, %c0_120] : memref<8x128xf32, #tpu.memory_space<vmem>>, vector<8x128xf32>
    %cst_121 = arith.constant dense<0.000000e+00> : vector<8x512xf32>
    %282 = tpu.matmul %280, %8, %cst_121 {dimension_numbers = #tpu.dot_dimension_numbers<[1], [0], [0], [1], [0, 0, 1, 1], [], []>} : vector<8x128xf32>, vector<128x512xf32>, vector<8x512xf32> -> vector<8x512xf32>
    %283 = arith.addf %279, %282 : vector<8x512xf32>
    %284 = vector.extract_strided_slice %283 {offsets = [0, 0], sizes = [8, 128], strides = [1, 1]} : vector<8x512xf32> to vector<8x128xf32>
    %285 = arith.negf %284 : vector<8x128xf32>
    %286 = math.exp %285 : vector<8x128xf32>
    %cst_122 = arith.constant 1.000000e+00 : f32
    %287 = vector.broadcast %cst_122 : f32 to vector<8x128xf32>
    %288 = arith.addf %287, %286 : vector<8x128xf32>
    %289 = arith.divf %287, %288 : vector<8x128xf32>
    %290 = vector.extract_strided_slice %283 {offsets = [0, 128], sizes = [8, 128], strides = [1, 1]} : vector<8x512xf32> to vector<8x128xf32>
    %291 = arith.negf %290 : vector<8x128xf32>
    %292 = math.exp %291 : vector<8x128xf32>
    %cst_123 = arith.constant 1.000000e+00 : f32
    %293 = vector.broadcast %cst_123 : f32 to vector<8x128xf32>
    %294 = arith.addf %293, %292 : vector<8x128xf32>
    %295 = arith.divf %293, %294 : vector<8x128xf32>
    %296 = vector.extract_strided_slice %283 {offsets = [0, 256], sizes = [8, 128], strides = [1, 1]} : vector<8x512xf32> to vector<8x128xf32>
    %297 = math.tanh %296 : vector<8x128xf32>
    %298 = vector.extract_strided_slice %283 {offsets = [0, 384], sizes = [8, 128], strides = [1, 1]} : vector<8x512xf32> to vector<8x128xf32>
    %299 = arith.negf %298 : vector<8x128xf32>
    %300 = math.exp %299 : vector<8x128xf32>
    %cst_124 = arith.constant 1.000000e+00 : f32
    %301 = vector.broadcast %cst_124 : f32 to vector<8x128xf32>
    %302 = arith.addf %301, %300 : vector<8x128xf32>
    %303 = arith.divf %301, %302 : vector<8x128xf32>
    %304 = arith.mulf %295, %281 : vector<8x128xf32>
    %305 = arith.mulf %289, %297 : vector<8x128xf32>
    %306 = arith.addf %304, %305 : vector<8x128xf32>
    %307 = math.tanh %306 : vector<8x128xf32>
    %308 = arith.mulf %303, %307 : vector<8x128xf32>
    %309 = arith.addi %6, %276 : i32
    %310 = vector.broadcast %309 : i32 to vector<8x1xi32>
    %311 = arith.cmpi sgt, %3, %310 : vector<8x1xi32>
    %c0_125 = arith.constant 0 : index
    %c0_126 = arith.constant 0 : index
    %312 = vector.load %arg12[%c0_125, %c0_126] : memref<8x128xf32, #tpu.memory_space<vmem>>, vector<8x128xf32>
    %313 = vector.shape_cast %311 : vector<8x1xi1> to vector<8x1xi1>
    %314 = vector.broadcast %313 : vector<8x1xi1> to vector<8x128xi1>
    %315 = arith.select %314, %308, %312 : vector<8x128xi1>, vector<8x128xf32>
    %c0_127 = arith.constant 0 : index
    %c0_128 = arith.constant 0 : index
    %316 = vector.load %arg12[%c0_127, %c0_128] : memref<8x128xf32, #tpu.memory_space<vmem>>, vector<8x128xf32>
    tpu.vector_store %arg12[%c0_127, %c0_128], %315 {strides = array<i32>} : memref<8x128xf32, #tpu.memory_space<vmem>>, vector<8x128xf32>,
    %c0_129 = arith.constant 0 : index
    %c0_130 = arith.constant 0 : index
    %317 = vector.load %arg13[%c0_129, %c0_130] : memref<8x128xf32, #tpu.memory_space<vmem>>, vector<8x128xf32>
    %318 = vector.shape_cast %311 : vector<8x1xi1> to vector<8x1xi1>
    %319 = vector.broadcast %318 : vector<8x1xi1> to vector<8x128xi1>
    %320 = arith.select %319, %306, %317 : vector<8x128xi1>, vector<8x128xf32>
    %c0_131 = arith.constant 0 : index
    %c0_132 = arith.constant 0 : index
    %321 = vector.load %arg13[%c0_131, %c0_132] : memref<8x128xf32, #tpu.memory_space<vmem>>, vector<8x128xf32>
    tpu.vector_store %arg13[%c0_131, %c0_132], %320 {strides = array<i32>} : memref<8x128xf32, #tpu.memory_space<vmem>>, vector<8x128xf32>,
    %cst_133 = arith.constant 0.000000e+00 : f32
    %322 = vector.shape_cast %311 : vector<8x1xi1> to vector<8x1xi1>
    %323 = vector.broadcast %322 : vector<8x1xi1> to vector<8x128xi1>
    %324 = vector.broadcast %cst_133 : f32 to vector<8x128xf32>
    %325 = arith.select %323, %308, %324 : vector<8x128xi1>, vector<8x128xf32>
    %326 = arith.index_cast %276 : i32 to index
    %c0_134 = arith.constant 0 : index
    %c0_135 = arith.constant 0 : index
    %327 = vector.load %arg7[%326, %c0_134, %c0_135] : memref<8x8x128xf32, #tpu.memory_space<vmem>>, vector<1x8x128xf32>
    %328 = vector.shape_cast %327 : vector<1x8x128xf32> to vector<8x128xf32>
    %329 = vector.shape_cast %325 : vector<8x128xf32> to vector<1x8x128xf32>
    tpu.vector_store %arg7[%326, %c0_134, %c0_135], %329 {strides = array<i32>} : memref<8x8x128xf32, #tpu.memory_space<vmem>>, vector<1x8x128xf32>,
    %c3_i32 = arith.constant 3 : i32
    %330 = arith.index_cast %c3_i32 : i32 to index
    %c0_136 = arith.constant 0 : index
    %c0_137 = arith.constant 0 : index
    %331 = vector.load %arg2[%330, %c0_136, %c0_137] : memref<8x8x512xf32, #tpu.memory_space<vmem>>, vector<1x8x512xf32>
    %332 = vector.shape_cast %331 : vector<1x8x512xf32> to vector<8x512xf32>
    %c0_138 = arith.constant 0 : index
    %c0_139 = arith.constant 0 : index
    %333 = vector.load %arg10[%c0_138, %c0_139] : memref<8x128xf32, #tpu.memory_space<vmem>>, vector<8x128xf32>
    %c0_140 = arith.constant 0 : index
    %c0_141 = arith.constant 0 : index
    %334 = vector.load %arg11[%c0_140, %c0_141] : memref<8x128xf32, #tpu.memory_space<vmem>>, vector<8x128xf32>
    %cst_142 = arith.constant dense<0.000000e+00> : vector<8x512xf32>
    %335 = tpu.matmul %333, %7, %cst_142 {dimension_numbers = #tpu.dot_dimension_numbers<[1], [0], [0], [1], [0, 0, 1, 1], [], []>} : vector<8x128xf32>, vector<128x512xf32>, vector<8x512xf32> -> vector<8x512xf32>
    %336 = arith.addf %332, %335 : vector<8x512xf32>
    %337 = vector.extract_strided_slice %336 {offsets = [0, 0], sizes = [8, 128], strides = [1, 1]} : vector<8x512xf32> to vector<8x128xf32>
    %338 = arith.negf %337 : vector<8x128xf32>
    %339 = math.exp %338 : vector<8x128xf32>
    %cst_143 = arith.constant 1.000000e+00 : f32
    %340 = vector.broadcast %cst_143 : f32 to vector<8x128xf32>
    %341 = arith.addf %340, %339 : vector<8x128xf32>
    %342 = arith.divf %340, %341 : vector<8x128xf32>
    %343 = vector.extract_strided_slice %336 {offsets = [0, 128], sizes = [8, 128], strides = [1, 1]} : vector<8x512xf32> to vector<8x128xf32>
    %344 = arith.negf %343 : vector<8x128xf32>
    %345 = math.exp %344 : vector<8x128xf32>
    %cst_144 = arith.constant 1.000000e+00 : f32
    %346 = vector.broadcast %cst_144 : f32 to vector<8x128xf32>
    %347 = arith.addf %346, %345 : vector<8x128xf32>
    %348 = arith.divf %346, %347 : vector<8x128xf32>
    %349 = vector.extract_strided_slice %336 {offsets = [0, 256], sizes = [8, 128], strides = [1, 1]} : vector<8x512xf32> to vector<8x128xf32>
    %350 = math.tanh %349 : vector<8x128xf32>
    %351 = vector.extract_strided_slice %336 {offsets = [0, 384], sizes = [8, 128], strides = [1, 1]} : vector<8x512xf32> to vector<8x128xf32>
    %352 = arith.negf %351 : vector<8x128xf32>
    %353 = math.exp %352 : vector<8x128xf32>
    %cst_145 = arith.constant 1.000000e+00 : f32
    %354 = vector.broadcast %cst_145 : f32 to vector<8x128xf32>
    %355 = arith.addf %354, %353 : vector<8x128xf32>
    %356 = arith.divf %354, %355 : vector<8x128xf32>
    %357 = arith.mulf %348, %334 : vector<8x128xf32>
    %358 = arith.mulf %342, %350 : vector<8x128xf32>
    %359 = arith.addf %357, %358 : vector<8x128xf32>
    %360 = math.tanh %359 : vector<8x128xf32>
    %361 = arith.mulf %356, %360 : vector<8x128xf32>
    %362 = arith.addi %4, %c3_i32 : i32
    %363 = vector.broadcast %362 : i32 to vector<8x1xi32>
    %364 = arith.cmpi sgt, %3, %363 : vector<8x1xi32>
    %c0_146 = arith.constant 0 : index
    %c0_147 = arith.constant 0 : index
    %365 = vector.load %arg10[%c0_146, %c0_147] : memref<8x128xf32, #tpu.memory_space<vmem>>, vector<8x128xf32>
    %366 = vector.shape_cast %364 : vector<8x1xi1> to vector<8x1xi1>
    %367 = vector.broadcast %366 : vector<8x1xi1> to vector<8x128xi1>
    %368 = arith.select %367, %361, %365 : vector<8x128xi1>, vector<8x128xf32>
    %c0_148 = arith.constant 0 : index
    %c0_149 = arith.constant 0 : index
    %369 = vector.load %arg10[%c0_148, %c0_149] : memref<8x128xf32, #tpu.memory_space<vmem>>, vector<8x128xf32>
    tpu.vector_store %arg10[%c0_148, %c0_149], %368 {strides = array<i32>} : memref<8x128xf32, #tpu.memory_space<vmem>>, vector<8x128xf32>,
    %c0_150 = arith.constant 0 : index
    %c0_151 = arith.constant 0 : index
    %370 = vector.load %arg11[%c0_150, %c0_151] : memref<8x128xf32, #tpu.memory_space<vmem>>, vector<8x128xf32>
    %371 = vector.shape_cast %364 : vector<8x1xi1> to vector<8x1xi1>
    %372 = vector.broadcast %371 : vector<8x1xi1> to vector<8x128xi1>
    %373 = arith.select %372, %359, %370 : vector<8x128xi1>, vector<8x128xf32>
    %c0_152 = arith.constant 0 : index
    %c0_153 = arith.constant 0 : index
    %374 = vector.load %arg11[%c0_152, %c0_153] : memref<8x128xf32, #tpu.memory_space<vmem>>, vector<8x128xf32>
    tpu.vector_store %arg11[%c0_152, %c0_153], %373 {strides = array<i32>} : memref<8x128xf32, #tpu.memory_space<vmem>>, vector<8x128xf32>,
    %cst_154 = arith.constant 0.000000e+00 : f32
    %375 = vector.shape_cast %364 : vector<8x1xi1> to vector<8x1xi1>
    %376 = vector.broadcast %375 : vector<8x1xi1> to vector<8x128xi1>
    %377 = vector.broadcast %cst_154 : f32 to vector<8x128xf32>
    %378 = arith.select %376, %361, %377 : vector<8x128xi1>, vector<8x128xf32>
    %379 = arith.index_cast %c3_i32 : i32 to index
    %c0_155 = arith.constant 0 : index
    %c0_156 = arith.constant 0 : index
    %380 = vector.load %arg6[%379, %c0_155, %c0_156] : memref<8x8x128xf32, #tpu.memory_space<vmem>>, vector<1x8x128xf32>
    %381 = vector.shape_cast %380 : vector<1x8x128xf32> to vector<8x128xf32>
    %382 = vector.shape_cast %378 : vector<8x128xf32> to vector<1x8x128xf32>
    tpu.vector_store %arg6[%379, %c0_155, %c0_156], %382 {strides = array<i32>} : memref<8x8x128xf32, #tpu.memory_space<vmem>>, vector<1x8x128xf32>,
    %c7_i32_157 = arith.constant 7 : i32
    %383 = arith.subi %c7_i32_157, %c3_i32 : i32
    %384 = arith.index_cast %383 : i32 to index
    %c0_158 = arith.constant 0 : index
    %c0_159 = arith.constant 0 : index
    %385 = vector.load %arg3[%384, %c0_158, %c0_159] : memref<8x8x512xf32, #tpu.memory_space<vmem>>, vector<1x8x512xf32>
    %386 = vector.shape_cast %385 : vector<1x8x512xf32> to vector<8x512xf32>
    %c0_160 = arith.constant 0 : index
    %c0_161 = arith.constant 0 : index
    %387 = vector.load %arg12[%c0_160, %c0_161] : memref<8x128xf32, #tpu.memory_space<vmem>>, vector<8x128xf32>
    %c0_162 = arith.constant 0 : index
    %c0_163 = arith.constant 0 : index
    %388 = vector.load %arg13[%c0_162, %c0_163] : memref<8x128xf32, #tpu.memory_space<vmem>>, vector<8x128xf32>
    %cst_164 = arith.constant dense<0.000000e+00> : vector<8x512xf32>
    %389 = tpu.matmul %387, %8, %cst_164 {dimension_numbers = #tpu.dot_dimension_numbers<[1], [0], [0], [1], [0, 0, 1, 1], [], []>} : vector<8x128xf32>, vector<128x512xf32>, vector<8x512xf32> -> vector<8x512xf32>
    %390 = arith.addf %386, %389 : vector<8x512xf32>
    %391 = vector.extract_strided_slice %390 {offsets = [0, 0], sizes = [8, 128], strides = [1, 1]} : vector<8x512xf32> to vector<8x128xf32>
    %392 = arith.negf %391 : vector<8x128xf32>
    %393 = math.exp %392 : vector<8x128xf32>
    %cst_165 = arith.constant 1.000000e+00 : f32
    %394 = vector.broadcast %cst_165 : f32 to vector<8x128xf32>
    %395 = arith.addf %394, %393 : vector<8x128xf32>
    %396 = arith.divf %394, %395 : vector<8x128xf32>
    %397 = vector.extract_strided_slice %390 {offsets = [0, 128], sizes = [8, 128], strides = [1, 1]} : vector<8x512xf32> to vector<8x128xf32>
    %398 = arith.negf %397 : vector<8x128xf32>
    %399 = math.exp %398 : vector<8x128xf32>
    %cst_166 = arith.constant 1.000000e+00 : f32
    %400 = vector.broadcast %cst_166 : f32 to vector<8x128xf32>
    %401 = arith.addf %400, %399 : vector<8x128xf32>
    %402 = arith.divf %400, %401 : vector<8x128xf32>
    %403 = vector.extract_strided_slice %390 {offsets = [0, 256], sizes = [8, 128], strides = [1, 1]} : vector<8x512xf32> to vector<8x128xf32>
    %404 = math.tanh %403 : vector<8x128xf32>
    %405 = vector.extract_strided_slice %390 {offsets = [0, 384], sizes = [8, 128], strides = [1, 1]} : vector<8x512xf32> to vector<8x128xf32>
    %406 = arith.negf %405 : vector<8x128xf32>
    %407 = math.exp %406 : vector<8x128xf32>
    %cst_167 = arith.constant 1.000000e+00 : f32
    %408 = vector.broadcast %cst_167 : f32 to vector<8x128xf32>
    %409 = arith.addf %408, %407 : vector<8x128xf32>
    %410 = arith.divf %408, %409 : vector<8x128xf32>
    %411 = arith.mulf %402, %388 : vector<8x128xf32>
    %412 = arith.mulf %396, %404 : vector<8x128xf32>
    %413 = arith.addf %411, %412 : vector<8x128xf32>
    %414 = math.tanh %413 : vector<8x128xf32>
    %415 = arith.mulf %410, %414 : vector<8x128xf32>
    %416 = arith.addi %6, %383 : i32
    %417 = vector.broadcast %416 : i32 to vector<8x1xi32>
    %418 = arith.cmpi sgt, %3, %417 : vector<8x1xi32>
    %c0_168 = arith.constant 0 : index
    %c0_169 = arith.constant 0 : index
    %419 = vector.load %arg12[%c0_168, %c0_169] : memref<8x128xf32, #tpu.memory_space<vmem>>, vector<8x128xf32>
    %420 = vector.shape_cast %418 : vector<8x1xi1> to vector<8x1xi1>
    %421 = vector.broadcast %420 : vector<8x1xi1> to vector<8x128xi1>
    %422 = arith.select %421, %415, %419 : vector<8x128xi1>, vector<8x128xf32>
    %c0_170 = arith.constant 0 : index
    %c0_171 = arith.constant 0 : index
    %423 = vector.load %arg12[%c0_170, %c0_171] : memref<8x128xf32, #tpu.memory_space<vmem>>, vector<8x128xf32>
    tpu.vector_store %arg12[%c0_170, %c0_171], %422 {strides = array<i32>} : memref<8x128xf32, #tpu.memory_space<vmem>>, vector<8x128xf32>,
    %c0_172 = arith.constant 0 : index
    %c0_173 = arith.constant 0 : index
    %424 = vector.load %arg13[%c0_172, %c0_173] : memref<8x128xf32, #tpu.memory_space<vmem>>, vector<8x128xf32>
    %425 = vector.shape_cast %418 : vector<8x1xi1> to vector<8x1xi1>
    %426 = vector.broadcast %425 : vector<8x1xi1> to vector<8x128xi1>
    %427 = arith.select %426, %413, %424 : vector<8x128xi1>, vector<8x128xf32>
    %c0_174 = arith.constant 0 : index
    %c0_175 = arith.constant 0 : index
    %428 = vector.load %arg13[%c0_174, %c0_175] : memref<8x128xf32, #tpu.memory_space<vmem>>, vector<8x128xf32>
    tpu.vector_store %arg13[%c0_174, %c0_175], %427 {strides = array<i32>} : memref<8x128xf32, #tpu.memory_space<vmem>>, vector<8x128xf32>,
    %cst_176 = arith.constant 0.000000e+00 : f32
    %429 = vector.shape_cast %418 : vector<8x1xi1> to vector<8x1xi1>
    %430 = vector.broadcast %429 : vector<8x1xi1> to vector<8x128xi1>
    %431 = vector.broadcast %cst_176 : f32 to vector<8x128xf32>
    %432 = arith.select %430, %415, %431 : vector<8x128xi1>, vector<8x128xf32>
    %433 = arith.index_cast %383 : i32 to index
    %c0_177 = arith.constant 0 : index
    %c0_178 = arith.constant 0 : index
    %434 = vector.load %arg7[%433, %c0_177, %c0_178] : memref<8x8x128xf32, #tpu.memory_space<vmem>>, vector<1x8x128xf32>
    %435 = vector.shape_cast %434 : vector<1x8x128xf32> to vector<8x128xf32>
    %436 = vector.shape_cast %432 : vector<8x128xf32> to vector<1x8x128xf32>
    tpu.vector_store %arg7[%433, %c0_177, %c0_178], %436 {strides = array<i32>} : memref<8x8x128xf32, #tpu.memory_space<vmem>>, vector<1x8x128xf32>,
    %c4_i32 = arith.constant 4 : i32
    %437 = arith.index_cast %c4_i32 : i32 to index
    %c0_179 = arith.constant 0 : index
    %c0_180 = arith.constant 0 : index
    %438 = vector.load %arg2[%437, %c0_179, %c0_180] : memref<8x8x512xf32, #tpu.memory_space<vmem>>, vector<1x8x512xf32>
    %439 = vector.shape_cast %438 : vector<1x8x512xf32> to vector<8x512xf32>
    %c0_181 = arith.constant 0 : index
    %c0_182 = arith.constant 0 : index
    %440 = vector.load %arg10[%c0_181, %c0_182] : memref<8x128xf32, #tpu.memory_space<vmem>>, vector<8x128xf32>
    %c0_183 = arith.constant 0 : index
    %c0_184 = arith.constant 0 : index
    %441 = vector.load %arg11[%c0_183, %c0_184] : memref<8x128xf32, #tpu.memory_space<vmem>>, vector<8x128xf32>
    %cst_185 = arith.constant dense<0.000000e+00> : vector<8x512xf32>
    %442 = tpu.matmul %440, %7, %cst_185 {dimension_numbers = #tpu.dot_dimension_numbers<[1], [0], [0], [1], [0, 0, 1, 1], [], []>} : vector<8x128xf32>, vector<128x512xf32>, vector<8x512xf32> -> vector<8x512xf32>
    %443 = arith.addf %439, %442 : vector<8x512xf32>
    %444 = vector.extract_strided_slice %443 {offsets = [0, 0], sizes = [8, 128], strides = [1, 1]} : vector<8x512xf32> to vector<8x128xf32>
    %445 = arith.negf %444 : vector<8x128xf32>
    %446 = math.exp %445 : vector<8x128xf32>
    %cst_186 = arith.constant 1.000000e+00 : f32
    %447 = vector.broadcast %cst_186 : f32 to vector<8x128xf32>
    %448 = arith.addf %447, %446 : vector<8x128xf32>
    %449 = arith.divf %447, %448 : vector<8x128xf32>
    %450 = vector.extract_strided_slice %443 {offsets = [0, 128], sizes = [8, 128], strides = [1, 1]} : vector<8x512xf32> to vector<8x128xf32>
    %451 = arith.negf %450 : vector<8x128xf32>
    %452 = math.exp %451 : vector<8x128xf32>
    %cst_187 = arith.constant 1.000000e+00 : f32
    %453 = vector.broadcast %cst_187 : f32 to vector<8x128xf32>
    %454 = arith.addf %453, %452 : vector<8x128xf32>
    %455 = arith.divf %453, %454 : vector<8x128xf32>
    %456 = vector.extract_strided_slice %443 {offsets = [0, 256], sizes = [8, 128], strides = [1, 1]} : vector<8x512xf32> to vector<8x128xf32>
    %457 = math.tanh %456 : vector<8x128xf32>
    %458 = vector.extract_strided_slice %443 {offsets = [0, 384], sizes = [8, 128], strides = [1, 1]} : vector<8x512xf32> to vector<8x128xf32>
    %459 = arith.negf %458 : vector<8x128xf32>
    %460 = math.exp %459 : vector<8x128xf32>
    %cst_188 = arith.constant 1.000000e+00 : f32
    %461 = vector.broadcast %cst_188 : f32 to vector<8x128xf32>
    %462 = arith.addf %461, %460 : vector<8x128xf32>
    %463 = arith.divf %461, %462 : vector<8x128xf32>
    %464 = arith.mulf %455, %441 : vector<8x128xf32>
    %465 = arith.mulf %449, %457 : vector<8x128xf32>
    %466 = arith.addf %464, %465 : vector<8x128xf32>
    %467 = math.tanh %466 : vector<8x128xf32>
    %468 = arith.mulf %463, %467 : vector<8x128xf32>
    %469 = arith.addi %4, %c4_i32 : i32
    %470 = vector.broadcast %469 : i32 to vector<8x1xi32>
    %471 = arith.cmpi sgt, %3, %470 : vector<8x1xi32>
    %c0_189 = arith.constant 0 : index
    %c0_190 = arith.constant 0 : index
    %472 = vector.load %arg10[%c0_189, %c0_190] : memref<8x128xf32, #tpu.memory_space<vmem>>, vector<8x128xf32>
    %473 = vector.shape_cast %471 : vector<8x1xi1> to vector<8x1xi1>
    %474 = vector.broadcast %473 : vector<8x1xi1> to vector<8x128xi1>
    %475 = arith.select %474, %468, %472 : vector<8x128xi1>, vector<8x128xf32>
    %c0_191 = arith.constant 0 : index
    %c0_192 = arith.constant 0 : index
    %476 = vector.load %arg10[%c0_191, %c0_192] : memref<8x128xf32, #tpu.memory_space<vmem>>, vector<8x128xf32>
    tpu.vector_store %arg10[%c0_191, %c0_192], %475 {strides = array<i32>} : memref<8x128xf32, #tpu.memory_space<vmem>>, vector<8x128xf32>,
    %c0_193 = arith.constant 0 : index
    %c0_194 = arith.constant 0 : index
    %477 = vector.load %arg11[%c0_193, %c0_194] : memref<8x128xf32, #tpu.memory_space<vmem>>, vector<8x128xf32>
    %478 = vector.shape_cast %471 : vector<8x1xi1> to vector<8x1xi1>
    %479 = vector.broadcast %478 : vector<8x1xi1> to vector<8x128xi1>
    %480 = arith.select %479, %466, %477 : vector<8x128xi1>, vector<8x128xf32>
    %c0_195 = arith.constant 0 : index
    %c0_196 = arith.constant 0 : index
    %481 = vector.load %arg11[%c0_195, %c0_196] : memref<8x128xf32, #tpu.memory_space<vmem>>, vector<8x128xf32>
    tpu.vector_store %arg11[%c0_195, %c0_196], %480 {strides = array<i32>} : memref<8x128xf32, #tpu.memory_space<vmem>>, vector<8x128xf32>,
    %cst_197 = arith.constant 0.000000e+00 : f32
    %482 = vector.shape_cast %471 : vector<8x1xi1> to vector<8x1xi1>
    %483 = vector.broadcast %482 : vector<8x1xi1> to vector<8x128xi1>
    %484 = vector.broadcast %cst_197 : f32 to vector<8x128xf32>
    %485 = arith.select %483, %468, %484 : vector<8x128xi1>, vector<8x128xf32>
    %486 = arith.index_cast %c4_i32 : i32 to index
    %c0_198 = arith.constant 0 : index
    %c0_199 = arith.constant 0 : index
    %487 = vector.load %arg6[%486, %c0_198, %c0_199] : memref<8x8x128xf32, #tpu.memory_space<vmem>>, vector<1x8x128xf32>
    %488 = vector.shape_cast %487 : vector<1x8x128xf32> to vector<8x128xf32>
    %489 = vector.shape_cast %485 : vector<8x128xf32> to vector<1x8x128xf32>
    tpu.vector_store %arg6[%486, %c0_198, %c0_199], %489 {strides = array<i32>} : memref<8x8x128xf32, #tpu.memory_space<vmem>>, vector<1x8x128xf32>,
    %c7_i32_200 = arith.constant 7 : i32
    %490 = arith.subi %c7_i32_200, %c4_i32 : i32
    %491 = arith.index_cast %490 : i32 to index
    %c0_201 = arith.constant 0 : index
    %c0_202 = arith.constant 0 : index
    %492 = vector.load %arg3[%491, %c0_201, %c0_202] : memref<8x8x512xf32, #tpu.memory_space<vmem>>, vector<1x8x512xf32>
    %493 = vector.shape_cast %492 : vector<1x8x512xf32> to vector<8x512xf32>
    %c0_203 = arith.constant 0 : index
    %c0_204 = arith.constant 0 : index
    %494 = vector.load %arg12[%c0_203, %c0_204] : memref<8x128xf32, #tpu.memory_space<vmem>>, vector<8x128xf32>
    %c0_205 = arith.constant 0 : index
    %c0_206 = arith.constant 0 : index
    %495 = vector.load %arg13[%c0_205, %c0_206] : memref<8x128xf32, #tpu.memory_space<vmem>>, vector<8x128xf32>
    %cst_207 = arith.constant dense<0.000000e+00> : vector<8x512xf32>
    %496 = tpu.matmul %494, %8, %cst_207 {dimension_numbers = #tpu.dot_dimension_numbers<[1], [0], [0], [1], [0, 0, 1, 1], [], []>} : vector<8x128xf32>, vector<128x512xf32>, vector<8x512xf32> -> vector<8x512xf32>
    %497 = arith.addf %493, %496 : vector<8x512xf32>
    %498 = vector.extract_strided_slice %497 {offsets = [0, 0], sizes = [8, 128], strides = [1, 1]} : vector<8x512xf32> to vector<8x128xf32>
    %499 = arith.negf %498 : vector<8x128xf32>
    %500 = math.exp %499 : vector<8x128xf32>
    %cst_208 = arith.constant 1.000000e+00 : f32
    %501 = vector.broadcast %cst_208 : f32 to vector<8x128xf32>
    %502 = arith.addf %501, %500 : vector<8x128xf32>
    %503 = arith.divf %501, %502 : vector<8x128xf32>
    %504 = vector.extract_strided_slice %497 {offsets = [0, 128], sizes = [8, 128], strides = [1, 1]} : vector<8x512xf32> to vector<8x128xf32>
    %505 = arith.negf %504 : vector<8x128xf32>
    %506 = math.exp %505 : vector<8x128xf32>
    %cst_209 = arith.constant 1.000000e+00 : f32
    %507 = vector.broadcast %cst_209 : f32 to vector<8x128xf32>
    %508 = arith.addf %507, %506 : vector<8x128xf32>
    %509 = arith.divf %507, %508 : vector<8x128xf32>
    %510 = vector.extract_strided_slice %497 {offsets = [0, 256], sizes = [8, 128], strides = [1, 1]} : vector<8x512xf32> to vector<8x128xf32>
    %511 = math.tanh %510 : vector<8x128xf32>
    %512 = vector.extract_strided_slice %497 {offsets = [0, 384], sizes = [8, 128], strides = [1, 1]} : vector<8x512xf32> to vector<8x128xf32>
    %513 = arith.negf %512 : vector<8x128xf32>
    %514 = math.exp %513 : vector<8x128xf32>
    %cst_210 = arith.constant 1.000000e+00 : f32
    %515 = vector.broadcast %cst_210 : f32 to vector<8x128xf32>
    %516 = arith.addf %515, %514 : vector<8x128xf32>
    %517 = arith.divf %515, %516 : vector<8x128xf32>
    %518 = arith.mulf %509, %495 : vector<8x128xf32>
    %519 = arith.mulf %503, %511 : vector<8x128xf32>
    %520 = arith.addf %518, %519 : vector<8x128xf32>
    %521 = math.tanh %520 : vector<8x128xf32>
    %522 = arith.mulf %517, %521 : vector<8x128xf32>
    %523 = arith.addi %6, %490 : i32
    %524 = vector.broadcast %523 : i32 to vector<8x1xi32>
    %525 = arith.cmpi sgt, %3, %524 : vector<8x1xi32>
    %c0_211 = arith.constant 0 : index
    %c0_212 = arith.constant 0 : index
    %526 = vector.load %arg12[%c0_211, %c0_212] : memref<8x128xf32, #tpu.memory_space<vmem>>, vector<8x128xf32>
    %527 = vector.shape_cast %525 : vector<8x1xi1> to vector<8x1xi1>
    %528 = vector.broadcast %527 : vector<8x1xi1> to vector<8x128xi1>
    %529 = arith.select %528, %522, %526 : vector<8x128xi1>, vector<8x128xf32>
    %c0_213 = arith.constant 0 : index
    %c0_214 = arith.constant 0 : index
    %530 = vector.load %arg12[%c0_213, %c0_214] : memref<8x128xf32, #tpu.memory_space<vmem>>, vector<8x128xf32>
    tpu.vector_store %arg12[%c0_213, %c0_214], %529 {strides = array<i32>} : memref<8x128xf32, #tpu.memory_space<vmem>>, vector<8x128xf32>,
    %c0_215 = arith.constant 0 : index
    %c0_216 = arith.constant 0 : index
    %531 = vector.load %arg13[%c0_215, %c0_216] : memref<8x128xf32, #tpu.memory_space<vmem>>, vector<8x128xf32>
    %532 = vector.shape_cast %525 : vector<8x1xi1> to vector<8x1xi1>
    %533 = vector.broadcast %532 : vector<8x1xi1> to vector<8x128xi1>
    %534 = arith.select %533, %520, %531 : vector<8x128xi1>, vector<8x128xf32>
    %c0_217 = arith.constant 0 : index
    %c0_218 = arith.constant 0 : index
    %535 = vector.load %arg13[%c0_217, %c0_218] : memref<8x128xf32, #tpu.memory_space<vmem>>, vector<8x128xf32>
    tpu.vector_store %arg13[%c0_217, %c0_218], %534 {strides = array<i32>} : memref<8x128xf32, #tpu.memory_space<vmem>>, vector<8x128xf32>,
    %cst_219 = arith.constant 0.000000e+00 : f32
    %536 = vector.shape_cast %525 : vector<8x1xi1> to vector<8x1xi1>
    %537 = vector.broadcast %536 : vector<8x1xi1> to vector<8x128xi1>
    %538 = vector.broadcast %cst_219 : f32 to vector<8x128xf32>
    %539 = arith.select %537, %522, %538 : vector<8x128xi1>, vector<8x128xf32>
    %540 = arith.index_cast %490 : i32 to index
    %c0_220 = arith.constant 0 : index
    %c0_221 = arith.constant 0 : index
    %541 = vector.load %arg7[%540, %c0_220, %c0_221] : memref<8x8x128xf32, #tpu.memory_space<vmem>>, vector<1x8x128xf32>
    %542 = vector.shape_cast %541 : vector<1x8x128xf32> to vector<8x128xf32>
    %543 = vector.shape_cast %539 : vector<8x128xf32> to vector<1x8x128xf32>
    tpu.vector_store %arg7[%540, %c0_220, %c0_221], %543 {strides = array<i32>} : memref<8x8x128xf32, #tpu.memory_space<vmem>>, vector<1x8x128xf32>,
    %c5_i32 = arith.constant 5 : i32
    %544 = arith.index_cast %c5_i32 : i32 to index
    %c0_222 = arith.constant 0 : index
    %c0_223 = arith.constant 0 : index
    %545 = vector.load %arg2[%544, %c0_222, %c0_223] : memref<8x8x512xf32, #tpu.memory_space<vmem>>, vector<1x8x512xf32>
    %546 = vector.shape_cast %545 : vector<1x8x512xf32> to vector<8x512xf32>
    %c0_224 = arith.constant 0 : index
    %c0_225 = arith.constant 0 : index
    %547 = vector.load %arg10[%c0_224, %c0_225] : memref<8x128xf32, #tpu.memory_space<vmem>>, vector<8x128xf32>
    %c0_226 = arith.constant 0 : index
    %c0_227 = arith.constant 0 : index
    %548 = vector.load %arg11[%c0_226, %c0_227] : memref<8x128xf32, #tpu.memory_space<vmem>>, vector<8x128xf32>
    %cst_228 = arith.constant dense<0.000000e+00> : vector<8x512xf32>
    %549 = tpu.matmul %547, %7, %cst_228 {dimension_numbers = #tpu.dot_dimension_numbers<[1], [0], [0], [1], [0, 0, 1, 1], [], []>} : vector<8x128xf32>, vector<128x512xf32>, vector<8x512xf32> -> vector<8x512xf32>
    %550 = arith.addf %546, %549 : vector<8x512xf32>
    %551 = vector.extract_strided_slice %550 {offsets = [0, 0], sizes = [8, 128], strides = [1, 1]} : vector<8x512xf32> to vector<8x128xf32>
    %552 = arith.negf %551 : vector<8x128xf32>
    %553 = math.exp %552 : vector<8x128xf32>
    %cst_229 = arith.constant 1.000000e+00 : f32
    %554 = vector.broadcast %cst_229 : f32 to vector<8x128xf32>
    %555 = arith.addf %554, %553 : vector<8x128xf32>
    %556 = arith.divf %554, %555 : vector<8x128xf32>
    %557 = vector.extract_strided_slice %550 {offsets = [0, 128], sizes = [8, 128], strides = [1, 1]} : vector<8x512xf32> to vector<8x128xf32>
    %558 = arith.negf %557 : vector<8x128xf32>
    %559 = math.exp %558 : vector<8x128xf32>
    %cst_230 = arith.constant 1.000000e+00 : f32
    %560 = vector.broadcast %cst_230 : f32 to vector<8x128xf32>
    %561 = arith.addf %560, %559 : vector<8x128xf32>
    %562 = arith.divf %560, %561 : vector<8x128xf32>
    %563 = vector.extract_strided_slice %550 {offsets = [0, 256], sizes = [8, 128], strides = [1, 1]} : vector<8x512xf32> to vector<8x128xf32>
    %564 = math.tanh %563 : vector<8x128xf32>
    %565 = vector.extract_strided_slice %550 {offsets = [0, 384], sizes = [8, 128], strides = [1, 1]} : vector<8x512xf32> to vector<8x128xf32>
    %566 = arith.negf %565 : vector<8x128xf32>
    %567 = math.exp %566 : vector<8x128xf32>
    %cst_231 = arith.constant 1.000000e+00 : f32
    %568 = vector.broadcast %cst_231 : f32 to vector<8x128xf32>
    %569 = arith.addf %568, %567 : vector<8x128xf32>
    %570 = arith.divf %568, %569 : vector<8x128xf32>
    %571 = arith.mulf %562, %548 : vector<8x128xf32>
    %572 = arith.mulf %556, %564 : vector<8x128xf32>
    %573 = arith.addf %571, %572 : vector<8x128xf32>
    %574 = math.tanh %573 : vector<8x128xf32>
    %575 = arith.mulf %570, %574 : vector<8x128xf32>
    %576 = arith.addi %4, %c5_i32 : i32
    %577 = vector.broadcast %576 : i32 to vector<8x1xi32>
    %578 = arith.cmpi sgt, %3, %577 : vector<8x1xi32>
    %c0_232 = arith.constant 0 : index
    %c0_233 = arith.constant 0 : index
    %579 = vector.load %arg10[%c0_232, %c0_233] : memref<8x128xf32, #tpu.memory_space<vmem>>, vector<8x128xf32>
    %580 = vector.shape_cast %578 : vector<8x1xi1> to vector<8x1xi1>
    %581 = vector.broadcast %580 : vector<8x1xi1> to vector<8x128xi1>
    %582 = arith.select %581, %575, %579 : vector<8x128xi1>, vector<8x128xf32>
    %c0_234 = arith.constant 0 : index
    %c0_235 = arith.constant 0 : index
    %583 = vector.load %arg10[%c0_234, %c0_235] : memref<8x128xf32, #tpu.memory_space<vmem>>, vector<8x128xf32>
    tpu.vector_store %arg10[%c0_234, %c0_235], %582 {strides = array<i32>} : memref<8x128xf32, #tpu.memory_space<vmem>>, vector<8x128xf32>,
    %c0_236 = arith.constant 0 : index
    %c0_237 = arith.constant 0 : index
    %584 = vector.load %arg11[%c0_236, %c0_237] : memref<8x128xf32, #tpu.memory_space<vmem>>, vector<8x128xf32>
    %585 = vector.shape_cast %578 : vector<8x1xi1> to vector<8x1xi1>
    %586 = vector.broadcast %585 : vector<8x1xi1> to vector<8x128xi1>
    %587 = arith.select %586, %573, %584 : vector<8x128xi1>, vector<8x128xf32>
    %c0_238 = arith.constant 0 : index
    %c0_239 = arith.constant 0 : index
    %588 = vector.load %arg11[%c0_238, %c0_239] : memref<8x128xf32, #tpu.memory_space<vmem>>, vector<8x128xf32>
    tpu.vector_store %arg11[%c0_238, %c0_239], %587 {strides = array<i32>} : memref<8x128xf32, #tpu.memory_space<vmem>>, vector<8x128xf32>,
    %cst_240 = arith.constant 0.000000e+00 : f32
    %589 = vector.shape_cast %578 : vector<8x1xi1> to vector<8x1xi1>
    %590 = vector.broadcast %589 : vector<8x1xi1> to vector<8x128xi1>
    %591 = vector.broadcast %cst_240 : f32 to vector<8x128xf32>
    %592 = arith.select %590, %575, %591 : vector<8x128xi1>, vector<8x128xf32>
    %593 = arith.index_cast %c5_i32 : i32 to index
    %c0_241 = arith.constant 0 : index
    %c0_242 = arith.constant 0 : index
    %594 = vector.load %arg6[%593, %c0_241, %c0_242] : memref<8x8x128xf32, #tpu.memory_space<vmem>>, vector<1x8x128xf32>
    %595 = vector.shape_cast %594 : vector<1x8x128xf32> to vector<8x128xf32>
    %596 = vector.shape_cast %592 : vector<8x128xf32> to vector<1x8x128xf32>
    tpu.vector_store %arg6[%593, %c0_241, %c0_242], %596 {strides = array<i32>} : memref<8x8x128xf32, #tpu.memory_space<vmem>>, vector<1x8x128xf32>,
    %c7_i32_243 = arith.constant 7 : i32
    %597 = arith.subi %c7_i32_243, %c5_i32 : i32
    %598 = arith.index_cast %597 : i32 to index
    %c0_244 = arith.constant 0 : index
    %c0_245 = arith.constant 0 : index
    %599 = vector.load %arg3[%598, %c0_244, %c0_245] : memref<8x8x512xf32, #tpu.memory_space<vmem>>, vector<1x8x512xf32>
    %600 = vector.shape_cast %599 : vector<1x8x512xf32> to vector<8x512xf32>
    %c0_246 = arith.constant 0 : index
    %c0_247 = arith.constant 0 : index
    %601 = vector.load %arg12[%c0_246, %c0_247] : memref<8x128xf32, #tpu.memory_space<vmem>>, vector<8x128xf32>
    %c0_248 = arith.constant 0 : index
    %c0_249 = arith.constant 0 : index
    %602 = vector.load %arg13[%c0_248, %c0_249] : memref<8x128xf32, #tpu.memory_space<vmem>>, vector<8x128xf32>
    %cst_250 = arith.constant dense<0.000000e+00> : vector<8x512xf32>
    %603 = tpu.matmul %601, %8, %cst_250 {dimension_numbers = #tpu.dot_dimension_numbers<[1], [0], [0], [1], [0, 0, 1, 1], [], []>} : vector<8x128xf32>, vector<128x512xf32>, vector<8x512xf32> -> vector<8x512xf32>
    %604 = arith.addf %600, %603 : vector<8x512xf32>
    %605 = vector.extract_strided_slice %604 {offsets = [0, 0], sizes = [8, 128], strides = [1, 1]} : vector<8x512xf32> to vector<8x128xf32>
    %606 = arith.negf %605 : vector<8x128xf32>
    %607 = math.exp %606 : vector<8x128xf32>
    %cst_251 = arith.constant 1.000000e+00 : f32
    %608 = vector.broadcast %cst_251 : f32 to vector<8x128xf32>
    %609 = arith.addf %608, %607 : vector<8x128xf32>
    %610 = arith.divf %608, %609 : vector<8x128xf32>
    %611 = vector.extract_strided_slice %604 {offsets = [0, 128], sizes = [8, 128], strides = [1, 1]} : vector<8x512xf32> to vector<8x128xf32>
    %612 = arith.negf %611 : vector<8x128xf32>
    %613 = math.exp %612 : vector<8x128xf32>
    %cst_252 = arith.constant 1.000000e+00 : f32
    %614 = vector.broadcast %cst_252 : f32 to vector<8x128xf32>
    %615 = arith.addf %614, %613 : vector<8x128xf32>
    %616 = arith.divf %614, %615 : vector<8x128xf32>
    %617 = vector.extract_strided_slice %604 {offsets = [0, 256], sizes = [8, 128], strides = [1, 1]} : vector<8x512xf32> to vector<8x128xf32>
    %618 = math.tanh %617 : vector<8x128xf32>
    %619 = vector.extract_strided_slice %604 {offsets = [0, 384], sizes = [8, 128], strides = [1, 1]} : vector<8x512xf32> to vector<8x128xf32>
    %620 = arith.negf %619 : vector<8x128xf32>
    %621 = math.exp %620 : vector<8x128xf32>
    %cst_253 = arith.constant 1.000000e+00 : f32
    %622 = vector.broadcast %cst_253 : f32 to vector<8x128xf32>
    %623 = arith.addf %622, %621 : vector<8x128xf32>
    %624 = arith.divf %622, %623 : vector<8x128xf32>
    %625 = arith.mulf %616, %602 : vector<8x128xf32>
    %626 = arith.mulf %610, %618 : vector<8x128xf32>
    %627 = arith.addf %625, %626 : vector<8x128xf32>
    %628 = math.tanh %627 : vector<8x128xf32>
    %629 = arith.mulf %624, %628 : vector<8x128xf32>
    %630 = arith.addi %6, %597 : i32
    %631 = vector.broadcast %630 : i32 to vector<8x1xi32>
    %632 = arith.cmpi sgt, %3, %631 : vector<8x1xi32>
    %c0_254 = arith.constant 0 : index
    %c0_255 = arith.constant 0 : index
    %633 = vector.load %arg12[%c0_254, %c0_255] : memref<8x128xf32, #tpu.memory_space<vmem>>, vector<8x128xf32>
    %634 = vector.shape_cast %632 : vector<8x1xi1> to vector<8x1xi1>
    %635 = vector.broadcast %634 : vector<8x1xi1> to vector<8x128xi1>
    %636 = arith.select %635, %629, %633 : vector<8x128xi1>, vector<8x128xf32>
    %c0_256 = arith.constant 0 : index
    %c0_257 = arith.constant 0 : index
    %637 = vector.load %arg12[%c0_256, %c0_257] : memref<8x128xf32, #tpu.memory_space<vmem>>, vector<8x128xf32>
    tpu.vector_store %arg12[%c0_256, %c0_257], %636 {strides = array<i32>} : memref<8x128xf32, #tpu.memory_space<vmem>>, vector<8x128xf32>,
    %c0_258 = arith.constant 0 : index
    %c0_259 = arith.constant 0 : index
    %638 = vector.load %arg13[%c0_258, %c0_259] : memref<8x128xf32, #tpu.memory_space<vmem>>, vector<8x128xf32>
    %639 = vector.shape_cast %632 : vector<8x1xi1> to vector<8x1xi1>
    %640 = vector.broadcast %639 : vector<8x1xi1> to vector<8x128xi1>
    %641 = arith.select %640, %627, %638 : vector<8x128xi1>, vector<8x128xf32>
    %c0_260 = arith.constant 0 : index
    %c0_261 = arith.constant 0 : index
    %642 = vector.load %arg13[%c0_260, %c0_261] : memref<8x128xf32, #tpu.memory_space<vmem>>, vector<8x128xf32>
    tpu.vector_store %arg13[%c0_260, %c0_261], %641 {strides = array<i32>} : memref<8x128xf32, #tpu.memory_space<vmem>>, vector<8x128xf32>,
    %cst_262 = arith.constant 0.000000e+00 : f32
    %643 = vector.shape_cast %632 : vector<8x1xi1> to vector<8x1xi1>
    %644 = vector.broadcast %643 : vector<8x1xi1> to vector<8x128xi1>
    %645 = vector.broadcast %cst_262 : f32 to vector<8x128xf32>
    %646 = arith.select %644, %629, %645 : vector<8x128xi1>, vector<8x128xf32>
    %647 = arith.index_cast %597 : i32 to index
    %c0_263 = arith.constant 0 : index
    %c0_264 = arith.constant 0 : index
    %648 = vector.load %arg7[%647, %c0_263, %c0_264] : memref<8x8x128xf32, #tpu.memory_space<vmem>>, vector<1x8x128xf32>
    %649 = vector.shape_cast %648 : vector<1x8x128xf32> to vector<8x128xf32>
    %650 = vector.shape_cast %646 : vector<8x128xf32> to vector<1x8x128xf32>
    tpu.vector_store %arg7[%647, %c0_263, %c0_264], %650 {strides = array<i32>} : memref<8x8x128xf32, #tpu.memory_space<vmem>>, vector<1x8x128xf32>,
    %c6_i32 = arith.constant 6 : i32
    %651 = arith.index_cast %c6_i32 : i32 to index
    %c0_265 = arith.constant 0 : index
    %c0_266 = arith.constant 0 : index
    %652 = vector.load %arg2[%651, %c0_265, %c0_266] : memref<8x8x512xf32, #tpu.memory_space<vmem>>, vector<1x8x512xf32>
    %653 = vector.shape_cast %652 : vector<1x8x512xf32> to vector<8x512xf32>
    %c0_267 = arith.constant 0 : index
    %c0_268 = arith.constant 0 : index
    %654 = vector.load %arg10[%c0_267, %c0_268] : memref<8x128xf32, #tpu.memory_space<vmem>>, vector<8x128xf32>
    %c0_269 = arith.constant 0 : index
    %c0_270 = arith.constant 0 : index
    %655 = vector.load %arg11[%c0_269, %c0_270] : memref<8x128xf32, #tpu.memory_space<vmem>>, vector<8x128xf32>
    %cst_271 = arith.constant dense<0.000000e+00> : vector<8x512xf32>
    %656 = tpu.matmul %654, %7, %cst_271 {dimension_numbers = #tpu.dot_dimension_numbers<[1], [0], [0], [1], [0, 0, 1, 1], [], []>} : vector<8x128xf32>, vector<128x512xf32>, vector<8x512xf32> -> vector<8x512xf32>
    %657 = arith.addf %653, %656 : vector<8x512xf32>
    %658 = vector.extract_strided_slice %657 {offsets = [0, 0], sizes = [8, 128], strides = [1, 1]} : vector<8x512xf32> to vector<8x128xf32>
    %659 = arith.negf %658 : vector<8x128xf32>
    %660 = math.exp %659 : vector<8x128xf32>
    %cst_272 = arith.constant 1.000000e+00 : f32
    %661 = vector.broadcast %cst_272 : f32 to vector<8x128xf32>
    %662 = arith.addf %661, %660 : vector<8x128xf32>
    %663 = arith.divf %661, %662 : vector<8x128xf32>
    %664 = vector.extract_strided_slice %657 {offsets = [0, 128], sizes = [8, 128], strides = [1, 1]} : vector<8x512xf32> to vector<8x128xf32>
    %665 = arith.negf %664 : vector<8x128xf32>
    %666 = math.exp %665 : vector<8x128xf32>
    %cst_273 = arith.constant 1.000000e+00 : f32
    %667 = vector.broadcast %cst_273 : f32 to vector<8x128xf32>
    %668 = arith.addf %667, %666 : vector<8x128xf32>
    %669 = arith.divf %667, %668 : vector<8x128xf32>
    %670 = vector.extract_strided_slice %657 {offsets = [0, 256], sizes = [8, 128], strides = [1, 1]} : vector<8x512xf32> to vector<8x128xf32>
    %671 = math.tanh %670 : vector<8x128xf32>
    %672 = vector.extract_strided_slice %657 {offsets = [0, 384], sizes = [8, 128], strides = [1, 1]} : vector<8x512xf32> to vector<8x128xf32>
    %673 = arith.negf %672 : vector<8x128xf32>
    %674 = math.exp %673 : vector<8x128xf32>
    %cst_274 = arith.constant 1.000000e+00 : f32
    %675 = vector.broadcast %cst_274 : f32 to vector<8x128xf32>
    %676 = arith.addf %675, %674 : vector<8x128xf32>
    %677 = arith.divf %675, %676 : vector<8x128xf32>
    %678 = arith.mulf %669, %655 : vector<8x128xf32>
    %679 = arith.mulf %663, %671 : vector<8x128xf32>
    %680 = arith.addf %678, %679 : vector<8x128xf32>
    %681 = math.tanh %680 : vector<8x128xf32>
    %682 = arith.mulf %677, %681 : vector<8x128xf32>
    %683 = arith.addi %4, %c6_i32 : i32
    %684 = vector.broadcast %683 : i32 to vector<8x1xi32>
    %685 = arith.cmpi sgt, %3, %684 : vector<8x1xi32>
    %c0_275 = arith.constant 0 : index
    %c0_276 = arith.constant 0 : index
    %686 = vector.load %arg10[%c0_275, %c0_276] : memref<8x128xf32, #tpu.memory_space<vmem>>, vector<8x128xf32>
    %687 = vector.shape_cast %685 : vector<8x1xi1> to vector<8x1xi1>
    %688 = vector.broadcast %687 : vector<8x1xi1> to vector<8x128xi1>
    %689 = arith.select %688, %682, %686 : vector<8x128xi1>, vector<8x128xf32>
    %c0_277 = arith.constant 0 : index
    %c0_278 = arith.constant 0 : index
    %690 = vector.load %arg10[%c0_277, %c0_278] : memref<8x128xf32, #tpu.memory_space<vmem>>, vector<8x128xf32>
    tpu.vector_store %arg10[%c0_277, %c0_278], %689 {strides = array<i32>} : memref<8x128xf32, #tpu.memory_space<vmem>>, vector<8x128xf32>,
    %c0_279 = arith.constant 0 : index
    %c0_280 = arith.constant 0 : index
    %691 = vector.load %arg11[%c0_279, %c0_280] : memref<8x128xf32, #tpu.memory_space<vmem>>, vector<8x128xf32>
    %692 = vector.shape_cast %685 : vector<8x1xi1> to vector<8x1xi1>
    %693 = vector.broadcast %692 : vector<8x1xi1> to vector<8x128xi1>
    %694 = arith.select %693, %680, %691 : vector<8x128xi1>, vector<8x128xf32>
    %c0_281 = arith.constant 0 : index
    %c0_282 = arith.constant 0 : index
    %695 = vector.load %arg11[%c0_281, %c0_282] : memref<8x128xf32, #tpu.memory_space<vmem>>, vector<8x128xf32>
    tpu.vector_store %arg11[%c0_281, %c0_282], %694 {strides = array<i32>} : memref<8x128xf32, #tpu.memory_space<vmem>>, vector<8x128xf32>,
    %cst_283 = arith.constant 0.000000e+00 : f32
    %696 = vector.shape_cast %685 : vector<8x1xi1> to vector<8x1xi1>
    %697 = vector.broadcast %696 : vector<8x1xi1> to vector<8x128xi1>
    %698 = vector.broadcast %cst_283 : f32 to vector<8x128xf32>
    %699 = arith.select %697, %682, %698 : vector<8x128xi1>, vector<8x128xf32>
    %700 = arith.index_cast %c6_i32 : i32 to index
    %c0_284 = arith.constant 0 : index
    %c0_285 = arith.constant 0 : index
    %701 = vector.load %arg6[%700, %c0_284, %c0_285] : memref<8x8x128xf32, #tpu.memory_space<vmem>>, vector<1x8x128xf32>
    %702 = vector.shape_cast %701 : vector<1x8x128xf32> to vector<8x128xf32>
    %703 = vector.shape_cast %699 : vector<8x128xf32> to vector<1x8x128xf32>
    tpu.vector_store %arg6[%700, %c0_284, %c0_285], %703 {strides = array<i32>} : memref<8x8x128xf32, #tpu.memory_space<vmem>>, vector<1x8x128xf32>,
    %c7_i32_286 = arith.constant 7 : i32
    %704 = arith.subi %c7_i32_286, %c6_i32 : i32
    %705 = arith.index_cast %704 : i32 to index
    %c0_287 = arith.constant 0 : index
    %c0_288 = arith.constant 0 : index
    %706 = vector.load %arg3[%705, %c0_287, %c0_288] : memref<8x8x512xf32, #tpu.memory_space<vmem>>, vector<1x8x512xf32>
    %707 = vector.shape_cast %706 : vector<1x8x512xf32> to vector<8x512xf32>
    %c0_289 = arith.constant 0 : index
    %c0_290 = arith.constant 0 : index
    %708 = vector.load %arg12[%c0_289, %c0_290] : memref<8x128xf32, #tpu.memory_space<vmem>>, vector<8x128xf32>
    %c0_291 = arith.constant 0 : index
    %c0_292 = arith.constant 0 : index
    %709 = vector.load %arg13[%c0_291, %c0_292] : memref<8x128xf32, #tpu.memory_space<vmem>>, vector<8x128xf32>
    %cst_293 = arith.constant dense<0.000000e+00> : vector<8x512xf32>
    %710 = tpu.matmul %708, %8, %cst_293 {dimension_numbers = #tpu.dot_dimension_numbers<[1], [0], [0], [1], [0, 0, 1, 1], [], []>} : vector<8x128xf32>, vector<128x512xf32>, vector<8x512xf32> -> vector<8x512xf32>
    %711 = arith.addf %707, %710 : vector<8x512xf32>
    %712 = vector.extract_strided_slice %711 {offsets = [0, 0], sizes = [8, 128], strides = [1, 1]} : vector<8x512xf32> to vector<8x128xf32>
    %713 = arith.negf %712 : vector<8x128xf32>
    %714 = math.exp %713 : vector<8x128xf32>
    %cst_294 = arith.constant 1.000000e+00 : f32
    %715 = vector.broadcast %cst_294 : f32 to vector<8x128xf32>
    %716 = arith.addf %715, %714 : vector<8x128xf32>
    %717 = arith.divf %715, %716 : vector<8x128xf32>
    %718 = vector.extract_strided_slice %711 {offsets = [0, 128], sizes = [8, 128], strides = [1, 1]} : vector<8x512xf32> to vector<8x128xf32>
    %719 = arith.negf %718 : vector<8x128xf32>
    %720 = math.exp %719 : vector<8x128xf32>
    %cst_295 = arith.constant 1.000000e+00 : f32
    %721 = vector.broadcast %cst_295 : f32 to vector<8x128xf32>
    %722 = arith.addf %721, %720 : vector<8x128xf32>
    %723 = arith.divf %721, %722 : vector<8x128xf32>
    %724 = vector.extract_strided_slice %711 {offsets = [0, 256], sizes = [8, 128], strides = [1, 1]} : vector<8x512xf32> to vector<8x128xf32>
    %725 = math.tanh %724 : vector<8x128xf32>
    %726 = vector.extract_strided_slice %711 {offsets = [0, 384], sizes = [8, 128], strides = [1, 1]} : vector<8x512xf32> to vector<8x128xf32>
    %727 = arith.negf %726 : vector<8x128xf32>
    %728 = math.exp %727 : vector<8x128xf32>
    %cst_296 = arith.constant 1.000000e+00 : f32
    %729 = vector.broadcast %cst_296 : f32 to vector<8x128xf32>
    %730 = arith.addf %729, %728 : vector<8x128xf32>
    %731 = arith.divf %729, %730 : vector<8x128xf32>
    %732 = arith.mulf %723, %709 : vector<8x128xf32>
    %733 = arith.mulf %717, %725 : vector<8x128xf32>
    %734 = arith.addf %732, %733 : vector<8x128xf32>
    %735 = math.tanh %734 : vector<8x128xf32>
    %736 = arith.mulf %731, %735 : vector<8x128xf32>
    %737 = arith.addi %6, %704 : i32
    %738 = vector.broadcast %737 : i32 to vector<8x1xi32>
    %739 = arith.cmpi sgt, %3, %738 : vector<8x1xi32>
    %c0_297 = arith.constant 0 : index
    %c0_298 = arith.constant 0 : index
    %740 = vector.load %arg12[%c0_297, %c0_298] : memref<8x128xf32, #tpu.memory_space<vmem>>, vector<8x128xf32>
    %741 = vector.shape_cast %739 : vector<8x1xi1> to vector<8x1xi1>
    %742 = vector.broadcast %741 : vector<8x1xi1> to vector<8x128xi1>
    %743 = arith.select %742, %736, %740 : vector<8x128xi1>, vector<8x128xf32>
    %c0_299 = arith.constant 0 : index
    %c0_300 = arith.constant 0 : index
    %744 = vector.load %arg12[%c0_299, %c0_300] : memref<8x128xf32, #tpu.memory_space<vmem>>, vector<8x128xf32>
    tpu.vector_store %arg12[%c0_299, %c0_300], %743 {strides = array<i32>} : memref<8x128xf32, #tpu.memory_space<vmem>>, vector<8x128xf32>,
    %c0_301 = arith.constant 0 : index
    %c0_302 = arith.constant 0 : index
    %745 = vector.load %arg13[%c0_301, %c0_302] : memref<8x128xf32, #tpu.memory_space<vmem>>, vector<8x128xf32>
    %746 = vector.shape_cast %739 : vector<8x1xi1> to vector<8x1xi1>
    %747 = vector.broadcast %746 : vector<8x1xi1> to vector<8x128xi1>
    %748 = arith.select %747, %734, %745 : vector<8x128xi1>, vector<8x128xf32>
    %c0_303 = arith.constant 0 : index
    %c0_304 = arith.constant 0 : index
    %749 = vector.load %arg13[%c0_303, %c0_304] : memref<8x128xf32, #tpu.memory_space<vmem>>, vector<8x128xf32>
    tpu.vector_store %arg13[%c0_303, %c0_304], %748 {strides = array<i32>} : memref<8x128xf32, #tpu.memory_space<vmem>>, vector<8x128xf32>,
    %cst_305 = arith.constant 0.000000e+00 : f32
    %750 = vector.shape_cast %739 : vector<8x1xi1> to vector<8x1xi1>
    %751 = vector.broadcast %750 : vector<8x1xi1> to vector<8x128xi1>
    %752 = vector.broadcast %cst_305 : f32 to vector<8x128xf32>
    %753 = arith.select %751, %736, %752 : vector<8x128xi1>, vector<8x128xf32>
    %754 = arith.index_cast %704 : i32 to index
    %c0_306 = arith.constant 0 : index
    %c0_307 = arith.constant 0 : index
    %755 = vector.load %arg7[%754, %c0_306, %c0_307] : memref<8x8x128xf32, #tpu.memory_space<vmem>>, vector<1x8x128xf32>
    %756 = vector.shape_cast %755 : vector<1x8x128xf32> to vector<8x128xf32>
    %757 = vector.shape_cast %753 : vector<8x128xf32> to vector<1x8x128xf32>
    tpu.vector_store %arg7[%754, %c0_306, %c0_307], %757 {strides = array<i32>} : memref<8x8x128xf32, #tpu.memory_space<vmem>>, vector<1x8x128xf32>,
    %c7_i32_308 = arith.constant 7 : i32
    %758 = arith.index_cast %c7_i32_308 : i32 to index
    %c0_309 = arith.constant 0 : index
    %c0_310 = arith.constant 0 : index
    %759 = vector.load %arg2[%758, %c0_309, %c0_310] : memref<8x8x512xf32, #tpu.memory_space<vmem>>, vector<1x8x512xf32>
    %760 = vector.shape_cast %759 : vector<1x8x512xf32> to vector<8x512xf32>
    %c0_311 = arith.constant 0 : index
    %c0_312 = arith.constant 0 : index
    %761 = vector.load %arg10[%c0_311, %c0_312] : memref<8x128xf32, #tpu.memory_space<vmem>>, vector<8x128xf32>
    %c0_313 = arith.constant 0 : index
    %c0_314 = arith.constant 0 : index
    %762 = vector.load %arg11[%c0_313, %c0_314] : memref<8x128xf32, #tpu.memory_space<vmem>>, vector<8x128xf32>
    %cst_315 = arith.constant dense<0.000000e+00> : vector<8x512xf32>
    %763 = tpu.matmul %761, %7, %cst_315 {dimension_numbers = #tpu.dot_dimension_numbers<[1], [0], [0], [1], [0, 0, 1, 1], [], []>} : vector<8x128xf32>, vector<128x512xf32>, vector<8x512xf32> -> vector<8x512xf32>
    %764 = arith.addf %760, %763 : vector<8x512xf32>
    %765 = vector.extract_strided_slice %764 {offsets = [0, 0], sizes = [8, 128], strides = [1, 1]} : vector<8x512xf32> to vector<8x128xf32>
    %766 = arith.negf %765 : vector<8x128xf32>
    %767 = math.exp %766 : vector<8x128xf32>
    %cst_316 = arith.constant 1.000000e+00 : f32
    %768 = vector.broadcast %cst_316 : f32 to vector<8x128xf32>
    %769 = arith.addf %768, %767 : vector<8x128xf32>
    %770 = arith.divf %768, %769 : vector<8x128xf32>
    %771 = vector.extract_strided_slice %764 {offsets = [0, 128], sizes = [8, 128], strides = [1, 1]} : vector<8x512xf32> to vector<8x128xf32>
    %772 = arith.negf %771 : vector<8x128xf32>
    %773 = math.exp %772 : vector<8x128xf32>
    %cst_317 = arith.constant 1.000000e+00 : f32
    %774 = vector.broadcast %cst_317 : f32 to vector<8x128xf32>
    %775 = arith.addf %774, %773 : vector<8x128xf32>
    %776 = arith.divf %774, %775 : vector<8x128xf32>
    %777 = vector.extract_strided_slice %764 {offsets = [0, 256], sizes = [8, 128], strides = [1, 1]} : vector<8x512xf32> to vector<8x128xf32>
    %778 = math.tanh %777 : vector<8x128xf32>
    %779 = vector.extract_strided_slice %764 {offsets = [0, 384], sizes = [8, 128], strides = [1, 1]} : vector<8x512xf32> to vector<8x128xf32>
    %780 = arith.negf %779 : vector<8x128xf32>
    %781 = math.exp %780 : vector<8x128xf32>
    %cst_318 = arith.constant 1.000000e+00 : f32
    %782 = vector.broadcast %cst_318 : f32 to vector<8x128xf32>
    %783 = arith.addf %782, %781 : vector<8x128xf32>
    %784 = arith.divf %782, %783 : vector<8x128xf32>
    %785 = arith.mulf %776, %762 : vector<8x128xf32>
    %786 = arith.mulf %770, %778 : vector<8x128xf32>
    %787 = arith.addf %785, %786 : vector<8x128xf32>
    %788 = math.tanh %787 : vector<8x128xf32>
    %789 = arith.mulf %784, %788 : vector<8x128xf32>
    %790 = arith.addi %4, %c7_i32_308 : i32
    %791 = vector.broadcast %790 : i32 to vector<8x1xi32>
    %792 = arith.cmpi sgt, %3, %791 : vector<8x1xi32>
    %c0_319 = arith.constant 0 : index
    %c0_320 = arith.constant 0 : index
    %793 = vector.load %arg10[%c0_319, %c0_320] : memref<8x128xf32, #tpu.memory_space<vmem>>, vector<8x128xf32>
    %794 = vector.shape_cast %792 : vector<8x1xi1> to vector<8x1xi1>
    %795 = vector.broadcast %794 : vector<8x1xi1> to vector<8x128xi1>
    %796 = arith.select %795, %789, %793 : vector<8x128xi1>, vector<8x128xf32>
    %c0_321 = arith.constant 0 : index
    %c0_322 = arith.constant 0 : index
    %797 = vector.load %arg10[%c0_321, %c0_322] : memref<8x128xf32, #tpu.memory_space<vmem>>, vector<8x128xf32>
    tpu.vector_store %arg10[%c0_321, %c0_322], %796 {strides = array<i32>} : memref<8x128xf32, #tpu.memory_space<vmem>>, vector<8x128xf32>,
    %c0_323 = arith.constant 0 : index
    %c0_324 = arith.constant 0 : index
    %798 = vector.load %arg11[%c0_323, %c0_324] : memref<8x128xf32, #tpu.memory_space<vmem>>, vector<8x128xf32>
    %799 = vector.shape_cast %792 : vector<8x1xi1> to vector<8x1xi1>
    %800 = vector.broadcast %799 : vector<8x1xi1> to vector<8x128xi1>
    %801 = arith.select %800, %787, %798 : vector<8x128xi1>, vector<8x128xf32>
    %c0_325 = arith.constant 0 : index
    %c0_326 = arith.constant 0 : index
    %802 = vector.load %arg11[%c0_325, %c0_326] : memref<8x128xf32, #tpu.memory_space<vmem>>, vector<8x128xf32>
    tpu.vector_store %arg11[%c0_325, %c0_326], %801 {strides = array<i32>} : memref<8x128xf32, #tpu.memory_space<vmem>>, vector<8x128xf32>,
    %cst_327 = arith.constant 0.000000e+00 : f32
    %803 = vector.shape_cast %792 : vector<8x1xi1> to vector<8x1xi1>
    %804 = vector.broadcast %803 : vector<8x1xi1> to vector<8x128xi1>
    %805 = vector.broadcast %cst_327 : f32 to vector<8x128xf32>
    %806 = arith.select %804, %789, %805 : vector<8x128xi1>, vector<8x128xf32>
    %807 = arith.index_cast %c7_i32_308 : i32 to index
    %c0_328 = arith.constant 0 : index
    %c0_329 = arith.constant 0 : index
    %808 = vector.load %arg6[%807, %c0_328, %c0_329] : memref<8x8x128xf32, #tpu.memory_space<vmem>>, vector<1x8x128xf32>
    %809 = vector.shape_cast %808 : vector<1x8x128xf32> to vector<8x128xf32>
    %810 = vector.shape_cast %806 : vector<8x128xf32> to vector<1x8x128xf32>
    tpu.vector_store %arg6[%807, %c0_328, %c0_329], %810 {strides = array<i32>} : memref<8x8x128xf32, #tpu.memory_space<vmem>>, vector<1x8x128xf32>,
    %c7_i32_330 = arith.constant 7 : i32
    %811 = arith.subi %c7_i32_330, %c7_i32_308 : i32
    %812 = arith.index_cast %811 : i32 to index
    %c0_331 = arith.constant 0 : index
    %c0_332 = arith.constant 0 : index
    %813 = vector.load %arg3[%812, %c0_331, %c0_332] : memref<8x8x512xf32, #tpu.memory_space<vmem>>, vector<1x8x512xf32>
    %814 = vector.shape_cast %813 : vector<1x8x512xf32> to vector<8x512xf32>
    %c0_333 = arith.constant 0 : index
    %c0_334 = arith.constant 0 : index
    %815 = vector.load %arg12[%c0_333, %c0_334] : memref<8x128xf32, #tpu.memory_space<vmem>>, vector<8x128xf32>
    %c0_335 = arith.constant 0 : index
    %c0_336 = arith.constant 0 : index
    %816 = vector.load %arg13[%c0_335, %c0_336] : memref<8x128xf32, #tpu.memory_space<vmem>>, vector<8x128xf32>
    %cst_337 = arith.constant dense<0.000000e+00> : vector<8x512xf32>
    %817 = tpu.matmul %815, %8, %cst_337 {dimension_numbers = #tpu.dot_dimension_numbers<[1], [0], [0], [1], [0, 0, 1, 1], [], []>} : vector<8x128xf32>, vector<128x512xf32>, vector<8x512xf32> -> vector<8x512xf32>
    %818 = arith.addf %814, %817 : vector<8x512xf32>
    %819 = vector.extract_strided_slice %818 {offsets = [0, 0], sizes = [8, 128], strides = [1, 1]} : vector<8x512xf32> to vector<8x128xf32>
    %820 = arith.negf %819 : vector<8x128xf32>
    %821 = math.exp %820 : vector<8x128xf32>
    %cst_338 = arith.constant 1.000000e+00 : f32
    %822 = vector.broadcast %cst_338 : f32 to vector<8x128xf32>
    %823 = arith.addf %822, %821 : vector<8x128xf32>
    %824 = arith.divf %822, %823 : vector<8x128xf32>
    %825 = vector.extract_strided_slice %818 {offsets = [0, 128], sizes = [8, 128], strides = [1, 1]} : vector<8x512xf32> to vector<8x128xf32>
    %826 = arith.negf %825 : vector<8x128xf32>
    %827 = math.exp %826 : vector<8x128xf32>
    %cst_339 = arith.constant 1.000000e+00 : f32
    %828 = vector.broadcast %cst_339 : f32 to vector<8x128xf32>
    %829 = arith.addf %828, %827 : vector<8x128xf32>
    %830 = arith.divf %828, %829 : vector<8x128xf32>
    %831 = vector.extract_strided_slice %818 {offsets = [0, 256], sizes = [8, 128], strides = [1, 1]} : vector<8x512xf32> to vector<8x128xf32>
    %832 = math.tanh %831 : vector<8x128xf32>
    %833 = vector.extract_strided_slice %818 {offsets = [0, 384], sizes = [8, 128], strides = [1, 1]} : vector<8x512xf32> to vector<8x128xf32>
    %834 = arith.negf %833 : vector<8x128xf32>
    %835 = math.exp %834 : vector<8x128xf32>
    %cst_340 = arith.constant 1.000000e+00 : f32
    %836 = vector.broadcast %cst_340 : f32 to vector<8x128xf32>
    %837 = arith.addf %836, %835 : vector<8x128xf32>
    %838 = arith.divf %836, %837 : vector<8x128xf32>
    %839 = arith.mulf %830, %816 : vector<8x128xf32>
    %840 = arith.mulf %824, %832 : vector<8x128xf32>
    %841 = arith.addf %839, %840 : vector<8x128xf32>
    %842 = math.tanh %841 : vector<8x128xf32>
    %843 = arith.mulf %838, %842 : vector<8x128xf32>
    %844 = arith.addi %6, %811 : i32
    %845 = vector.broadcast %844 : i32 to vector<8x1xi32>
    %846 = arith.cmpi sgt, %3, %845 : vector<8x1xi32>
    %c0_341 = arith.constant 0 : index
    %c0_342 = arith.constant 0 : index
    %847 = vector.load %arg12[%c0_341, %c0_342] : memref<8x128xf32, #tpu.memory_space<vmem>>, vector<8x128xf32>
    %848 = vector.shape_cast %846 : vector<8x1xi1> to vector<8x1xi1>
    %849 = vector.broadcast %848 : vector<8x1xi1> to vector<8x128xi1>
    %850 = arith.select %849, %843, %847 : vector<8x128xi1>, vector<8x128xf32>
    %c0_343 = arith.constant 0 : index
    %c0_344 = arith.constant 0 : index
    %851 = vector.load %arg12[%c0_343, %c0_344] : memref<8x128xf32, #tpu.memory_space<vmem>>, vector<8x128xf32>
    tpu.vector_store %arg12[%c0_343, %c0_344], %850 {strides = array<i32>} : memref<8x128xf32, #tpu.memory_space<vmem>>, vector<8x128xf32>,
    %c0_345 = arith.constant 0 : index
    %c0_346 = arith.constant 0 : index
    %852 = vector.load %arg13[%c0_345, %c0_346] : memref<8x128xf32, #tpu.memory_space<vmem>>, vector<8x128xf32>
    %853 = vector.shape_cast %846 : vector<8x1xi1> to vector<8x1xi1>
    %854 = vector.broadcast %853 : vector<8x1xi1> to vector<8x128xi1>
    %855 = arith.select %854, %841, %852 : vector<8x128xi1>, vector<8x128xf32>
    %c0_347 = arith.constant 0 : index
    %c0_348 = arith.constant 0 : index
    %856 = vector.load %arg13[%c0_347, %c0_348] : memref<8x128xf32, #tpu.memory_space<vmem>>, vector<8x128xf32>
    tpu.vector_store %arg13[%c0_347, %c0_348], %855 {strides = array<i32>} : memref<8x128xf32, #tpu.memory_space<vmem>>, vector<8x128xf32>,
    %cst_349 = arith.constant 0.000000e+00 : f32
    %857 = vector.shape_cast %846 : vector<8x1xi1> to vector<8x1xi1>
    %858 = vector.broadcast %857 : vector<8x1xi1> to vector<8x128xi1>
    %859 = vector.broadcast %cst_349 : f32 to vector<8x128xf32>
    %860 = arith.select %858, %843, %859 : vector<8x128xi1>, vector<8x128xf32>
    %861 = arith.index_cast %811 : i32 to index
    %c0_350 = arith.constant 0 : index
    %c0_351 = arith.constant 0 : index
    %862 = vector.load %arg7[%861, %c0_350, %c0_351] : memref<8x8x128xf32, #tpu.memory_space<vmem>>, vector<1x8x128xf32>
    %863 = vector.shape_cast %862 : vector<1x8x128xf32> to vector<8x128xf32>
    %864 = vector.shape_cast %860 : vector<8x128xf32> to vector<1x8x128xf32>
    tpu.vector_store %arg7[%861, %c0_350, %c0_351], %864 {strides = array<i32>} : memref<8x8x128xf32, #tpu.memory_space<vmem>>, vector<1x8x128xf32>,
    %c8_i32_352 = arith.constant 8 : i32
    %c0_353 = arith.constant 0 : index
    %c0_354 = arith.constant 0 : index
    %865 = vector.load %arg10[%c0_353, %c0_354] : memref<8x128xf32, #tpu.memory_space<vmem>>, vector<8x128xf32>
    %c0_355 = arith.constant 0 : index
    %c0_356 = arith.constant 0 : index
    %c0_357 = arith.constant 0 : index
    %866 = vector.load %arg8[%c0_355, %c0_356, %c0_357] : memref<2x8x128xf32, #tpu.memory_space<vmem>>, vector<1x8x128xf32>
    %867 = vector.shape_cast %866 : vector<1x8x128xf32> to vector<8x128xf32>
    %868 = vector.shape_cast %865 : vector<8x128xf32> to vector<1x8x128xf32>
    tpu.vector_store %arg8[%c0_355, %c0_356, %c0_357], %868 {strides = array<i32>} : memref<2x8x128xf32, #tpu.memory_space<vmem>>, vector<1x8x128xf32>,
    %c0_358 = arith.constant 0 : index
    %c0_359 = arith.constant 0 : index
    %869 = vector.load %arg12[%c0_358, %c0_359] : memref<8x128xf32, #tpu.memory_space<vmem>>, vector<8x128xf32>
    %c1 = arith.constant 1 : index
    %c0_360 = arith.constant 0 : index
    %c0_361 = arith.constant 0 : index
    %870 = vector.load %arg8[%c1, %c0_360, %c0_361] : memref<2x8x128xf32, #tpu.memory_space<vmem>>, vector<1x8x128xf32>
    %871 = vector.shape_cast %870 : vector<1x8x128xf32> to vector<8x128xf32>
    %872 = vector.shape_cast %869 : vector<8x128xf32> to vector<1x8x128xf32>
    tpu.vector_store %arg8[%c1, %c0_360, %c0_361], %872 {strides = array<i32>} : memref<2x8x128xf32, #tpu.memory_space<vmem>>, vector<1x8x128xf32>,
    %c0_362 = arith.constant 0 : index
    %c0_363 = arith.constant 0 : index
    %873 = vector.load %arg11[%c0_362, %c0_363] : memref<8x128xf32, #tpu.memory_space<vmem>>, vector<8x128xf32>
    %c0_364 = arith.constant 0 : index
    %c0_365 = arith.constant 0 : index
    %c0_366 = arith.constant 0 : index
    %874 = vector.load %arg9[%c0_364, %c0_365, %c0_366] : memref<2x8x128xf32, #tpu.memory_space<vmem>>, vector<1x8x128xf32>
    %875 = vector.shape_cast %874 : vector<1x8x128xf32> to vector<8x128xf32>
    %876 = vector.shape_cast %873 : vector<8x128xf32> to vector<1x8x128xf32>
    tpu.vector_store %arg9[%c0_364, %c0_365, %c0_366], %876 {strides = array<i32>} : memref<2x8x128xf32, #tpu.memory_space<vmem>>, vector<1x8x128xf32>,
    %c0_367 = arith.constant 0 : index
    %c0_368 = arith.constant 0 : index
    %877 = vector.load %arg13[%c0_367, %c0_368] : memref<8x128xf32, #tpu.memory_space<vmem>>, vector<8x128xf32>
    %c1_369 = arith.constant 1 : index
    %c0_370 = arith.constant 0 : index
    %c0_371 = arith.constant 0 : index
    %878 = vector.load %arg9[%c1_369, %c0_370, %c0_371] : memref<2x8x128xf32, #tpu.memory_space<vmem>>, vector<1x8x128xf32>
    %879 = vector.shape_cast %878 : vector<1x8x128xf32> to vector<8x128xf32>
    %880 = vector.shape_cast %877 : vector<8x128xf32> to vector<1x8x128xf32>
    tpu.vector_store %arg9[%c1_369, %c0_370, %c0_371], %880 {strides = array<i32>} : memref<2x8x128xf32, #tpu.memory_space<vmem>>, vector<1x8x128xf32>,
    return
  }
  func.func @transform_0(%arg0: i32) -> (i32, i32) {
    %c0_i32 = arith.constant 0 : i32
    %c0_i32_0 = arith.constant 0 : i32
    %c0_i32_1 = arith.constant 0 : i32
    return %c0_i32, %c0_i32_0 : i32, i32
  }
  func.func @transform_1(%arg0: i32) -> (i32, i32, i32) {
    %c0_i32 = arith.constant 0 : i32
    %c0_i32_0 = arith.constant 0 : i32
    %c0_i32_1 = arith.constant 0 : i32
    return %arg0, %c0_i32, %c0_i32_0 : i32, i32, i32
  }
  func.func @transform_2(%arg0: i32) -> (i32, i32, i32) {
    %c0_i32 = arith.constant 0 : i32
    %0 = arith.subi %c0_i32, %arg0 : i32
    %c0_i32_0 = arith.constant 0 : i32
    %c0_i32_1 = arith.constant 0 : i32
    %c0_i32_2 = arith.constant 0 : i32
    return %0, %c0_i32_0, %c0_i32_1 : i32, i32, i32
  }
  func.func @transform_3(%arg0: i32) -> (i32, i32) {
    %c0_i32 = arith.constant 0 : i32
    %c0_i32_0 = arith.constant 0 : i32
    %c0_i32_1 = arith.constant 0 : i32
    return %c0_i32, %c0_i32_0 : i32, i32
  }
  func.func @transform_4(%arg0: i32) -> (i32, i32) {
    %c0_i32 = arith.constant 0 : i32
    %c0_i32_0 = arith.constant 0 : i32
    %c0_i32_1 = arith.constant 0 : i32
    return %c0_i32, %c0_i32_0 : i32, i32
  }
  func.func @transform_5(%arg0: i32) -> (i32, i32, i32) {
    %c0_i32 = arith.constant 0 : i32
    %c0_i32_0 = arith.constant 0 : i32
    %c0_i32_1 = arith.constant 0 : i32
    return %arg0, %c0_i32, %c0_i32_0 : i32, i32, i32
  }
  func.func @transform_6(%arg0: i32) -> (i32, i32, i32) {
    %c0_i32 = arith.constant 0 : i32
    %0 = arith.subi %c0_i32, %arg0 : i32
    %c0_i32_0 = arith.constant 0 : i32
    %c0_i32_1 = arith.constant 0 : i32
    %c0_i32_2 = arith.constant 0 : i32
    return %0, %c0_i32_0, %c0_i32_1 : i32, i32, i32
  }
  func.func @transform_7(%arg0: i32) -> (i32, i32, i32) {
    %c0_i32 = arith.constant 0 : i32
    %c0_i32_0 = arith.constant 0 : i32
    %c0_i32_1 = arith.constant 0 : i32
    %c0_i32_2 = arith.constant 0 : i32
    return %c0_i32, %c0_i32_0, %c0_i32_1 : i32, i32, i32
  }
  func.func @transform_8(%arg0: i32) -> (i32, i32, i32) {
    %c0_i32 = arith.constant 0 : i32
    %c0_i32_0 = arith.constant 0 : i32
    %c0_i32_1 = arith.constant 0 : i32
    %c0_i32_2 = arith.constant 0 : i32
    return %c0_i32, %c0_i32_0, %c0_i32_1 : i32, i32, i32
  }
}

</mosaic_0001>

<llo_original>
// kernel: encoder_forward.3
$region0: #{encoder_forward.3}
  #allocation0 [shape = 'u32[]', space=smem, size = 0x4, offset = 0x4, fixed_abs, tag = 'smem constant byte address 0x4 - core index']
  #allocation1 [shape = 'u32[144,128]{1,0:T(1,128)}', space=vmem, size = 0x12000, scoped, tag = 'internal scratch']
  #allocation2 [shape = 'f32[8,128]{1,0:T(8,128)}', space=vmem, size = 0x1000, scoped, tag = 'scratch operand']
  #allocation3 [shape = 'f32[8,128]{1,0:T(8,128)}', space=vmem, size = 0x1000, scoped, tag = 'scratch operand']
  #allocation4 [shape = 'f32[8,128]{1,0:T(8,128)}', space=vmem, size = 0x1000, scoped, tag = 'scratch operand']
  #allocation5 [shape = 'f32[8,128]{1,0:T(8,128)}', space=vmem, size = 0x1000, scoped, tag = 'scratch operand']
  %s0 = inlined_call_operand.vmem [shape: s32[8,1], index: 0, kind: input, shape index: {}]
  %s1 = inlined_call_operand.vmem [shape: f32[8,8,512], index: 1, kind: input, shape index: {}]
  %s2 = inlined_call_operand.vmem [shape: f32[8,8,512], index: 2, kind: input, shape index: {}]
  %s3 = inlined_call_operand.vmem [shape: f32[128,512], index: 3, kind: input, shape index: {}]
  %s4 = inlined_call_operand.vmem [shape: f32[128,512], index: 4, kind: input, shape index: {}]
  %s5 = inlined_call_operand.vmem [shape: f32[8,8,128], index: 5, kind: output, shape index: {0}]
  %s6 = inlined_call_operand.vmem [shape: f32[8,8,128], index: 6, kind: output, shape index: {1}]
  %s7 = inlined_call_operand.vmem [shape: f32[2,8,128], index: 7, kind: output, shape index: {2}]
  %s8 = inlined_call_operand.vmem [shape: f32[2,8,128], index: 8, kind: output, shape index: {3}]
  %9 = xla_tuple %s5, %s6, %s7, %s8
  %s10 = sld [smem:[#allocation0]]
  $region58: #{encoder_forward.3} parent=0
    _
  %s12 = ssub.s32 1, %s10
  %s13 = scalar_select 0, %s12, %s10
  // Predicated region
  $region2: #{encoder_forward.3} parent=0 // pred_check
    _
  $region3: #{encoder_forward.3} parent=0 // pred_check_branch
    %15 = sbr.rel (0) target = $region5
  $region4: #{encoder_forward.3} parent=0 // pred_region
    _
  $region5: #{encoder_forward.3} parent=0 // pred_fallthru
    _
  // Predicated region
  $region6: #{encoder_forward.3} parent=0 // pred_check
    _
  $region7: #{encoder_forward.3} parent=0 // pred_check_branch
    %17 = sbr.rel (0) target = $region9
  $region8: #{encoder_forward.3} parent=0 // pred_region
    _
  $region9: #{encoder_forward.3} parent=0 // pred_fallthru
    _
  // Predicated region
  $region10: #{encoder_forward.3} parent=0 // pred_check
    _
  $region11: #{encoder_forward.3} parent=0 // pred_check_branch
    %19 = sbr.rel (0) target = $region13
  $region12: #{encoder_forward.3} parent=0 // pred_region
    %s20 = ssub.s32 0, 0
    %s21 = smul.u32 8, %s20
    %p22 = scmp.lt.s32.totalorder %s21, 7
    %s23 = scalar_select %p22, %s21, 7
    %s24 = smul.addr %s23, 4
    %s25 = smul.addr %s24, 8
    %s26 = scalar_lea.vmem %s2, %s25
    %s27 = ssub.s32 0, 0
    %s28 = smul.u32 8, %s27
  $region13: #{encoder_forward.3} parent=0 // pred_fallthru
    _
  // Predicated region
  $region14: #{encoder_forward.3} parent=0 // pred_check
    _
  $region15: #{encoder_forward.3} parent=0 // pred_check_branch
    %30 = sbr.rel (0) target = $region17
  $region16: #{encoder_forward.3} parent=0 // pred_region
    _
  $region17: #{encoder_forward.3} parent=0 // pred_fallthru
    _
  // Predicated region
  $region18: #{encoder_forward.3} parent=0 // pred_check
    _
  $region19: #{encoder_forward.3} parent=0 // pred_check_branch
    %32 = sbr.rel (0) target = $region21
  $region20: #{encoder_forward.3} parent=0 // pred_region
    _
  $region21: #{encoder_forward.3} parent=0 // pred_fallthru
    _
  %s33 = ssub.s32 0, 0
  %s34 = smul.u32 8, %s33
  %p35 = scmp.lt.s32.totalorder %s34, 7
  %s36 = scalar_select %p35, %s34, 7
  %s37 = smul.addr %s36, 4
  %s38 = smul.addr %s37, 8
  %s39 = scalar_lea.vmem %s2, %s38
  %s40 = ssub.s32 0, 0
  %s41 = smul.u32 8, %s40
  %p42 = scmp.lt.s32.totalorder %s41, 7
  %s43 = scalar_select %p42, %s41, 7
  %s44 = smul.addr %s43, 8
  %s45 = scalar_lea.vmem %s6, %s44
  %s46 = ssub.s32 0, 0
  %s47 = smul.u32 8, %s46
  %p48 = scmp.lt.s32.totalorder %s47, 7
  %s49 = scalar_select %p48, %s47, 7
  %s50 = smul.addr %s49, 4
  %s51 = smul.addr %s50, 8
  %s52 = scalar_lea.vmem %s2, %s51
  %s53 = ssub.s32 0, 0
  %s54 = smul.u32 8, %s53
  %s55 = ssub.s32 0, 0
  %s56 = smul.u32 8, %s55
  %p57 = scmp.lt.s32.totalorder %s56, 7
  %s58 = scalar_select %p57, %s56, 7
  %s59 = smul.addr %s58, 8
  %s60 = scalar_lea.vmem %s6, %s59
  %s61 = ssub.s32 0, 0
  %s62 = smul.u32 8, %s61
  %p63 = scmp.eq.s32.totalorder 0, 0
  // Predicated region
  $region22: #{encoder_forward.3} parent=0 // pred_check
    %p64 = pneg %p63
  $region23: #{encoder_forward.3} parent=0 // pred_check_branch
    %66 = sbr.rel (%p64) target = $region25
  $region24: #{encoder_forward.3} parent=0 // pred_region
    %67 = vst [vmem:[#allocation2] sm:$0xff] 0.0
    %68 = vst [vmem:[#allocation3] sm:$0xff] 0.0
    %69 = vst [vmem:[#allocation4] sm:$0xff] 0.0
    %70 = vst [vmem:[#allocation5] sm:$0xff] 0.0
  $region25: #{encoder_forward.3} parent=0 // pred_fallthru
    _
  %v71 = vld [vmem:[%s0] sm:$0xff]
  %s72 = smul.u32 0, 8
  %s73 = ssub.s32 0, 0
  %s74 = smul.u32 %s73, 8
  %v75 = vld [vmem:[%s3] sm:$0xff]
  %v76 = vld [vmem:[%s3 + $0x8] sm:$0xff]
  %v77 = vld [vmem:[%s3 + $0x10] sm:$0xff]
  %v78 = vld [vmem:[%s3 + $0x18] sm:$0xff]
  %v79 = vld [vmem:[%s3 + $0x20] sm:$0xff]
  %v80 = vld [vmem:[%s3 + $0x28] sm:$0xff]
  %v81 = vld [vmem:[%s3 + $0x30] sm:$0xff]
  %v82 = vld [vmem:[%s3 + $0x38] sm:$0xff]
  %v83 = vld [vmem:[%s3 + $0x40] sm:$0xff]
  %v84 = vld [vmem:[%s3 + $0x48] sm:$0xff]
  %v85 = vld [vmem:[%s3 + $0x50] sm:$0xff]
  %v86 = vld [vmem:[%s3 + $0x58] sm:$0xff]
  %v87 = vld [vmem:[%s3 + $0x60] sm:$0xff]
  %v88 = vld [vmem:[%s3 + $0x68] sm:$0xff]
  %v89 = vld [vmem:[%s3 + $0x70] sm:$0xff]
  %v90 = vld [vmem:[%s3 + $0x78] sm:$0xff]
  %v91 = vld [vmem:[%s3 + $0x80] sm:$0xff]
  %v92 = vld [vmem:[%s3 + $0x88] sm:$0xff]
  %v93 = vld [vmem:[%s3 + $0x90] sm:$0xff]
  %v94 = vld [vmem:[%s3 + $0x98] sm:$0xff]
  %v95 = vld [vmem:[%s3 + $0xa0] sm:$0xff]
  %v96 = vld [vmem:[%s3 + $0xa8] sm:$0xff]
  %v97 = vld [vmem:[%s3 + $0xb0] sm:$0xff]
  %v98 = vld [vmem:[%s3 + $0xb8] sm:$0xff]
  %v99 = vld [vmem:[%s3 + $0xc0] sm:$0xff]
  %v100 = vld [vmem:[%s3 + $0xc8] sm:$0xff]
  %v101 = vld [vmem:[%s3 + $0xd0] sm:$0xff]
  %v102 = vld [vmem:[%s3 + $0xd8] sm:$0xff]
  %v103 = vld [vmem:[%s3 + $0xe0] sm:$0xff]
  %v104 = vld [vmem:[%s3 + $0xe8] sm:$0xff]
  %v105 = vld [vmem:[%s3 + $0xf0] sm:$0xff]
  %v106 = vld [vmem:[%s3 + $0xf8] sm:$0xff]
  %v107 = vld [vmem:[%s3 + $0x100] sm:$0xff]
  %v108 = vld [vmem:[%s3 + $0x108] sm:$0xff]
  %v109 = vld [vmem:[%s3 + $0x110] sm:$0xff]
  %v110 = vld [vmem:[%s3 + $0x118] sm:$0xff]
  %v111 = vld [vmem:[%s3 + $0x120] sm:$0xff]
  %v112 = vld [vmem:[%s3 + $0x128] sm:$0xff]
  %v113 = vld [vmem:[%s3 + $0x130] sm:$0xff]
  %v114 = vld [vmem:[%s3 + $0x138] sm:$0xff]
  %v115 = vld [vmem:[%s3 + $0x140] sm:$0xff]
  %v116 = vld [vmem:[%s3 + $0x148] sm:$0xff]
  %v117 = vld [vmem:[%s3 + $0x150] sm:$0xff]
  %v118 = vld [vmem:[%s3 + $0x158] sm:$0xff]
  %v119 = vld [vmem:[%s3 + $0x160] sm:$0xff]
  %v120 = vld [vmem:[%s3 + $0x168] sm:$0xff]
  %v121 = vld [vmem:[%s3 + $0x170] sm:$0xff]
  %v122 = vld [vmem:[%s3 + $0x178] sm:$0xff]
  %v123 = vld [vmem:[%s3 + $0x180] sm:$0xff]
  %v124 = vld [vmem:[%s3 + $0x188] sm:$0xff]
  %v125 = vld [vmem:[%s3 + $0x190] sm:$0xff]
  %v126 = vld [vmem:[%s3 + $0x198] sm:$0xff]
  %v127 = vld [vmem:[%s3 + $0x1a0] sm:$0xff]
  %v128 = vld [vmem:[%s3 + $0x1a8] sm:$0xff]
  %v129 = vld [vmem:[%s3 + $0x1b0] sm:$0xff]
  %v130 = vld [vmem:[%s3 + $0x1b8] sm:$0xff]
  %v131 = vld [vmem:[%s3 + $0x1c0] sm:$0xff]
  %v132 = vld [vmem:[%s3 + $0x1c8] sm:$0xff]
  %v133 = vld [vmem:[%s3 + $0x1d0] sm:$0xff]
  %v134 = vld [vmem:[%s3 + $0x1d8] sm:$0xff]
  %v135 = vld [vmem:[%s3 + $0x1e0] sm:$0xff]
  %v136 = vld [vmem:[%s3 + $0x1e8] sm:$0xff]
  %v137 = vld [vmem:[%s3 + $0x1f0] sm:$0xff]
  %v138 = vld [vmem:[%s3 + $0x1f8] sm:$0xff]
  %v139 = vld [vmem:[%s4] sm:$0xff]
  %v140 = vld [vmem:[%s4 + $0x8] sm:$0xff]
  %v141 = vld [vmem:[%s4 + $0x10] sm:$0xff]
  %v142 = vld [vmem:[%s4 + $0x18] sm:$0xff]
  %v143 = vld [vmem:[%s4 + $0x20] sm:$0xff]
  %v144 = vld [vmem:[%s4 + $0x28] sm:$0xff]
  %v145 = vld [vmem:[%s4 + $0x30] sm:$0xff]
  %v146 = vld [vmem:[%s4 + $0x38] sm:$0xff]
  %v147 = vld [vmem:[%s4 + $0x40] sm:$0xff]
  %v148 = vld [vmem:[%s4 + $0x48] sm:$0xff]
  %v149 = vld [vmem:[%s4 + $0x50] sm:$0xff]
  %v150 = vld [vmem:[%s4 + $0x58] sm:$0xff]
  %v151 = vld [vmem:[%s4 + $0x60] sm:$0xff]
  %v152 = vld [vmem:[%s4 + $0x68] sm:$0xff]
  %v153 = vld [vmem:[%s4 + $0x70] sm:$0xff]
  %v154 = vld [vmem:[%s4 + $0x78] sm:$0xff]
  %v155 = vld [vmem:[%s4 + $0x80] sm:$0xff]
  %v156 = vld [vmem:[%s4 + $0x88] sm:$0xff]
  %v157 = vld [vmem:[%s4 + $0x90] sm:$0xff]
  %v158 = vld [vmem:[%s4 + $0x98] sm:$0xff]
  %v159 = vld [vmem:[%s4 + $0xa0] sm:$0xff]
  %v160 = vld [vmem:[%s4 + $0xa8] sm:$0xff]
  %v161 = vld [vmem:[%s4 + $0xb0] sm:$0xff]
  %v162 = vld [vmem:[%s4 + $0xb8] sm:$0xff]
  %v163 = vld [vmem:[%s4 + $0xc0] sm:$0xff]
  %v164 = vld [vmem:[%s4 + $0xc8] sm:$0xff]
  %v165 = vld [vmem:[%s4 + $0xd0] sm:$0xff]
  %v166 = vld [vmem:[%s4 + $0xd8] sm:$0xff]
  %v167 = vld [vmem:[%s4 + $0xe0] sm:$0xff]
  %v168 = vld [vmem:[%s4 + $0xe8] sm:$0xff]
  %v169 = vld [vmem:[%s4 + $0xf0] sm:$0xff]
  %v170 = vld [vmem:[%s4 + $0xf8] sm:$0xff]
  %v171 = vld [vmem:[%s4 + $0x100] sm:$0xff]
  %v172 = vld [vmem:[%s4 + $0x108] sm:$0xff]
  %v173 = vld [vmem:[%s4 + $0x110] sm:$0xff]
  %v174 = vld [vmem:[%s4 + $0x118] sm:$0xff]
  %v175 = vld [vmem:[%s4 + $0x120] sm:$0xff]
  %v176 = vld [vmem:[%s4 + $0x128] sm:$0xff]
  %v177 = vld [vmem:[%s4 + $0x130] sm:$0xff]
  %v178 = vld [vmem:[%s4 + $0x138] sm:$0xff]
  %v179 = vld [vmem:[%s4 + $0x140] sm:$0xff]
  %v180 = vld [vmem:[%s4 + $0x148] sm:$0xff]
  %v181 = vld [vmem:[%s4 + $0x150] sm:$0xff]
  %v182 = vld [vmem:[%s4 + $0x158] sm:$0xff]
  %v183 = vld [vmem:[%s4 + $0x160] sm:$0xff]
  %v184 = vld [vmem:[%s4 + $0x168] sm:$0xff]
  %v185 = vld [vmem:[%s4 + $0x170] sm:$0xff]
  %v186 = vld [vmem:[%s4 + $0x178] sm:$0xff]
  %v187 = vld [vmem:[%s4 + $0x180] sm:$0xff]
  %v188 = vld [vmem:[%s4 + $0x188] sm:$0xff]
  %v189 = vld [vmem:[%s4 + $0x190] sm:$0xff]
  %v190 = vld [vmem:[%s4 + $0x198] sm:$0xff]
  %v191 = vld [vmem:[%s4 + $0x1a0] sm:$0xff]
  %v192 = vld [vmem:[%s4 + $0x1a8] sm:$0xff]
  %v193 = vld [vmem:[%s4 + $0x1b0] sm:$0xff]
  %v194 = vld [vmem:[%s4 + $0x1b8] sm:$0xff]
  %v195 = vld [vmem:[%s4 + $0x1c0] sm:$0xff]
  %v196 = vld [vmem:[%s4 + $0x1c8] sm:$0xff]
  %v197 = vld [vmem:[%s4 + $0x1d0] sm:$0xff]
  %v198 = vld [vmem:[%s4 + $0x1d8] sm:$0xff]
  %v199 = vld [vmem:[%s4 + $0x1e0] sm:$0xff]
  %v200 = vld [vmem:[%s4 + $0x1e8] sm:$0xff]
  %v201 = vld [vmem:[%s4 + $0x1f0] sm:$0xff]
  %v202 = vld [vmem:[%s4 + $0x1f8] sm:$0xff]
  %v203 = vld [vmem:[%s1] sm:$0xff]
  %v204 = vld [vmem:[%s1 + $0x8] sm:$0xff]
  %v205 = vld [vmem:[%s1 + $0x10] sm:$0xff]
  %v206 = vld [vmem:[%s1 + $0x18] sm:$0xff]
  %v207 = vld [vmem:[#allocation2] sm:$0xff]
  %v208 = vld [vmem:[#allocation3] sm:$0xff]
  %209 = vmatprep.subr.mxu0 %v136
  %210 = vmatpush1.msra.mxu0 %v135
  %211 = vmatprep.subr.mxu0 %v132
  %212 = vmatpush1.msra.mxu0 %v131
  %213 = vmatprep.subr.mxu0 %v128
  %214 = vmatpush1.msra.mxu0 %v127
  %215 = vmatprep.subr.mxu0 %v124
  %216 = vmatpush1.msra.mxu0 %v123
  %217 = vmatprep.subr.mxu0 %v120
  %218 = vmatpush1.msra.mxu0 %v119
  %219 = vmatprep.subr.mxu0 %v116
  %220 = vmatpush1.msra.mxu0 %v115
  %221 = vmatprep.subr.mxu0 %v112
  %222 = vmatpush1.msra.mxu0 %v111
  %223 = vmatprep.subr.mxu0 %v108
  %224 = vmatpush1.msra.mxu0 %v107
  %225 = vmatprep.subr.mxu0 %v104
  %226 = vmatpush1.msra.mxu0 %v103
  %227 = vmatprep.subr.mxu0 %v100
  %228 = vmatpush1.msra.mxu0 %v99
  %229 = vmatprep.subr.mxu0 %v96
  %230 = vmatpush1.msra.mxu0 %v95
  %231 = vmatprep.subr.mxu0 %v92
  %232 = vmatpush1.msra.mxu0 %v91
  %233 = vmatprep.subr.mxu0 %v88
  %234 = vmatpush1.msra.mxu0 %v87
  %235 = vmatprep.subr.mxu0 %v84
  %236 = vmatpush1.msra.mxu0 %v83
  %237 = vmatprep.subr.mxu0 %v80
  %238 = vmatpush1.msra.mxu0 %v79
  %239 = vmatprep.subr.mxu0 %v76
  %240 = vmatpush1.msra.mxu0 %v75
  %241 = vmatprep.subr.mxu0 0.0
  %242 = vmatpush2.msra.mxu0 0.0
  %243 = vmatprep.subr.mxu0 0.0
  %244 = vmatpush2.msra.mxu0 0.0
  %245 = vmatprep.subr.mxu0 0.0
  %246 = vmatpush2.msra.mxu0 0.0
  %247 = vmatprep.subr.mxu0 0.0
  %248 = vmatpush2.msra.mxu0 0.0
  %249 = vmatprep.subr.mxu0 0.0
  %250 = vmatpush2.msra.mxu0 0.0
  %251 = vmatprep.subr.mxu0 0.0
  %252 = vmatpush2.msra.mxu0 0.0
  %253 = vmatprep.subr.mxu0 0.0
  %254 = vmatpush2.msra.mxu0 0.0
  %255 = vmatprep.subr.mxu0 0.0
  %256 = vmatpush2.msra.mxu0 0.0
  %257 = vmatprep.subr.mxu0 0.0
  %258 = vmatpush2.msra.mxu0 0.0
  %259 = vmatprep.subr.mxu0 0.0
  %260 = vmatpush2.msra.mxu0 0.0
  %261 = vmatprep.subr.mxu0 0.0
  %262 = vmatpush2.msra.mxu0 0.0
  %263 = vmatprep.subr.mxu0 0.0
  %264 = vmatpush2.msra.mxu0 0.0
  %265 = vmatprep.subr.mxu0 0.0
  %266 = vmatpush2.msra.mxu0 0.0
  %267 = vmatprep.subr.mxu0 0.0
  %268 = vmatpush2.msra.mxu0 0.0
  %269 = vmatprep.subr.mxu0 0.0
  %270 = vmatpush2.msra.mxu0 0.0
  %271 = vmatprep.subr.mxu0 0.0
  %272 = vmatpush2.msra.mxu0 0.0
  %273 = vmatprep.mubr.f32.mxu0 0.0
  %274 = vmatmul.mubr.f32.gmra.mxu0 %v207
  %v275 = vpop.f32.mrf.mxu0
  %v276 = vadd.f32 0.0, %v275
  %v277 = vpop.f32.mrf.mxu0
  %v278 = vadd.f32 0.0, %v277
  %279 = vdwg.mxu0
  %280 = vmatprep.subr.mxu0 %v138
  %281 = vmatpush1.msra.mxu0 %v137
  %282 = vmatprep.subr.mxu0 %v134
  %283 = vmatpush1.msra.mxu0 %v133
  %284 = vmatprep.subr.mxu0 %v130
  %285 = vmatpush1.msra.mxu0 %v129
  %286 = vmatprep.subr.mxu0 %v126
  %287 = vmatpush1.msra.mxu0 %v125
  %288 = vmatprep.subr.mxu0 %v122
  %289 = vmatpush1.msra.mxu0 %v121
  %290 = vmatprep.subr.mxu0 %v118
  %291 = vmatpush1.msra.mxu0 %v117
  %292 = vmatprep.subr.mxu0 %v114
  %293 = vmatpush1.msra.mxu0 %v113
  %294 = vmatprep.subr.mxu0 %v110
  %295 = vmatpush1.msra.mxu0 %v109
  %296 = vmatprep.subr.mxu0 %v106
  %297 = vmatpush1.msra.mxu0 %v105
  %298 = vmatprep.subr.mxu0 %v102
  %299 = vmatpush1.msra.mxu0 %v101
  %300 = vmatprep.subr.mxu0 %v98
  %301 = vmatpush1.msra.mxu0 %v97
  %302 = vmatprep.subr.mxu0 %v94
  %303 = vmatpush1.msra.mxu0 %v93
  %304 = vmatprep.subr.mxu0 %v90
  %305 = vmatpush1.msra.mxu0 %v89
  %306 = vmatprep.subr.mxu0 %v86
  %307 = vmatpush1.msra.mxu0 %v85
  %308 = vmatprep.subr.mxu0 %v82
  %309 = vmatpush1.msra.mxu0 %v81
  %310 = vmatprep.subr.mxu0 %v78
  %311 = vmatpush1.msra.mxu0 %v77
  %312 = vmatprep.subr.mxu0 0.0
  %313 = vmatpush2.msra.mxu0 0.0
  %314 = vmatprep.subr.mxu0 0.0
  %315 = vmatpush2.msra.mxu0 0.0
  %316 = vmatprep.subr.mxu0 0.0
  %317 = vmatpush2.msra.mxu0 0.0
  %318 = vmatprep.subr.mxu0 0.0
  %319 = vmatpush2.msra.mxu0 0.0
  %320 = vmatprep.subr.mxu0 0.0
  %321 = vmatpush2.msra.mxu0 0.0
  %322 = vmatprep.subr.mxu0 0.0
  %323 = vmatpush2.msra.mxu0 0.0
  %324 = vmatprep.subr.mxu0 0.0
  %325 = vmatpush2.msra.mxu0 0.0
  %326 = vmatprep.subr.mxu0 0.0
  %327 = vmatpush2.msra.mxu0 0.0
  %328 = vmatprep.subr.mxu0 0.0
  %329 = vmatpush2.msra.mxu0 0.0
  %330 = vmatprep.subr.mxu0 0.0
  %331 = vmatpush2.msra.mxu0 0.0
  %332 = vmatprep.subr.mxu0 0.0
  %333 = vmatpush2.msra.mxu0 0.0
  %334 = vmatprep.subr.mxu0 0.0
  %335 = vmatpush2.msra.mxu0 0.0
  %336 = vmatprep.subr.mxu0 0.0
  %337 = vmatpush2.msra.mxu0 0.0
  %338 = vmatprep.subr.mxu0 0.0
  %339 = vmatpush2.msra.mxu0 0.0
  %340 = vmatprep.subr.mxu0 0.0
  %341 = vmatpush2.msra.mxu0 0.0
  %342 = vmatprep.subr.mxu0 0.0
  %343 = vmatpush2.msra.mxu0 0.0
  %344 = vmatprep.mubr.f32.mxu0 0.0
  %345 = vmatmul.mubr.f32.gmra.mxu0 %v207
  %v346 = vpop.f32.mrf.mxu0
  %v347 = vadd.f32 0.0, %v346
  %v348 = vpop.f32.mrf.mxu0
  %v349 = vadd.f32 0.0, %v348
  %350 = vdwg.mxu0
  %v351 = vadd.f32 %v203, %v276
  %v352 = vadd.f32 %v204, %v278
  %v353 = vadd.f32 %v205, %v347
  %v354 = vadd.f32 %v206, %v349
  %v355 = vxor.u32 %v351, 2147483648
  %v356 = vmul.f32 %v355, 1.442695
  %v357 = vpow.pop %v356
  %v358 = vadd.f32 %v357, 1.0
  %v359 = vrcp.pop %v358
  %v360 = vmul.f32 1.0, %v359
  %v361 = vxor.u32 %v352, 2147483648
  %v362 = vmul.f32 %v361, 1.442695
  %v363 = vpow.pop %v362
  %v364 = vadd.f32 %v363, 1.0
  %v365 = vrcp.pop %v364
  %v366 = vmul.f32 1.0, %v365
  %v367 = vtanh.pop %v353
  %v368 = vxor.u32 %v354, 2147483648
  %v369 = vmul.f32 %v368, 1.442695
  %v370 = vpow.pop %v369
  %v371 = vadd.f32 %v370, 1.0
  %v372 = vrcp.pop %v371
  %v373 = vmul.f32 1.0, %v372
  %v374 = vmul.f32 %v366, %v208
  %v375 = vmul.f32 %v360, %v367
  %v376 = vadd.f32 %v374, %v375
  %v377 = vtanh.pop %v376
  %v378 = vmul.f32 %v373, %v377
  %v379 = vstv %s72
  %vm380 = vcmp.gt.s32.totalorder %v71, %v379
  %v381 = vsel %vm380, 1, 0
  %382 = vset.pattern.permute.xlu0 0
  %383 = vperm.xlu0 %382, %v381
  %v384 = vpop.permute.xlu0 %383
  %vm385 = vcmp.eq.s32.totalorder %v384, 1
  %v386 = vsel %vm385, %v378, %v207
  %387 = vst [vmem:[#allocation2] sm:$0xff] %v386
  %v388 = vld [vmem:[#allocation3] sm:$0xff]
  %v389 = vsel %vm385, %v376, %v388
  %390 = vst [vmem:[#allocation3] sm:$0xff] %v389
  %v391 = vsel %vm385, %v378, 0.0
  %392 = vst [vmem:[%s5] sm:$0xff] %v391
  %s393 = scalar_lea.vmem %s52, 224
  %v394 = vld [vmem:[%s393] sm:$0xff]
  %v395 = vld [vmem:[%s393 + $0x8] sm:$0xff]
  %v396 = vld [vmem:[%s393 + $0x10] sm:$0xff]
  %v397 = vld [vmem:[%s393 + $0x18] sm:$0xff]
  %v398 = vld [vmem:[#allocation4] sm:$0xff]
  %v399 = vld [vmem:[#allocation5] sm:$0xff]
  %400 = vmatprep.subr.mxu0 %v200
  %401 = vmatpush1.msra.mxu0 %v199
  %402 = vmatprep.subr.mxu0 %v196
  %403 = vmatpush1.msra.mxu0 %v195
  %404 = vmatprep.subr.mxu0 %v192
  %405 = vmatpush1.msra.mxu0 %v191
  %406 = vmatprep.subr.mxu0 %v188
  %407 = vmatpush1.msra.mxu0 %v187
  %408 = vmatprep.subr.mxu0 %v184
  %409 = vmatpush1.msra.mxu0 %v183
  %410 = vmatprep.subr.mxu0 %v180
  %411 = vmatpush1.msra.mxu0 %v179
  %412 = vmatprep.subr.mxu0 %v176
  %413 = vmatpush1.msra.mxu0 %v175
  %414 = vmatprep.subr.mxu0 %v172
  %415 = vmatpush1.msra.mxu0 %v171
  %416 = vmatprep.subr.mxu0 %v168
  %417 = vmatpush1.msra.mxu0 %v167
  %418 = vmatprep.subr.mxu0 %v164
  %419 = vmatpush1.msra.mxu0 %v163
  %420 = vmatprep.subr.mxu0 %v160
  %421 = vmatpush1.msra.mxu0 %v159
  %422 = vmatprep.subr.mxu0 %v156
  %423 = vmatpush1.msra.mxu0 %v155
  %424 = vmatprep.subr.mxu0 %v152
  %425 = vmatpush1.msra.mxu0 %v151
  %426 = vmatprep.subr.mxu0 %v148
  %427 = vmatpush1.msra.mxu0 %v147
  %428 = vmatprep.subr.mxu0 %v144
  %429 = vmatpush1.msra.mxu0 %v143
  %430 = vmatprep.subr.mxu0 %v140
  %431 = vmatpush1.msra.mxu0 %v139
  %432 = vmatprep.subr.mxu0 0.0
  %433 = vmatpush2.msra.mxu0 0.0
  %434 = vmatprep.subr.mxu0 0.0
  %435 = vmatpush2.msra.mxu0 0.0
  %436 = vmatprep.subr.mxu0 0.0
  %437 = vmatpush2.msra.mxu0 0.0
  %438 = vmatprep.subr.mxu0 0.0
  %439 = vmatpush2.msra.mxu0 0.0
  %440 = vmatprep.subr.mxu0 0.0
  %441 = vmatpush2.msra.mxu0 0.0
  %442 = vmatprep.subr.mxu0 0.0
  %443 = vmatpush2.msra.mxu0 0.0
  %444 = vmatprep.subr.mxu0 0.0
  %445 = vmatpush2.msra.mxu0 0.0
  %446 = vmatprep.subr.mxu0 0.0
  %447 = vmatpush2.msra.mxu0 0.0
  %448 = vmatprep.subr.mxu0 0.0
  %449 = vmatpush2.msra.mxu0 0.0
  %450 = vmatprep.subr.mxu0 0.0
  %451 = vmatpush2.msra.mxu0 0.0
  %452 = vmatprep.subr.mxu0 0.0
  %453 = vmatpush2.msra.mxu0 0.0
  %454 = vmatprep.subr.mxu0 0.0
  %455 = vmatpush2.msra.mxu0 0.0
  %456 = vmatprep.subr.mxu0 0.0
  %457 = vmatpush2.msra.mxu0 0.0
  %458 = vmatprep.subr.mxu0 0.0
  %459 = vmatpush2.msra.mxu0 0.0
  %460 = vmatprep.subr.mxu0 0.0
  %461 = vmatpush2.msra.mxu0 0.0
  %462 = vmatprep.subr.mxu0 0.0
  %463 = vmatpush2.msra.mxu0 0.0
  %464 = vmatprep.mubr.f32.mxu0 0.0
  %465 = vmatmul.mubr.f32.gmra.mxu0 %v398
  %v466 = vpop.f32.mrf.mxu0
  %v467 = vadd.f32 0.0, %v466
  %v468 = vpop.f32.mrf.mxu0
  %v469 = vadd.f32 0.0, %v468
  %470 = vdwg.mxu0
  %471 = vmatprep.subr.mxu0 %v202
  %472 = vmatpush1.msra.mxu0 %v201
  %473 = vmatprep.subr.mxu0 %v198
  %474 = vmatpush1.msra.mxu0 %v197
  %475 = vmatprep.subr.mxu0 %v194
  %476 = vmatpush1.msra.mxu0 %v193
  %477 = vmatprep.subr.mxu0 %v190
  %478 = vmatpush1.msra.mxu0 %v189
  %479 = vmatprep.subr.mxu0 %v186
  %480 = vmatpush1.msra.mxu0 %v185
  %481 = vmatprep.subr.mxu0 %v182
  %482 = vmatpush1.msra.mxu0 %v181
  %483 = vmatprep.subr.mxu0 %v178
  %484 = vmatpush1.msra.mxu0 %v177
  %485 = vmatprep.subr.mxu0 %v174
  %486 = vmatpush1.msra.mxu0 %v173
  %487 = vmatprep.subr.mxu0 %v170
  %488 = vmatpush1.msra.mxu0 %v169
  %489 = vmatprep.subr.mxu0 %v166
  %490 = vmatpush1.msra.mxu0 %v165
  %491 = vmatprep.subr.mxu0 %v162
  %492 = vmatpush1.msra.mxu0 %v161
  %493 = vmatprep.subr.mxu0 %v158
  %494 = vmatpush1.msra.mxu0 %v157
  %495 = vmatprep.subr.mxu0 %v154
  %496 = vmatpush1.msra.mxu0 %v153
  %497 = vmatprep.subr.mxu0 %v150
  %498 = vmatpush1.msra.mxu0 %v149
  %499 = vmatprep.subr.mxu0 %v146
  %500 = vmatpush1.msra.mxu0 %v145
  %501 = vmatprep.subr.mxu0 %v142
  %502 = vmatpush1.msra.mxu0 %v141
  %503 = vmatprep.subr.mxu0 0.0
  %504 = vmatpush2.msra.mxu0 0.0
  %505 = vmatprep.subr.mxu0 0.0
  %506 = vmatpush2.msra.mxu0 0.0
  %507 = vmatprep.subr.mxu0 0.0
  %508 = vmatpush2.msra.mxu0 0.0
  %509 = vmatprep.subr.mxu0 0.0
  %510 = vmatpush2.msra.mxu0 0.0
  %511 = vmatprep.subr.mxu0 0.0
  %512 = vmatpush2.msra.mxu0 0.0
  %513 = vmatprep.subr.mxu0 0.0
  %514 = vmatpush2.msra.mxu0 0.0
  %515 = vmatprep.subr.mxu0 0.0
  %516 = vmatpush2.msra.mxu0 0.0
  %517 = vmatprep.subr.mxu0 0.0
  %518 = vmatpush2.msra.mxu0 0.0
  %519 = vmatprep.subr.mxu0 0.0
  %520 = vmatpush2.msra.mxu0 0.0
  %521 = vmatprep.subr.mxu0 0.0
  %522 = vmatpush2.msra.mxu0 0.0
  %523 = vmatprep.subr.mxu0 0.0
  %524 = vmatpush2.msra.mxu0 0.0
  %525 = vmatprep.subr.mxu0 0.0
  %526 = vmatpush2.msra.mxu0 0.0
  %527 = vmatprep.subr.mxu0 0.0
  %528 = vmatpush2.msra.mxu0 0.0
  %529 = vmatprep.subr.mxu0 0.0
  %530 = vmatpush2.msra.mxu0 0.0
  %531 = vmatprep.subr.mxu0 0.0
  %532 = vmatpush2.msra.mxu0 0.0
  %533 = vmatprep.subr.mxu0 0.0
  %534 = vmatpush2.msra.mxu0 0.0
  %535 = vmatprep.mubr.f32.mxu0 0.0
  %536 = vmatmul.mubr.f32.gmra.mxu0 %v398
  %v537 = vpop.f32.mrf.mxu0
  %v538 = vadd.f32 0.0, %v537
  %v539 = vpop.f32.mrf.mxu0
  %v540 = vadd.f32 0.0, %v539
  %541 = vdwg.mxu0
  %v542 = vadd.f32 %v394, %v467
  %v543 = vadd.f32 %v395, %v469
  %v544 = vadd.f32 %v396, %v538
  %v545 = vadd.f32 %v397, %v540
  %v546 = vxor.u32 %v542, 2147483648
  %v547 = vmul.f32 %v546, 1.442695
  %v548 = vpow.pop %v547
  %v549 = vadd.f32 %v548, 1.0
  %v550 = vrcp.pop %v549
  %v551 = vmul.f32 1.0, %v550
  %v552 = vxor.u32 %v543, 2147483648
  %v553 = vmul.f32 %v552, 1.442695
  %v554 = vpow.pop %v553
  %v555 = vadd.f32 %v554, 1.0
  %v556 = vrcp.pop %v555
  %v557 = vmul.f32 1.0, %v556
  %v558 = vtanh.pop %v544
  %v559 = vxor.u32 %v545, 2147483648
  %v560 = vmul.f32 %v559, 1.442695
  %v561 = vpow.pop %v560
  %v562 = vadd.f32 %v561, 1.0
  %v563 = vrcp.pop %v562
  %v564 = vmul.f32 1.0, %v563
  %v565 = vmul.f32 %v557, %v399
  %v566 = vmul.f32 %v551, %v558
  %v567 = vadd.f32 %v565, %v566
  %v568 = vtanh.pop %v567
  %v569 = vmul.f32 %v564, %v568
  %s570 = sadd.s32 %s74, 7
  %v571 = vstv %s570
  %vm572 = vcmp.gt.s32.totalorder %v71, %v571
  %v573 = vsel %vm572, 1, 0
  %574 = vset.pattern.permute.xlu0 0
  %575 = vperm.xlu0 %574, %v573
  %v576 = vpop.permute.xlu0 %575
  %vm577 = vcmp.eq.s32.totalorder %v576, 1
  %v578 = vsel %vm577, %v569, %v398
  %579 = vst [vmem:[#allocation4] sm:$0xff] %v578
  %v580 = vld [vmem:[#allocation5] sm:$0xff]
  %v581 = vsel %vm577, %v567, %v580
  %582 = vst [vmem:[#allocation5] sm:$0xff] %v581
  %v583 = vsel %vm577, %v569, 0.0
  %s584 = scalar_lea.vmem %s60, 56
  %585 = vst [vmem:[%s584] sm:$0xff] %v583
  %s586 = scalar_lea.vmem %s1, 32
  %v587 = vld [vmem:[%s586] sm:$0xff]
  %v588 = vld [vmem:[%s586 + $0x8] sm:$0xff]
  %v589 = vld [vmem:[%s586 + $0x10] sm:$0xff]
  %v590 = vld [vmem:[%s586 + $0x18] sm:$0xff]
  %v591 = vld [vmem:[#allocation2] sm:$0xff]
  %v592 = vld [vmem:[#allocation3] sm:$0xff]
  %593 = vmatprep.subr.mxu0 %v136
  %594 = vmatpush1.msra.mxu0 %v135
  %595 = vmatprep.subr.mxu0 %v132
  %596 = vmatpush1.msra.mxu0 %v131
  %597 = vmatprep.subr.mxu0 %v128
  %598 = vmatpush1.msra.mxu0 %v127
  %599 = vmatprep.subr.mxu0 %v124
  %600 = vmatpush1.msra.mxu0 %v123
  %601 = vmatprep.subr.mxu0 %v120
  %602 = vmatpush1.msra.mxu0 %v119
  %603 = vmatprep.subr.mxu0 %v116
  %604 = vmatpush1.msra.mxu0 %v115
  %605 = vmatprep.subr.mxu0 %v112
  %606 = vmatpush1.msra.mxu0 %v111
  %607 = vmatprep.subr.mxu0 %v108
  %608 = vmatpush1.msra.mxu0 %v107
  %609 = vmatprep.subr.mxu0 %v104
  %610 = vmatpush1.msra.mxu0 %v103
  %611 = vmatprep.subr.mxu0 %v100
  %612 = vmatpush1.msra.mxu0 %v99
  %613 = vmatprep.subr.mxu0 %v96
  %614 = vmatpush1.msra.mxu0 %v95
  %615 = vmatprep.subr.mxu0 %v92
  %616 = vmatpush1.msra.mxu0 %v91
  %617 = vmatprep.subr.mxu0 %v88
  %618 = vmatpush1.msra.mxu0 %v87
  %619 = vmatprep.subr.mxu0 %v84
  %620 = vmatpush1.msra.mxu0 %v83
  %621 = vmatprep.subr.mxu0 %v80
  %622 = vmatpush1.msra.mxu0 %v79
  %623 = vmatprep.subr.mxu0 %v76
  %624 = vmatpush1.msra.mxu0 %v75
  %625 = vmatprep.subr.mxu0 0.0
  %626 = vmatpush2.msra.mxu0 0.0
  %627 = vmatprep.subr.mxu0 0.0
  %628 = vmatpush2.msra.mxu0 0.0
  %629 = vmatprep.subr.mxu0 0.0
  %630 = vmatpush2.msra.mxu0 0.0
  %631 = vmatprep.subr.mxu0 0.0
  %632 = vmatpush2.msra.mxu0 0.0
  %633 = vmatprep.subr.mxu0 0.0
  %634 = vmatpush2.msra.mxu0 0.0
  %635 = vmatprep.subr.mxu0 0.0
  %636 = vmatpush2.msra.mxu0 0.0
  %637 = vmatprep.subr.mxu0 0.0
  %638 = vmatpush2.msra.mxu0 0.0
  %639 = vmatprep.subr.mxu0 0.0
  %640 = vmatpush2.msra.mxu0 0.0
  %641 = vmatprep.subr.mxu0 0.0
  %642 = vmatpush2.msra.mxu0 0.0
  %643 = vmatprep.subr.mxu0 0.0
  %644 = vmatpush2.msra.mxu0 0.0
  %645 = vmatprep.subr.mxu0 0.0
  %646 = vmatpush2.msra.mxu0 0.0
  %647 = vmatprep.subr.mxu0 0.0
  %648 = vmatpush2.msra.mxu0 0.0
  %649 = vmatprep.subr.mxu0 0.0
  %650 = vmatpush2.msra.mxu0 0.0
  %651 = vmatprep.subr.mxu0 0.0
  %652 = vmatpush2.msra.mxu0 0.0
  %653 = vmatprep.subr.mxu0 0.0
  %654 = vmatpush2.msra.mxu0 0.0
  %655 = vmatprep.subr.mxu0 0.0
  %656 = vmatpush2.msra.mxu0 0.0
  %657 = vmatprep.mubr.f32.mxu0 0.0
  %658 = vmatmul.mubr.f32.gmra.mxu0 %v591
  %v659 = vpop.f32.mrf.mxu0
  %v660 = vadd.f32 0.0, %v659
  %v661 = vpop.f32.mrf.mxu0
  %v662 = vadd.f32 0.0, %v661
  %663 = vdwg.mxu0
  %664 = vmatprep.subr.mxu0 %v138
  %665 = vmatpush1.msra.mxu0 %v137
  %666 = vmatprep.subr.mxu0 %v134
  %667 = vmatpush1.msra.mxu0 %v133
  %668 = vmatprep.subr.mxu0 %v130
  %669 = vmatpush1.msra.mxu0 %v129
  %670 = vmatprep.subr.mxu0 %v126
  %671 = vmatpush1.msra.mxu0 %v125
  %672 = vmatprep.subr.mxu0 %v122
  %673 = vmatpush1.msra.mxu0 %v121
  %674 = vmatprep.subr.mxu0 %v118
  %675 = vmatpush1.msra.mxu0 %v117
  %676 = vmatprep.subr.mxu0 %v114
  %677 = vmatpush1.msra.mxu0 %v113
  %678 = vmatprep.subr.mxu0 %v110
  %679 = vmatpush1.msra.mxu0 %v109
  %680 = vmatprep.subr.mxu0 %v106
  %681 = vmatpush1.msra.mxu0 %v105
  %682 = vmatprep.subr.mxu0 %v102
  %683 = vmatpush1.msra.mxu0 %v101
  %684 = vmatprep.subr.mxu0 %v98
  %685 = vmatpush1.msra.mxu0 %v97
  %686 = vmatprep.subr.mxu0 %v94
  %687 = vmatpush1.msra.mxu0 %v93
  %688 = vmatprep.subr.mxu0 %v90
  %689 = vmatpush1.msra.mxu0 %v89
  %690 = vmatprep.subr.mxu0 %v86
  %691 = vmatpush1.msra.mxu0 %v85
  %692 = vmatprep.subr.mxu0 %v82
  %693 = vmatpush1.msra.mxu0 %v81
  %694 = vmatprep.subr.mxu0 %v78
  %695 = vmatpush1.msra.mxu0 %v77
  %696 = vmatprep.subr.mxu0 0.0
  %697 = vmatpush2.msra.mxu0 0.0
  %698 = vmatprep.subr.mxu0 0.0
  %699 = vmatpush2.msra.mxu0 0.0
  %700 = vmatprep.subr.mxu0 0.0
  %701 = vmatpush2.msra.mxu0 0.0
  %702 = vmatprep.subr.mxu0 0.0
  %703 = vmatpush2.msra.mxu0 0.0
  %704 = vmatprep.subr.mxu0 0.0
  %705 = vmatpush2.msra.mxu0 0.0
  %706 = vmatprep.subr.mxu0 0.0
  %707 = vmatpush2.msra.mxu0 0.0
  %708 = vmatprep.subr.mxu0 0.0
  %709 = vmatpush2.msra.mxu0 0.0
  %710 = vmatprep.subr.mxu0 0.0
  %711 = vmatpush2.msra.mxu0 0.0
  %712 = vmatprep.subr.mxu0 0.0
  %713 = vmatpush2.msra.mxu0 0.0
  %714 = vmatprep.subr.mxu0 0.0
  %715 = vmatpush2.msra.mxu0 0.0
  %716 = vmatprep.subr.mxu0 0.0
  %717 = vmatpush2.msra.mxu0 0.0
  %718 = vmatprep.subr.mxu0 0.0
  %719 = vmatpush2.msra.mxu0 0.0
  %720 = vmatprep.subr.mxu0 0.0
  %721 = vmatpush2.msra.mxu0 0.0
  %722 = vmatprep.subr.mxu0 0.0
  %723 = vmatpush2.msra.mxu0 0.0
  %724 = vmatprep.subr.mxu0 0.0
  %725 = vmatpush2.msra.mxu0 0.0
  %726 = vmatprep.subr.mxu0 0.0
  %727 = vmatpush2.msra.mxu0 0.0
  %728 = vmatprep.mubr.f32.mxu0 0.0
  %729 = vmatmul.mubr.f32.gmra.mxu0 %v591
  %v730 = vpop.f32.mrf.mxu0
  %v731 = vadd.f32 0.0, %v730
  %v732 = vpop.f32.mrf.mxu0
  %v733 = vadd.f32 0.0, %v732
  %734 = vdwg.mxu0
  %v735 = vadd.f32 %v587, %v660
  %v736 = vadd.f32 %v588, %v662
  %v737 = vadd.f32 %v589, %v731
  %v738 = vadd.f32 %v590, %v733
  %v739 = vxor.u32 %v735, 2147483648
  %v740 = vmul.f32 %v739, 1.442695
  %v741 = vpow.pop %v740
  %v742 = vadd.f32 %v741, 1.0
  %v743 = vrcp.pop %v742
  %v744 = vmul.f32 1.0, %v743
  %v745 = vxor.u32 %v736, 2147483648
  %v746 = vmul.f32 %v745, 1.442695
  %v747 = vpow.pop %v746
  %v748 = vadd.f32 %v747, 1.0
  %v749 = vrcp.pop %v748
  %v750 = vmul.f32 1.0, %v749
  %v751 = vtanh.pop %v737
  %v752 = vxor.u32 %v738, 2147483648
  %v753 = vmul.f32 %v752, 1.442695
  %v754 = vpow.pop %v753
  %v755 = vadd.f32 %v754, 1.0
  %v756 = vrcp.pop %v755
  %v757 = vmul.f32 1.0, %v756
  %v758 = vmul.f32 %v750, %v592
  %v759 = vmul.f32 %v744, %v751
  %v760 = vadd.f32 %v758, %v759
  %v761 = vtanh.pop %v760
  %v762 = vmul.f32 %v757, %v761
  %s763 = sadd.s32 %s72, 1
  %v764 = vstv %s763
  %vm765 = vcmp.gt.s32.totalorder %v71, %v764
  %v766 = vsel %vm765, 1, 0
  %767 = vset.pattern.permute.xlu0 0
  %768 = vperm.xlu0 %767, %v766
  %v769 = vpop.permute.xlu0 %768
  %vm770 = vcmp.eq.s32.totalorder %v769, 1
  %v771 = vsel %vm770, %v762, %v591
  %772 = vst [vmem:[#allocation2] sm:$0xff] %v771
  %v773 = vld [vmem:[#allocation3] sm:$0xff]
  %v774 = vsel %vm770, %v760, %v773
  %775 = vst [vmem:[#allocation3] sm:$0xff] %v774
  %v776 = vsel %vm770, %v762, 0.0
  %s777 = scalar_lea.vmem %s5, 8
  %778 = vst [vmem:[%s777] sm:$0xff] %v776
  %s779 = scalar_lea.vmem %s52, 192
  %v780 = vld [vmem:[%s779] sm:$0xff]
  %v781 = vld [vmem:[%s779 + $0x8] sm:$0xff]
  %v782 = vld [vmem:[%s779 + $0x10] sm:$0xff]
  %v783 = vld [vmem:[%s779 + $0x18] sm:$0xff]
  %v784 = vld [vmem:[#allocation4] sm:$0xff]
  %v785 = vld [vmem:[#allocation5] sm:$0xff]
  %786 = vmatprep.subr.mxu0 %v200
  %787 = vmatpush1.msra.mxu0 %v199
  %788 = vmatprep.subr.mxu0 %v196
  %789 = vmatpush1.msra.mxu0 %v195
  %790 = vmatprep.subr.mxu0 %v192
  %791 = vmatpush1.msra.mxu0 %v191
  %792 = vmatprep.subr.mxu0 %v188
  %793 = vmatpush1.msra.mxu0 %v187
  %794 = vmatprep.subr.mxu0 %v184
  %795 = vmatpush1.msra.mxu0 %v183
  %796 = vmatprep.subr.mxu0 %v180
  %797 = vmatpush1.msra.mxu0 %v179
  %798 = vmatprep.subr.mxu0 %v176
  %799 = vmatpush1.msra.mxu0 %v175
  %800 = vmatprep.subr.mxu0 %v172
  %801 = vmatpush1.msra.mxu0 %v171
  %802 = vmatprep.subr.mxu0 %v168
  %803 = vmatpush1.msra.mxu0 %v167
  %804 = vmatprep.subr.mxu0 %v164
  %805 = vmatpush1.msra.mxu0 %v163
  %806 = vmatprep.subr.mxu0 %v160
  %807 = vmatpush1.msra.mxu0 %v159
  %808 = vmatprep.subr.mxu0 %v156
  %809 = vmatpush1.msra.mxu0 %v155
  %810 = vmatprep.subr.mxu0 %v152
  %811 = vmatpush1.msra.mxu0 %v151
  %812 = vmatprep.subr.mxu0 %v148
  %813 = vmatpush1.msra.mxu0 %v147
  %814 = vmatprep.subr.mxu0 %v144
  %815 = vmatpush1.msra.mxu0 %v143
  %816 = vmatprep.subr.mxu0 %v140
  %817 = vmatpush1.msra.mxu0 %v139
  %818 = vmatprep.subr.mxu0 0.0
  %819 = vmatpush2.msra.mxu0 0.0
  %820 = vmatprep.subr.mxu0 0.0
  %821 = vmatpush2.msra.mxu0 0.0
  %822 = vmatprep.subr.mxu0 0.0
  %823 = vmatpush2.msra.mxu0 0.0
  %824 = vmatprep.subr.mxu0 0.0
  %825 = vmatpush2.msra.mxu0 0.0
  %826 = vmatprep.subr.mxu0 0.0
  %827 = vmatpush2.msra.mxu0 0.0
  %828 = vmatprep.subr.mxu0 0.0
  %829 = vmatpush2.msra.mxu0 0.0
  %830 = vmatprep.subr.mxu0 0.0
  %831 = vmatpush2.msra.mxu0 0.0
  %832 = vmatprep.subr.mxu0 0.0
  %833 = vmatpush2.msra.mxu0 0.0
  %834 = vmatprep.subr.mxu0 0.0
  %835 = vmatpush2.msra.mxu0 0.0
  %836 = vmatprep.subr.mxu0 0.0
  %837 = vmatpush2.msra.mxu0 0.0
  %838 = vmatprep.subr.mxu0 0.0
  %839 = vmatpush2.msra.mxu0 0.0
  %840 = vmatprep.subr.mxu0 0.0
  %841 = vmatpush2.msra.mxu0 0.0
  %842 = vmatprep.subr.mxu0 0.0
  %843 = vmatpush2.msra.mxu0 0.0
  %844 = vmatprep.subr.mxu0 0.0
  %845 = vmatpush2.msra.mxu0 0.0
  %846 = vmatprep.subr.mxu0 0.0
  %847 = vmatpush2.msra.mxu0 0.0
  %848 = vmatprep.subr.mxu0 0.0
  %849 = vmatpush2.msra.mxu0 0.0
  %850 = vmatprep.mubr.f32.mxu0 0.0
  %851 = vmatmul.mubr.f32.gmra.mxu0 %v784
  %v852 = vpop.f32.mrf.mxu0
  %v853 = vadd.f32 0.0, %v852
  %v854 = vpop.f32.mrf.mxu0
  %v855 = vadd.f32 0.0, %v854
  %856 = vdwg.mxu0
  %857 = vmatprep.subr.mxu0 %v202
  %858 = vmatpush1.msra.mxu0 %v201
  %859 = vmatprep.subr.mxu0 %v198
  %860 = vmatpush1.msra.mxu0 %v197
  %861 = vmatprep.subr.mxu0 %v194
  %862 = vmatpush1.msra.mxu0 %v193
  %863 = vmatprep.subr.mxu0 %v190
  %864 = vmatpush1.msra.mxu0 %v189
  %865 = vmatprep.subr.mxu0 %v186
  %866 = vmatpush1.msra.mxu0 %v185
  %867 = vmatprep.subr.mxu0 %v182
  %868 = vmatpush1.msra.mxu0 %v181
  %869 = vmatprep.subr.mxu0 %v178
  %870 = vmatpush1.msra.mxu0 %v177
  %871 = vmatprep.subr.mxu0 %v174
  %872 = vmatpush1.msra.mxu0 %v173
  %873 = vmatprep.subr.mxu0 %v170
  %874 = vmatpush1.msra.mxu0 %v169
  %875 = vmatprep.subr.mxu0 %v166
  %876 = vmatpush1.msra.mxu0 %v165
  %877 = vmatprep.subr.mxu0 %v162
  %878 = vmatpush1.msra.mxu0 %v161
  %879 = vmatprep.subr.mxu0 %v158
  %880 = vmatpush1.msra.mxu0 %v157
  %881 = vmatprep.subr.mxu0 %v154
  %882 = vmatpush1.msra.mxu0 %v153
  %883 = vmatprep.subr.mxu0 %v150
  %884 = vmatpush1.msra.mxu0 %v149
  %885 = vmatprep.subr.mxu0 %v146
  %886 = vmatpush1.msra.mxu0 %v145
  %887 = vmatprep.subr.mxu0 %v142
  %888 = vmatpush1.msra.mxu0 %v141
  %889 = vmatprep.subr.mxu0 0.0
  %890 = vmatpush2.msra.mxu0 0.0
  %891 = vmatprep.subr.mxu0 0.0
  %892 = vmatpush2.msra.mxu0 0.0
  %893 = vmatprep.subr.mxu0 0.0
  %894 = vmatpush2.msra.mxu0 0.0
  %895 = vmatprep.subr.mxu0 0.0
  %896 = vmatpush2.msra.mxu0 0.0
  %897 = vmatprep.subr.mxu0 0.0
  %898 = vmatpush2.msra.mxu0 0.0
  %899 = vmatprep.subr.mxu0 0.0
  %900 = vmatpush2.msra.mxu0 0.0
  %901 = vmatprep.subr.mxu0 0.0
  %902 = vmatpush2.msra.mxu0 0.0
  %903 = vmatprep.subr.mxu0 0.0
  %904 = vmatpush2.msra.mxu0 0.0
  %905 = vmatprep.subr.mxu0 0.0
  %906 = vmatpush2.msra.mxu0 0.0
  %907 = vmatprep.subr.mxu0 0.0
  %908 = vmatpush2.msra.mxu0 0.0
  %909 = vmatprep.subr.mxu0 0.0
  %910 = vmatpush2.msra.mxu0 0.0
  %911 = vmatprep.subr.mxu0 0.0
  %912 = vmatpush2.msra.mxu0 0.0
  %913 = vmatprep.subr.mxu0 0.0
  %914 = vmatpush2.msra.mxu0 0.0
  %915 = vmatprep.subr.mxu0 0.0
  %916 = vmatpush2.msra.mxu0 0.0
  %917 = vmatprep.subr.mxu0 0.0
  %918 = vmatpush2.msra.mxu0 0.0
  %919 = vmatprep.subr.mxu0 0.0
  %920 = vmatpush2.msra.mxu0 0.0
  %921 = vmatprep.mubr.f32.mxu0 0.0
  %922 = vmatmul.mubr.f32.gmra.mxu0 %v784
  %v923 = vpop.f32.mrf.mxu0
  %v924 = vadd.f32 0.0, %v923
  %v925 = vpop.f32.mrf.mxu0
  %v926 = vadd.f32 0.0, %v925
  %927 = vdwg.mxu0
  %v928 = vadd.f32 %v780, %v853
  %v929 = vadd.f32 %v781, %v855
  %v930 = vadd.f32 %v782, %v924
  %v931 = vadd.f32 %v783, %v926
  %v932 = vxor.u32 %v928, 2147483648
  %v933 = vmul.f32 %v932, 1.442695
  %v934 = vpow.pop %v933
  %v935 = vadd.f32 %v934, 1.0
  %v936 = vrcp.pop %v935
  %v937 = vmul.f32 1.0, %v936
  %v938 = vxor.u32 %v929, 2147483648
  %v939 = vmul.f32 %v938, 1.442695
  %v940 = vpow.pop %v939
  %v941 = vadd.f32 %v940, 1.0
  %v942 = vrcp.pop %v941
  %v943 = vmul.f32 1.0, %v942
  %v944 = vtanh.pop %v930
  %v945 = vxor.u32 %v931, 2147483648
  %v946 = vmul.f32 %v945, 1.442695
  %v947 = vpow.pop %v946
  %v948 = vadd.f32 %v947, 1.0
  %v949 = vrcp.pop %v948
  %v950 = vmul.f32 1.0, %v949
  %v951 = vmul.f32 %v943, %v785
  %v952 = vmul.f32 %v937, %v944
  %v953 = vadd.f32 %v951, %v952
  %v954 = vtanh.pop %v953
  %v955 = vmul.f32 %v950, %v954
  %s956 = sadd.s32 %s74, 6
  %v957 = vstv %s956
  %vm958 = vcmp.gt.s32.totalorder %v71, %v957
  %v959 = vsel %vm958, 1, 0
  %960 = vset.pattern.permute.xlu0 0
  %961 = vperm.xlu0 %960, %v959
  %v962 = vpop.permute.xlu0 %961
  %vm963 = vcmp.eq.s32.totalorder %v962, 1
  %v964 = vsel %vm963, %v955, %v784
  %965 = vst [vmem:[#allocation4] sm:$0xff] %v964
  %v966 = vld [vmem:[#allocation5] sm:$0xff]
  %v967 = vsel %vm963, %v953, %v966
  %968 = vst [vmem:[#allocation5] sm:$0xff] %v967
  %v969 = vsel %vm963, %v955, 0.0
  %s970 = scalar_lea.vmem %s60, 48
  %971 = vst [vmem:[%s970] sm:$0xff] %v969
  %s972 = scalar_lea.vmem %s1, 64
  %v973 = vld [vmem:[%s972] sm:$0xff]
  %v974 = vld [vmem:[%s972 + $0x8] sm:$0xff]
  %v975 = vld [vmem:[%s972 + $0x10] sm:$0xff]
  %v976 = vld [vmem:[%s972 + $0x18] sm:$0xff]
  %v977 = vld [vmem:[#allocation2] sm:$0xff]
  %v978 = vld [vmem:[#allocation3] sm:$0xff]
  %979 = vmatprep.subr.mxu0 %v136
  %980 = vmatpush1.msra.mxu0 %v135
  %981 = vmatprep.subr.mxu0 %v132
  %982 = vmatpush1.msra.mxu0 %v131
  %983 = vmatprep.subr.mxu0 %v128
  %984 = vmatpush1.msra.mxu0 %v127
  %985 = vmatprep.subr.mxu0 %v124
  %986 = vmatpush1.msra.mxu0 %v123
  %987 = vmatprep.subr.mxu0 %v120
  %988 = vmatpush1.msra.mxu0 %v119
  %989 = vmatprep.subr.mxu0 %v116
  %990 = vmatpush1.msra.mxu0 %v115
  %991 = vmatprep.subr.mxu0 %v112
  %992 = vmatpush1.msra.mxu0 %v111
  %993 = vmatprep.subr.mxu0 %v108
  %994 = vmatpush1.msra.mxu0 %v107
  %995 = vmatprep.subr.mxu0 %v104
  %996 = vmatpush1.msra.mxu0 %v103
  %997 = vmatprep.subr.mxu0 %v100
  %998 = vmatpush1.msra.mxu0 %v99
  %999 = vmatprep.subr.mxu0 %v96
  %1000 = vmatpush1.msra.mxu0 %v95
  %1001 = vmatprep.subr.mxu0 %v92
  %1002 = vmatpush1.msra.mxu0 %v91
  %1003 = vmatprep.subr.mxu0 %v88
  %1004 = vmatpush1.msra.mxu0 %v87
  %1005 = vmatprep.subr.mxu0 %v84
  %1006 = vmatpush1.msra.mxu0 %v83
  %1007 = vmatprep.subr.mxu0 %v80
  %1008 = vmatpush1.msra.mxu0 %v79
  %1009 = vmatprep.subr.mxu0 %v76
  %1010 = vmatpush1.msra.mxu0 %v75
  %1011 = vmatprep.subr.mxu0 0.0
  %1012 = vmatpush2.msra.mxu0 0.0
  %1013 = vmatprep.subr.mxu0 0.0
  %1014 = vmatpush2.msra.mxu0 0.0
  %1015 = vmatprep.subr.mxu0 0.0
  %1016 = vmatpush2.msra.mxu0 0.0
  %1017 = vmatprep.subr.mxu0 0.0
  %1018 = vmatpush2.msra.mxu0 0.0
  %1019 = vmatprep.subr.mxu0 0.0
  %1020 = vmatpush2.msra.mxu0 0.0
  %1021 = vmatprep.subr.mxu0 0.0
  %1022 = vmatpush2.msra.mxu0 0.0
  %1023 = vmatprep.subr.mxu0 0.0
  %1024 = vmatpush2.msra.mxu0 0.0
  %1025 = vmatprep.subr.mxu0 0.0
  %1026 = vmatpush2.msra.mxu0 0.0
  %1027 = vmatprep.subr.mxu0 0.0
  %1028 = vmatpush2.msra.mxu0 0.0
  %1029 = vmatprep.subr.mxu0 0.0
  %1030 = vmatpush2.msra.mxu0 0.0
  %1031 = vmatprep.subr.mxu0 0.0
  %1032 = vmatpush2.msra.mxu0 0.0
  %1033 = vmatprep.subr.mxu0 0.0
  %1034 = vmatpush2.msra.mxu0 0.0
  %1035 = vmatprep.subr.mxu0 0.0
  %1036 = vmatpush2.msra.mxu0 0.0
  %1037 = vmatprep.subr.mxu0 0.0
  %1038 = vmatpush2.msra.mxu0 0.0
  %1039 = vmatprep.subr.mxu0 0.0
  %1040 = vmatpush2.msra.mxu0 0.0
  %1041 = vmatprep.subr.mxu0 0.0
  %1042 = vmatpush2.msra.mxu0 0.0
  %1043 = vmatprep.mubr.f32.mxu0 0.0
  %1044 = vmatmul.mubr.f32.gmra.mxu0 %v977
  %v1045 = vpop.f32.mrf.mxu0
  %v1046 = vadd.f32 0.0, %v1045
  %v1047 = vpop.f32.mrf.mxu0
  %v1048 = vadd.f32 0.0, %v1047
  %1049 = vdwg.mxu0
  %1050 = vmatprep.subr.mxu0 %v138
  %1051 = vmatpush1.msra.mxu0 %v137
  %1052 = vmatprep.subr.mxu0 %v134
  %1053 = vmatpush1.msra.mxu0 %v133
  %1054 = vmatprep.subr.mxu0 %v130
  %1055 = vmatpush1.msra.mxu0 %v129
  %1056 = vmatprep.subr.mxu0 %v126
  %1057 = vmatpush1.msra.mxu0 %v125
  %1058 = vmatprep.subr.mxu0 %v122
  %1059 = vmatpush1.msra.mxu0 %v121
  %1060 = vmatprep.subr.mxu0 %v118
  %1061 = vmatpush1.msra.mxu0 %v117
  %1062 = vmatprep.subr.mxu0 %v114
  %1063 = vmatpush1.msra.mxu0 %v113
  %1064 = vmatprep.subr.mxu0 %v110
  %1065 = vmatpush1.msra.mxu0 %v109
  %1066 = vmatprep.subr.mxu0 %v106
  %1067 = vmatpush1.msra.mxu0 %v105
  %1068 = vmatprep.subr.mxu0 %v102
  %1069 = vmatpush1.msra.mxu0 %v101
  %1070 = vmatprep.subr.mxu0 %v98
  %1071 = vmatpush1.msra.mxu0 %v97
  %1072 = vmatprep.subr.mxu0 %v94
  %1073 = vmatpush1.msra.mxu0 %v93
  %1074 = vmatprep.subr.mxu0 %v90
  %1075 = vmatpush1.msra.mxu0 %v89
  %1076 = vmatprep.subr.mxu0 %v86
  %1077 = vmatpush1.msra.mxu0 %v85
  %1078 = vmatprep.subr.mxu0 %v82
  %1079 = vmatpush1.msra.mxu0 %v81
  %1080 = vmatprep.subr.mxu0 %v78
  %1081 = vmatpush1.msra.mxu0 %v77
  %1082 = vmatprep.subr.mxu0 0.0
  %1083 = vmatpush2.msra.mxu0 0.0
  %1084 = vmatprep.subr.mxu0 0.0
  %1085 = vmatpush2.msra.mxu0 0.0
  %1086 = vmatprep.subr.mxu0 0.0
  %1087 = vmatpush2.msra.mxu0 0.0
  %1088 = vmatprep.subr.mxu0 0.0
  %1089 = vmatpush2.msra.mxu0 0.0
  %1090 = vmatprep.subr.mxu0 0.0
  %1091 = vmatpush2.msra.mxu0 0.0
  %1092 = vmatprep.subr.mxu0 0.0
  %1093 = vmatpush2.msra.mxu0 0.0
  %1094 = vmatprep.subr.mxu0 0.0
  %1095 = vmatpush2.msra.mxu0 0.0
  %1096 = vmatprep.subr.mxu0 0.0
  %1097 = vmatpush2.msra.mxu0 0.0
  %1098 = vmatprep.subr.mxu0 0.0
  %1099 = vmatpush2.msra.mxu0 0.0
  %1100 = vmatprep.subr.mxu0 0.0
  %1101 = vmatpush2.msra.mxu0 0.0
  %1102 = vmatprep.subr.mxu0 0.0
  %1103 = vmatpush2.msra.mxu0 0.0
  %1104 = vmatprep.subr.mxu0 0.0
  %1105 = vmatpush2.msra.mxu0 0.0
  %1106 = vmatprep.subr.mxu0 0.0
  %1107 = vmatpush2.msra.mxu0 0.0
  %1108 = vmatprep.subr.mxu0 0.0
  %1109 = vmatpush2.msra.mxu0 0.0
  %1110 = vmatprep.subr.mxu0 0.0
  %1111 = vmatpush2.msra.mxu0 0.0
  %1112 = vmatprep.subr.mxu0 0.0
  %1113 = vmatpush2.msra.mxu0 0.0
  %1114 = vmatprep.mubr.f32.mxu0 0.0
  %1115 = vmatmul.mubr.f32.gmra.mxu0 %v977
  %v1116 = vpop.f32.mrf.mxu0
  %v1117 = vadd.f32 0.0, %v1116
  %v1118 = vpop.f32.mrf.mxu0
  %v1119 = vadd.f32 0.0, %v1118
  %1120 = vdwg.mxu0
  %v1121 = vadd.f32 %v973, %v1046
  %v1122 = vadd.f32 %v974, %v1048
  %v1123 = vadd.f32 %v975, %v1117
  %v1124 = vadd.f32 %v976, %v1119
  %v1125 = vxor.u32 %v1121, 2147483648
  %v1126 = vmul.f32 %v1125, 1.442695
  %v1127 = vpow.pop %v1126
  %v1128 = vadd.f32 %v1127, 1.0
  %v1129 = vrcp.pop %v1128
  %v1130 = vmul.f32 1.0, %v1129
  %v1131 = vxor.u32 %v1122, 2147483648
  %v1132 = vmul.f32 %v1131, 1.442695
  %v1133 = vpow.pop %v1132
  %v1134 = vadd.f32 %v1133, 1.0
  %v1135 = vrcp.pop %v1134
  %v1136 = vmul.f32 1.0, %v1135
  %v1137 = vtanh.pop %v1123
  %v1138 = vxor.u32 %v1124, 2147483648
  %v1139 = vmul.f32 %v1138, 1.442695
  %v1140 = vpow.pop %v1139
  %v1141 = vadd.f32 %v1140, 1.0
  %v1142 = vrcp.pop %v1141
  %v1143 = vmul.f32 1.0, %v1142
  %v1144 = vmul.f32 %v1136, %v978
  %v1145 = vmul.f32 %v1130, %v1137
  %v1146 = vadd.f32 %v1144, %v1145
  %v1147 = vtanh.pop %v1146
  %v1148 = vmul.f32 %v1143, %v1147
  %s1149 = sadd.s32 %s72, 2
  %v1150 = vstv %s1149
  %vm1151 = vcmp.gt.s32.totalorder %v71, %v1150
  %v1152 = vsel %vm1151, 1, 0
  %1153 = vset.pattern.permute.xlu0 0
  %1154 = vperm.xlu0 %1153, %v1152
  %v1155 = vpop.permute.xlu0 %1154
  %vm1156 = vcmp.eq.s32.totalorder %v1155, 1
  %v1157 = vsel %vm1156, %v1148, %v977
  %1158 = vst [vmem:[#allocation2] sm:$0xff] %v1157
  %v1159 = vld [vmem:[#allocation3] sm:$0xff]
  %v1160 = vsel %vm1156, %v1146, %v1159
  %1161 = vst [vmem:[#allocation3] sm:$0xff] %v1160
  %v1162 = vsel %vm1156, %v1148, 0.0
  %s1163 = scalar_lea.vmem %s5, 16
  %1164 = vst [vmem:[%s1163] sm:$0xff] %v1162
  %s1165 = scalar_lea.vmem %s52, 160
  %v1166 = vld [vmem:[%s1165] sm:$0xff]
  %v1167 = vld [vmem:[%s1165 + $0x8] sm:$0xff]
  %v1168 = vld [vmem:[%s1165 + $0x10] sm:$0xff]
  %v1169 = vld [vmem:[%s1165 + $0x18] sm:$0xff]
  %v1170 = vld [vmem:[#allocation4] sm:$0xff]
  %v1171 = vld [vmem:[#allocation5] sm:$0xff]
  %1172 = vmatprep.subr.mxu0 %v200
  %1173 = vmatpush1.msra.mxu0 %v199
  %1174 = vmatprep.subr.mxu0 %v196
  %1175 = vmatpush1.msra.mxu0 %v195
  %1176 = vmatprep.subr.mxu0 %v192
  %1177 = vmatpush1.msra.mxu0 %v191
  %1178 = vmatprep.subr.mxu0 %v188
  %1179 = vmatpush1.msra.mxu0 %v187
  %1180 = vmatprep.subr.mxu0 %v184
  %1181 = vmatpush1.msra.mxu0 %v183
  %1182 = vmatprep.subr.mxu0 %v180
  %1183 = vmatpush1.msra.mxu0 %v179
  %1184 = vmatprep.subr.mxu0 %v176
  %1185 = vmatpush1.msra.mxu0 %v175
  %1186 = vmatprep.subr.mxu0 %v172
  %1187 = vmatpush1.msra.mxu0 %v171
  %1188 = vmatprep.subr.mxu0 %v168
  %1189 = vmatpush1.msra.mxu0 %v167
  %1190 = vmatprep.subr.mxu0 %v164
  %1191 = vmatpush1.msra.mxu0 %v163
  %1192 = vmatprep.subr.mxu0 %v160
  %1193 = vmatpush1.msra.mxu0 %v159
  %1194 = vmatprep.subr.mxu0 %v156
  %1195 = vmatpush1.msra.mxu0 %v155
  %1196 = vmatprep.subr.mxu0 %v152
  %1197 = vmatpush1.msra.mxu0 %v151
  %1198 = vmatprep.subr.mxu0 %v148
  %1199 = vmatpush1.msra.mxu0 %v147
  %1200 = vmatprep.subr.mxu0 %v144
  %1201 = vmatpush1.msra.mxu0 %v143
  %1202 = vmatprep.subr.mxu0 %v140
  %1203 = vmatpush1.msra.mxu0 %v139
  %1204 = vmatprep.subr.mxu0 0.0
  %1205 = vmatpush2.msra.mxu0 0.0
  %1206 = vmatprep.subr.mxu0 0.0
  %1207 = vmatpush2.msra.mxu0 0.0
  %1208 = vmatprep.subr.mxu0 0.0
  %1209 = vmatpush2.msra.mxu0 0.0
  %1210 = vmatprep.subr.mxu0 0.0
  %1211 = vmatpush2.msra.mxu0 0.0
  %1212 = vmatprep.subr.mxu0 0.0
  %1213 = vmatpush2.msra.mxu0 0.0
  %1214 = vmatprep.subr.mxu0 0.0
  %1215 = vmatpush2.msra.mxu0 0.0
  %1216 = vmatprep.subr.mxu0 0.0
  %1217 = vmatpush2.msra.mxu0 0.0
  %1218 = vmatprep.subr.mxu0 0.0
  %1219 = vmatpush2.msra.mxu0 0.0
  %1220 = vmatprep.subr.mxu0 0.0
  %1221 = vmatpush2.msra.mxu0 0.0
  %1222 = vmatprep.subr.mxu0 0.0
  %1223 = vmatpush2.msra.mxu0 0.0
  %1224 = vmatprep.subr.mxu0 0.0
  %1225 = vmatpush2.msra.mxu0 0.0
  %1226 = vmatprep.subr.mxu0 0.0
  %1227 = vmatpush2.msra.mxu0 0.0
  %1228 = vmatprep.subr.mxu0 0.0
  %1229 = vmatpush2.msra.mxu0 0.0
  %1230 = vmatprep.subr.mxu0 0.0
  %1231 = vmatpush2.msra.mxu0 0.0
  %1232 = vmatprep.subr.mxu0 0.0
  %1233 = vmatpush2.msra.mxu0 0.0
  %1234 = vmatprep.subr.mxu0 0.0
  %1235 = vmatpush2.msra.mxu0 0.0
  %1236 = vmatprep.mubr.f32.mxu0 0.0
  %1237 = vmatmul.mubr.f32.gmra.mxu0 %v1170
  %v1238 = vpop.f32.mrf.mxu0
  %v1239 = vadd.f32 0.0, %v1238
  %v1240 = vpop.f32.mrf.mxu0
  %v1241 = vadd.f32 0.0, %v1240
  %1242 = vdwg.mxu0
  %1243 = vmatprep.subr.mxu0 %v202
  %1244 = vmatpush1.msra.mxu0 %v201
  %1245 = vmatprep.subr.mxu0 %v198
  %1246 = vmatpush1.msra.mxu0 %v197
  %1247 = vmatprep.subr.mxu0 %v194
  %1248 = vmatpush1.msra.mxu0 %v193
  %1249 = vmatprep.subr.mxu0 %v190
  %1250 = vmatpush1.msra.mxu0 %v189
  %1251 = vmatprep.subr.mxu0 %v186
  %1252 = vmatpush1.msra.mxu0 %v185
  %1253 = vmatprep.subr.mxu0 %v182
  %1254 = vmatpush1.msra.mxu0 %v181
  %1255 = vmatprep.subr.mxu0 %v178
  %1256 = vmatpush1.msra.mxu0 %v177
  %1257 = vmatprep.subr.mxu0 %v174
  %1258 = vmatpush1.msra.mxu0 %v173
  %1259 = vmatprep.subr.mxu0 %v170
  %1260 = vmatpush1.msra.mxu0 %v169
  %1261 = vmatprep.subr.mxu0 %v166
  %1262 = vmatpush1.msra.mxu0 %v165
  %1263 = vmatprep.subr.mxu0 %v162
  %1264 = vmatpush1.msra.mxu0 %v161
  %1265 = vmatprep.subr.mxu0 %v158
  %1266 = vmatpush1.msra.mxu0 %v157
  %1267 = vmatprep.subr.mxu0 %v154
  %1268 = vmatpush1.msra.mxu0 %v153
  %1269 = vmatprep.subr.mxu0 %v150
  %1270 = vmatpush1.msra.mxu0 %v149
  %1271 = vmatprep.subr.mxu0 %v146
  %1272 = vmatpush1.msra.mxu0 %v145
  %1273 = vmatprep.subr.mxu0 %v142
  %1274 = vmatpush1.msra.mxu0 %v141
  %1275 = vmatprep.subr.mxu0 0.0
  %1276 = vmatpush2.msra.mxu0 0.0
  %1277 = vmatprep.subr.mxu0 0.0
  %1278 = vmatpush2.msra.mxu0 0.0
  %1279 = vmatprep.subr.mxu0 0.0
  %1280 = vmatpush2.msra.mxu0 0.0
  %1281 = vmatprep.subr.mxu0 0.0
  %1282 = vmatpush2.msra.mxu0 0.0
  %1283 = vmatprep.subr.mxu0 0.0
  %1284 = vmatpush2.msra.mxu0 0.0
  %1285 = vmatprep.subr.mxu0 0.0
  %1286 = vmatpush2.msra.mxu0 0.0
  %1287 = vmatprep.subr.mxu0 0.0
  %1288 = vmatpush2.msra.mxu0 0.0
  %1289 = vmatprep.subr.mxu0 0.0
  %1290 = vmatpush2.msra.mxu0 0.0
  %1291 = vmatprep.subr.mxu0 0.0
  %1292 = vmatpush2.msra.mxu0 0.0
  %1293 = vmatprep.subr.mxu0 0.0
  %1294 = vmatpush2.msra.mxu0 0.0
  %1295 = vmatprep.subr.mxu0 0.0
  %1296 = vmatpush2.msra.mxu0 0.0
  %1297 = vmatprep.subr.mxu0 0.0
  %1298 = vmatpush2.msra.mxu0 0.0
  %1299 = vmatprep.subr.mxu0 0.0
  %1300 = vmatpush2.msra.mxu0 0.0
  %1301 = vmatprep.subr.mxu0 0.0
  %1302 = vmatpush2.msra.mxu0 0.0
  %1303 = vmatprep.subr.mxu0 0.0
  %1304 = vmatpush2.msra.mxu0 0.0
  %1305 = vmatprep.subr.mxu0 0.0
  %1306 = vmatpush2.msra.mxu0 0.0
  %1307 = vmatprep.mubr.f32.mxu0 0.0
  %1308 = vmatmul.mubr.f32.gmra.mxu0 %v1170
  %v1309 = vpop.f32.mrf.mxu0
  %v1310 = vadd.f32 0.0, %v1309
  %v1311 = vpop.f32.mrf.mxu0
  %v1312 = vadd.f32 0.0, %v1311
  %1313 = vdwg.mxu0
  %v1314 = vadd.f32 %v1166, %v1239
  %v1315 = vadd.f32 %v1167, %v1241
  %v1316 = vadd.f32 %v1168, %v1310
  %v1317 = vadd.f32 %v1169, %v1312
  %v1318 = vxor.u32 %v1314, 2147483648
  %v1319 = vmul.f32 %v1318, 1.442695
  %v1320 = vpow.pop %v1319
  %v1321 = vadd.f32 %v1320, 1.0
  %v1322 = vrcp.pop %v1321
  %v1323 = vmul.f32 1.0, %v1322
  %v1324 = vxor.u32 %v1315, 2147483648
  %v1325 = vmul.f32 %v1324, 1.442695
  %v1326 = vpow.pop %v1325
  %v1327 = vadd.f32 %v1326, 1.0
  %v1328 = vrcp.pop %v1327
  %v1329 = vmul.f32 1.0, %v1328
  %v1330 = vtanh.pop %v1316
  %v1331 = vxor.u32 %v1317, 2147483648
  %v1332 = vmul.f32 %v1331, 1.442695
  %v1333 = vpow.pop %v1332
  %v1334 = vadd.f32 %v1333, 1.0
  %v1335 = vrcp.pop %v1334
  %v1336 = vmul.f32 1.0, %v1335
  %v1337 = vmul.f32 %v1329, %v1171
  %v1338 = vmul.f32 %v1323, %v1330
  %v1339 = vadd.f32 %v1337, %v1338
  %v1340 = vtanh.pop %v1339
  %v1341 = vmul.f32 %v1336, %v1340
  %s1342 = sadd.s32 %s74, 5
  %v1343 = vstv %s1342
  %vm1344 = vcmp.gt.s32.totalorder %v71, %v1343
  %v1345 = vsel %vm1344, 1, 0
  %1346 = vset.pattern.permute.xlu0 0
  %1347 = vperm.xlu0 %1346, %v1345
  %v1348 = vpop.permute.xlu0 %1347
  %vm1349 = vcmp.eq.s32.totalorder %v1348, 1
  %v1350 = vsel %vm1349, %v1341, %v1170
  %1351 = vst [vmem:[#allocation4] sm:$0xff] %v1350
  %v1352 = vld [vmem:[#allocation5] sm:$0xff]
  %v1353 = vsel %vm1349, %v1339, %v1352
  %1354 = vst [vmem:[#allocation5] sm:$0xff] %v1353
  %v1355 = vsel %vm1349, %v1341, 0.0
  %s1356 = scalar_lea.vmem %s60, 40
  %1357 = vst [vmem:[%s1356] sm:$0xff] %v1355
  %s1358 = scalar_lea.vmem %s1, 96
  %v1359 = vld [vmem:[%s1358] sm:$0xff]
  %v1360 = vld [vmem:[%s1358 + $0x8] sm:$0xff]
  %v1361 = vld [vmem:[%s1358 + $0x10] sm:$0xff]
  %v1362 = vld [vmem:[%s1358 + $0x18] sm:$0xff]
  %v1363 = vld [vmem:[#allocation2] sm:$0xff]
  %v1364 = vld [vmem:[#allocation3] sm:$0xff]
  %1365 = vmatprep.subr.mxu0 %v136
  %1366 = vmatpush1.msra.mxu0 %v135
  %1367 = vmatprep.subr.mxu0 %v132
  %1368 = vmatpush1.msra.mxu0 %v131
  %1369 = vmatprep.subr.mxu0 %v128
  %1370 = vmatpush1.msra.mxu0 %v127
  %1371 = vmatprep.subr.mxu0 %v124
  %1372 = vmatpush1.msra.mxu0 %v123
  %1373 = vmatprep.subr.mxu0 %v120
  %1374 = vmatpush1.msra.mxu0 %v119
  %1375 = vmatprep.subr.mxu0 %v116
  %1376 = vmatpush1.msra.mxu0 %v115
  %1377 = vmatprep.subr.mxu0 %v112
  %1378 = vmatpush1.msra.mxu0 %v111
  %1379 = vmatprep.subr.mxu0 %v108
  %1380 = vmatpush1.msra.mxu0 %v107
  %1381 = vmatprep.subr.mxu0 %v104
  %1382 = vmatpush1.msra.mxu0 %v103
  %1383 = vmatprep.subr.mxu0 %v100
  %1384 = vmatpush1.msra.mxu0 %v99
  %1385 = vmatprep.subr.mxu0 %v96
  %1386 = vmatpush1.msra.mxu0 %v95
  %1387 = vmatprep.subr.mxu0 %v92
  %1388 = vmatpush1.msra.mxu0 %v91
  %1389 = vmatprep.subr.mxu0 %v88
  %1390 = vmatpush1.msra.mxu0 %v87
  %1391 = vmatprep.subr.mxu0 %v84
  %1392 = vmatpush1.msra.mxu0 %v83
  %1393 = vmatprep.subr.mxu0 %v80
  %1394 = vmatpush1.msra.mxu0 %v79
  %1395 = vmatprep.subr.mxu0 %v76
  %1396 = vmatpush1.msra.mxu0 %v75
  %1397 = vmatprep.subr.mxu0 0.0
  %1398 = vmatpush2.msra.mxu0 0.0
  %1399 = vmatprep.subr.mxu0 0.0
  %1400 = vmatpush2.msra.mxu0 0.0
  %1401 = vmatprep.subr.mxu0 0.0
  %1402 = vmatpush2.msra.mxu0 0.0
  %1403 = vmatprep.subr.mxu0 0.0
  %1404 = vmatpush2.msra.mxu0 0.0
  %1405 = vmatprep.subr.mxu0 0.0
  %1406 = vmatpush2.msra.mxu0 0.0
  %1407 = vmatprep.subr.mxu0 0.0
  %1408 = vmatpush2.msra.mxu0 0.0
  %1409 = vmatprep.subr.mxu0 0.0
  %1410 = vmatpush2.msra.mxu0 0.0
  %1411 = vmatprep.subr.mxu0 0.0
  %1412 = vmatpush2.msra.mxu0 0.0
  %1413 = vmatprep.subr.mxu0 0.0
  %1414 = vmatpush2.msra.mxu0 0.0
  %1415 = vmatprep.subr.mxu0 0.0
  %1416 = vmatpush2.msra.mxu0 0.0
  %1417 = vmatprep.subr.mxu0 0.0
  %1418 = vmatpush2.msra.mxu0 0.0
  %1419 = vmatprep.subr.mxu0 0.0
  %1420 = vmatpush2.msra.mxu0 0.0
  %1421 = vmatprep.subr.mxu0 0.0
  %1422 = vmatpush2.msra.mxu0 0.0
  %1423 = vmatprep.subr.mxu0 0.0
  %1424 = vmatpush2.msra.mxu0 0.0
  %1425 = vmatprep.subr.mxu0 0.0
  %1426 = vmatpush2.msra.mxu0 0.0
  %1427 = vmatprep.subr.mxu0 0.0
  %1428 = vmatpush2.msra.mxu0 0.0
  %1429 = vmatprep.mubr.f32.mxu0 0.0
  %1430 = vmatmul.mubr.f32.gmra.mxu0 %v1363
  %v1431 = vpop.f32.mrf.mxu0
  %v1432 = vadd.f32 0.0, %v1431
  %v1433 = vpop.f32.mrf.mxu0
  %v1434 = vadd.f32 0.0, %v1433
  %1435 = vdwg.mxu0
  %1436 = vmatprep.subr.mxu0 %v138
  %1437 = vmatpush1.msra.mxu0 %v137
  %1438 = vmatprep.subr.mxu0 %v134
  %1439 = vmatpush1.msra.mxu0 %v133
  %1440 = vmatprep.subr.mxu0 %v130
  %1441 = vmatpush1.msra.mxu0 %v129
  %1442 = vmatprep.subr.mxu0 %v126
  %1443 = vmatpush1.msra.mxu0 %v125
  %1444 = vmatprep.subr.mxu0 %v122
  %1445 = vmatpush1.msra.mxu0 %v121
  %1446 = vmatprep.subr.mxu0 %v118
  %1447 = vmatpush1.msra.mxu0 %v117
  %1448 = vmatprep.subr.mxu0 %v114
  %1449 = vmatpush1.msra.mxu0 %v113
  %1450 = vmatprep.subr.mxu0 %v110
  %1451 = vmatpush1.msra.mxu0 %v109
  %1452 = vmatprep.subr.mxu0 %v106
  %1453 = vmatpush1.msra.mxu0 %v105
  %1454 = vmatprep.subr.mxu0 %v102
  %1455 = vmatpush1.msra.mxu0 %v101
  %1456 = vmatprep.subr.mxu0 %v98
  %1457 = vmatpush1.msra.mxu0 %v97
  %1458 = vmatprep.subr.mxu0 %v94
  %1459 = vmatpush1.msra.mxu0 %v93
  %1460 = vmatprep.subr.mxu0 %v90
  %1461 = vmatpush1.msra.mxu0 %v89
  %1462 = vmatprep.subr.mxu0 %v86
  %1463 = vmatpush1.msra.mxu0 %v85
  %1464 = vmatprep.subr.mxu0 %v82
  %1465 = vmatpush1.msra.mxu0 %v81
  %1466 = vmatprep.subr.mxu0 %v78
  %1467 = vmatpush1.msra.mxu0 %v77
  %1468 = vmatprep.subr.mxu0 0.0
  %1469 = vmatpush2.msra.mxu0 0.0
  %1470 = vmatprep.subr.mxu0 0.0
  %1471 = vmatpush2.msra.mxu0 0.0
  %1472 = vmatprep.subr.mxu0 0.0
  %1473 = vmatpush2.msra.mxu0 0.0
  %1474 = vmatprep.subr.mxu0 0.0
  %1475 = vmatpush2.msra.mxu0 0.0
  %1476 = vmatprep.subr.mxu0 0.0
  %1477 = vmatpush2.msra.mxu0 0.0
  %1478 = vmatprep.subr.mxu0 0.0
  %1479 = vmatpush2.msra.mxu0 0.0
  %1480 = vmatprep.subr.mxu0 0.0
  %1481 = vmatpush2.msra.mxu0 0.0
  %1482 = vmatprep.subr.mxu0 0.0
  %1483 = vmatpush2.msra.mxu0 0.0
  %1484 = vmatprep.subr.mxu0 0.0
  %1485 = vmatpush2.msra.mxu0 0.0
  %1486 = vmatprep.subr.mxu0 0.0
  %1487 = vmatpush2.msra.mxu0 0.0
  %1488 = vmatprep.subr.mxu0 0.0
  %1489 = vmatpush2.msra.mxu0 0.0
  %1490 = vmatprep.subr.mxu0 0.0
  %1491 = vmatpush2.msra.mxu0 0.0
  %1492 = vmatprep.subr.mxu0 0.0
  %1493 = vmatpush2.msra.mxu0 0.0
  %1494 = vmatprep.subr.mxu0 0.0
  %1495 = vmatpush2.msra.mxu0 0.0
  %1496 = vmatprep.subr.mxu0 0.0
  %1497 = vmatpush2.msra.mxu0 0.0
  %1498 = vmatprep.subr.mxu0 0.0
  %1499 = vmatpush2.msra.mxu0 0.0
  %1500 = vmatprep.mubr.f32.mxu0 0.0
  %1501 = vmatmul.mubr.f32.gmra.mxu0 %v1363
  %v1502 = vpop.f32.mrf.mxu0
  %v1503 = vadd.f32 0.0, %v1502
  %v1504 = vpop.f32.mrf.mxu0
  %v1505 = vadd.f32 0.0, %v1504
  %1506 = vdwg.mxu0
  %v1507 = vadd.f32 %v1359, %v1432
  %v1508 = vadd.f32 %v1360, %v1434
  %v1509 = vadd.f32 %v1361, %v1503
  %v1510 = vadd.f32 %v1362, %v1505
  %v1511 = vxor.u32 %v1507, 2147483648
  %v1512 = vmul.f32 %v1511, 1.442695
  %v1513 = vpow.pop %v1512
  %v1514 = vadd.f32 %v1513, 1.0
  %v1515 = vrcp.pop %v1514
  %v1516 = vmul.f32 1.0, %v1515
  %v1517 = vxor.u32 %v1508, 2147483648
  %v1518 = vmul.f32 %v1517, 1.442695
  %v1519 = vpow.pop %v1518
  %v1520 = vadd.f32 %v1519, 1.0
  %v1521 = vrcp.pop %v1520
  %v1522 = vmul.f32 1.0, %v1521
  %v1523 = vtanh.pop %v1509
  %v1524 = vxor.u32 %v1510, 2147483648
  %v1525 = vmul.f32 %v1524, 1.442695
  %v1526 = vpow.pop %v1525
  %v1527 = vadd.f32 %v1526, 1.0
  %v1528 = vrcp.pop %v1527
  %v1529 = vmul.f32 1.0, %v1528
  %v1530 = vmul.f32 %v1522, %v1364
  %v1531 = vmul.f32 %v1516, %v1523
  %v1532 = vadd.f32 %v1530, %v1531
  %v1533 = vtanh.pop %v1532
  %v1534 = vmul.f32 %v1529, %v1533
  %s1535 = sadd.s32 %s72, 3
  %v1536 = vstv %s1535
  %vm1537 = vcmp.gt.s32.totalorder %v71, %v1536
  %v1538 = vsel %vm1537, 1, 0
  %1539 = vset.pattern.permute.xlu0 0
  %1540 = vperm.xlu0 %1539, %v1538
  %v1541 = vpop.permute.xlu0 %1540
  %vm1542 = vcmp.eq.s32.totalorder %v1541, 1
  %v1543 = vsel %vm1542, %v1534, %v1363
  %1544 = vst [vmem:[#allocation2] sm:$0xff] %v1543
  %v1545 = vld [vmem:[#allocation3] sm:$0xff]
  %v1546 = vsel %vm1542, %v1532, %v1545
  %1547 = vst [vmem:[#allocation3] sm:$0xff] %v1546
  %v1548 = vsel %vm1542, %v1534, 0.0
  %s1549 = scalar_lea.vmem %s5, 24
  %1550 = vst [vmem:[%s1549] sm:$0xff] %v1548
  %s1551 = scalar_lea.vmem %s52, 128
  %v1552 = vld [vmem:[%s1551] sm:$0xff]
  %v1553 = vld [vmem:[%s1551 + $0x8] sm:$0xff]
  %v1554 = vld [vmem:[%s1551 + $0x10] sm:$0xff]
  %v1555 = vld [vmem:[%s1551 + $0x18] sm:$0xff]
  %v1556 = vld [vmem:[#allocation4] sm:$0xff]
  %v1557 = vld [vmem:[#allocation5] sm:$0xff]
  %1558 = vmatprep.subr.mxu0 %v200
  %1559 = vmatpush1.msra.mxu0 %v199
  %1560 = vmatprep.subr.mxu0 %v196
  %1561 = vmatpush1.msra.mxu0 %v195
  %1562 = vmatprep.subr.mxu0 %v192
  %1563 = vmatpush1.msra.mxu0 %v191
  %1564 = vmatprep.subr.mxu0 %v188
  %1565 = vmatpush1.msra.mxu0 %v187
  %1566 = vmatprep.subr.mxu0 %v184
  %1567 = vmatpush1.msra.mxu0 %v183
  %1568 = vmatprep.subr.mxu0 %v180
  %1569 = vmatpush1.msra.mxu0 %v179
  %1570 = vmatprep.subr.mxu0 %v176
  %1571 = vmatpush1.msra.mxu0 %v175
  %1572 = vmatprep.subr.mxu0 %v172
  %1573 = vmatpush1.msra.mxu0 %v171
  %1574 = vmatprep.subr.mxu0 %v168
  %1575 = vmatpush1.msra.mxu0 %v167
  %1576 = vmatprep.subr.mxu0 %v164
  %1577 = vmatpush1.msra.mxu0 %v163
  %1578 = vmatprep.subr.mxu0 %v160
  %1579 = vmatpush1.msra.mxu0 %v159
  %1580 = vmatprep.subr.mxu0 %v156
  %1581 = vmatpush1.msra.mxu0 %v155
  %1582 = vmatprep.subr.mxu0 %v152
  %1583 = vmatpush1.msra.mxu0 %v151
  %1584 = vmatprep.subr.mxu0 %v148
  %1585 = vmatpush1.msra.mxu0 %v147
  %1586 = vmatprep.subr.mxu0 %v144
  %1587 = vmatpush1.msra.mxu0 %v143
  %1588 = vmatprep.subr.mxu0 %v140
  %1589 = vmatpush1.msra.mxu0 %v139
  %1590 = vmatprep.subr.mxu0 0.0
  %1591 = vmatpush2.msra.mxu0 0.0
  %1592 = vmatprep.subr.mxu0 0.0
  %1593 = vmatpush2.msra.mxu0 0.0
  %1594 = vmatprep.subr.mxu0 0.0
  %1595 = vmatpush2.msra.mxu0 0.0
  %1596 = vmatprep.subr.mxu0 0.0
  %1597 = vmatpush2.msra.mxu0 0.0
  %1598 = vmatprep.subr.mxu0 0.0
  %1599 = vmatpush2.msra.mxu0 0.0
  %1600 = vmatprep.subr.mxu0 0.0
  %1601 = vmatpush2.msra.mxu0 0.0
  %1602 = vmatprep.subr.mxu0 0.0
  %1603 = vmatpush2.msra.mxu0 0.0
  %1604 = vmatprep.subr.mxu0 0.0
  %1605 = vmatpush2.msra.mxu0 0.0
  %1606 = vmatprep.subr.mxu0 0.0
  %1607 = vmatpush2.msra.mxu0 0.0
  %1608 = vmatprep.subr.mxu0 0.0
  %1609 = vmatpush2.msra.mxu0 0.0
  %1610 = vmatprep.subr.mxu0 0.0
  %1611 = vmatpush2.msra.mxu0 0.0
  %1612 = vmatprep.subr.mxu0 0.0
  %1613 = vmatpush2.msra.mxu0 0.0
  %1614 = vmatprep.subr.mxu0 0.0
  %1615 = vmatpush2.msra.mxu0 0.0
  %1616 = vmatprep.subr.mxu0 0.0
  %1617 = vmatpush2.msra.mxu0 0.0
  %1618 = vmatprep.subr.mxu0 0.0
  %1619 = vmatpush2.msra.mxu0 0.0
  %1620 = vmatprep.subr.mxu0 0.0
  %1621 = vmatpush2.msra.mxu0 0.0
  %1622 = vmatprep.mubr.f32.mxu0 0.0
  %1623 = vmatmul.mubr.f32.gmra.mxu0 %v1556
  %v1624 = vpop.f32.mrf.mxu0
  %v1625 = vadd.f32 0.0, %v1624
  %v1626 = vpop.f32.mrf.mxu0
  %v1627 = vadd.f32 0.0, %v1626
  %1628 = vdwg.mxu0
  %1629 = vmatprep.subr.mxu0 %v202
  %1630 = vmatpush1.msra.mxu0 %v201
  %1631 = vmatprep.subr.mxu0 %v198
  %1632 = vmatpush1.msra.mxu0 %v197
  %1633 = vmatprep.subr.mxu0 %v194
  %1634 = vmatpush1.msra.mxu0 %v193
  %1635 = vmatprep.subr.mxu0 %v190
  %1636 = vmatpush1.msra.mxu0 %v189
  %1637 = vmatprep.subr.mxu0 %v186
  %1638 = vmatpush1.msra.mxu0 %v185
  %1639 = vmatprep.subr.mxu0 %v182
  %1640 = vmatpush1.msra.mxu0 %v181
  %1641 = vmatprep.subr.mxu0 %v178
  %1642 = vmatpush1.msra.mxu0 %v177
  %1643 = vmatprep.subr.mxu0 %v174
  %1644 = vmatpush1.msra.mxu0 %v173
  %1645 = vmatprep.subr.mxu0 %v170
  %1646 = vmatpush1.msra.mxu0 %v169
  %1647 = vmatprep.subr.mxu0 %v166
  %1648 = vmatpush1.msra.mxu0 %v165
  %1649 = vmatprep.subr.mxu0 %v162
  %1650 = vmatpush1.msra.mxu0 %v161
  %1651 = vmatprep.subr.mxu0 %v158
  %1652 = vmatpush1.msra.mxu0 %v157
  %1653 = vmatprep.subr.mxu0 %v154
  %1654 = vmatpush1.msra.mxu0 %v153
  %1655 = vmatprep.subr.mxu0 %v150
  %1656 = vmatpush1.msra.mxu0 %v149
  %1657 = vmatprep.subr.mxu0 %v146
  %1658 = vmatpush1.msra.mxu0 %v145
  %1659 = vmatprep.subr.mxu0 %v142
  %1660 = vmatpush1.msra.mxu0 %v141
  %1661 = vmatprep.subr.mxu0 0.0
  %1662 = vmatpush2.msra.mxu0 0.0
  %1663 = vmatprep.subr.mxu0 0.0
  %1664 = vmatpush2.msra.mxu0 0.0
  %1665 = vmatprep.subr.mxu0 0.0
  %1666 = vmatpush2.msra.mxu0 0.0
  %1667 = vmatprep.subr.mxu0 0.0
  %1668 = vmatpush2.msra.mxu0 0.0
  %1669 = vmatprep.subr.mxu0 0.0
  %1670 = vmatpush2.msra.mxu0 0.0
  %1671 = vmatprep.subr.mxu0 0.0
  %1672 = vmatpush2.msra.mxu0 0.0
  %1673 = vmatprep.subr.mxu0 0.0
  %1674 = vmatpush2.msra.mxu0 0.0
  %1675 = vmatprep.subr.mxu0 0.0
  %1676 = vmatpush2.msra.mxu0 0.0
  %1677 = vmatprep.subr.mxu0 0.0
  %1678 = vmatpush2.msra.mxu0 0.0
  %1679 = vmatprep.subr.mxu0 0.0
  %1680 = vmatpush2.msra.mxu0 0.0
  %1681 = vmatprep.subr.mxu0 0.0
  %1682 = vmatpush2.msra.mxu0 0.0
  %1683 = vmatprep.subr.mxu0 0.0
  %1684 = vmatpush2.msra.mxu0 0.0
  %1685 = vmatprep.subr.mxu0 0.0
  %1686 = vmatpush2.msra.mxu0 0.0
  %1687 = vmatprep.subr.mxu0 0.0
  %1688 = vmatpush2.msra.mxu0 0.0
  %1689 = vmatprep.subr.mxu0 0.0
  %1690 = vmatpush2.msra.mxu0 0.0
  %1691 = vmatprep.subr.mxu0 0.0
  %1692 = vmatpush2.msra.mxu0 0.0
  %1693 = vmatprep.mubr.f32.mxu0 0.0
  %1694 = vmatmul.mubr.f32.gmra.mxu0 %v1556
  %v1695 = vpop.f32.mrf.mxu0
  %v1696 = vadd.f32 0.0, %v1695
  %v1697 = vpop.f32.mrf.mxu0
  %v1698 = vadd.f32 0.0, %v1697
  %1699 = vdwg.mxu0
  %v1700 = vadd.f32 %v1552, %v1625
  %v1701 = vadd.f32 %v1553, %v1627
  %v1702 = vadd.f32 %v1554, %v1696
  %v1703 = vadd.f32 %v1555, %v1698
  %v1704 = vxor.u32 %v1700, 2147483648
  %v1705 = vmul.f32 %v1704, 1.442695
  %v1706 = vpow.pop %v1705
  %v1707 = vadd.f32 %v1706, 1.0
  %v1708 = vrcp.pop %v1707
  %v1709 = vmul.f32 1.0, %v1708
  %v1710 = vxor.u32 %v1701, 2147483648
  %v1711 = vmul.f32 %v1710, 1.442695
  %v1712 = vpow.pop %v1711
  %v1713 = vadd.f32 %v1712, 1.0
  %v1714 = vrcp.pop %v1713
  %v1715 = vmul.f32 1.0, %v1714
  %v1716 = vtanh.pop %v1702
  %v1717 = vxor.u32 %v1703, 2147483648
  %v1718 = vmul.f32 %v1717, 1.442695
  %v1719 = vpow.pop %v1718
  %v1720 = vadd.f32 %v1719, 1.0
  %v1721 = vrcp.pop %v1720
  %v1722 = vmul.f32 1.0, %v1721
  %v1723 = vmul.f32 %v1715, %v1557
  %v1724 = vmul.f32 %v1709, %v1716
  %v1725 = vadd.f32 %v1723, %v1724
  %v1726 = vtanh.pop %v1725
  %v1727 = vmul.f32 %v1722, %v1726
  %s1728 = sadd.s32 %s74, 4
  %v1729 = vstv %s1728
  %vm1730 = vcmp.gt.s32.totalorder %v71, %v1729
  %v1731 = vsel %vm1730, 1, 0
  %1732 = vset.pattern.permute.xlu0 0
  %1733 = vperm.xlu0 %1732, %v1731
  %v1734 = vpop.permute.xlu0 %1733
  %vm1735 = vcmp.eq.s32.totalorder %v1734, 1
  %v1736 = vsel %vm1735, %v1727, %v1556
  %1737 = vst [vmem:[#allocation4] sm:$0xff] %v1736
  %v1738 = vld [vmem:[#allocation5] sm:$0xff]
  %v1739 = vsel %vm1735, %v1725, %v1738
  %1740 = vst [vmem:[#allocation5] sm:$0xff] %v1739
  %v1741 = vsel %vm1735, %v1727, 0.0
  %s1742 = scalar_lea.vmem %s60, 32
  %1743 = vst [vmem:[%s1742] sm:$0xff] %v1741
  %s1744 = scalar_lea.vmem %s1, 128
  %v1745 = vld [vmem:[%s1744] sm:$0xff]
  %v1746 = vld [vmem:[%s1744 + $0x8] sm:$0xff]
  %v1747 = vld [vmem:[%s1744 + $0x10] sm:$0xff]
  %v1748 = vld [vmem:[%s1744 + $0x18] sm:$0xff]
  %v1749 = vld [vmem:[#allocation2] sm:$0xff]
  %v1750 = vld [vmem:[#allocation3] sm:$0xff]
  %1751 = vmatprep.subr.mxu0 %v136
  %1752 = vmatpush1.msra.mxu0 %v135
  %1753 = vmatprep.subr.mxu0 %v132
  %1754 = vmatpush1.msra.mxu0 %v131
  %1755 = vmatprep.subr.mxu0 %v128
  %1756 = vmatpush1.msra.mxu0 %v127
  %1757 = vmatprep.subr.mxu0 %v124
  %1758 = vmatpush1.msra.mxu0 %v123
  %1759 = vmatprep.subr.mxu0 %v120
  %1760 = vmatpush1.msra.mxu0 %v119
  %1761 = vmatprep.subr.mxu0 %v116
  %1762 = vmatpush1.msra.mxu0 %v115
  %1763 = vmatprep.subr.mxu0 %v112
  %1764 = vmatpush1.msra.mxu0 %v111
  %1765 = vmatprep.subr.mxu0 %v108
  %1766 = vmatpush1.msra.mxu0 %v107
  %1767 = vmatprep.subr.mxu0 %v104
  %1768 = vmatpush1.msra.mxu0 %v103
  %1769 = vmatprep.subr.mxu0 %v100
  %1770 = vmatpush1.msra.mxu0 %v99
  %1771 = vmatprep.subr.mxu0 %v96
  %1772 = vmatpush1.msra.mxu0 %v95
  %1773 = vmatprep.subr.mxu0 %v92
  %1774 = vmatpush1.msra.mxu0 %v91
  %1775 = vmatprep.subr.mxu0 %v88
  %1776 = vmatpush1.msra.mxu0 %v87
  %1777 = vmatprep.subr.mxu0 %v84
  %1778 = vmatpush1.msra.mxu0 %v83
  %1779 = vmatprep.subr.mxu0 %v80
  %1780 = vmatpush1.msra.mxu0 %v79
  %1781 = vmatprep.subr.mxu0 %v76
  %1782 = vmatpush1.msra.mxu0 %v75
  %1783 = vmatprep.subr.mxu0 0.0
  %1784 = vmatpush2.msra.mxu0 0.0
  %1785 = vmatprep.subr.mxu0 0.0
  %1786 = vmatpush2.msra.mxu0 0.0
  %1787 = vmatprep.subr.mxu0 0.0
  %1788 = vmatpush2.msra.mxu0 0.0
  %1789 = vmatprep.subr.mxu0 0.0
  %1790 = vmatpush2.msra.mxu0 0.0
  %1791 = vmatprep.subr.mxu0 0.0
  %1792 = vmatpush2.msra.mxu0 0.0
  %1793 = vmatprep.subr.mxu0 0.0
  %1794 = vmatpush2.msra.mxu0 0.0
  %1795 = vmatprep.subr.mxu0 0.0
  %1796 = vmatpush2.msra.mxu0 0.0
  %1797 = vmatprep.subr.mxu0 0.0
  %1798 = vmatpush2.msra.mxu0 0.0
  %1799 = vmatprep.subr.mxu0 0.0
  %1800 = vmatpush2.msra.mxu0 0.0
  %1801 = vmatprep.subr.mxu0 0.0
  %1802 = vmatpush2.msra.mxu0 0.0
  %1803 = vmatprep.subr.mxu0 0.0
  %1804 = vmatpush2.msra.mxu0 0.0
  %1805 = vmatprep.subr.mxu0 0.0
  %1806 = vmatpush2.msra.mxu0 0.0
  %1807 = vmatprep.subr.mxu0 0.0
  %1808 = vmatpush2.msra.mxu0 0.0
  %1809 = vmatprep.subr.mxu0 0.0
  %1810 = vmatpush2.msra.mxu0 0.0
  %1811 = vmatprep.subr.mxu0 0.0
  %1812 = vmatpush2.msra.mxu0 0.0
  %1813 = vmatprep.subr.mxu0 0.0
  %1814 = vmatpush2.msra.mxu0 0.0
  %1815 = vmatprep.mubr.f32.mxu0 0.0
  %1816 = vmatmul.mubr.f32.gmra.mxu0 %v1749
  %v1817 = vpop.f32.mrf.mxu0
  %v1818 = vadd.f32 0.0, %v1817
  %v1819 = vpop.f32.mrf.mxu0
  %v1820 = vadd.f32 0.0, %v1819
  %1821 = vdwg.mxu0
  %1822 = vmatprep.subr.mxu0 %v138
  %1823 = vmatpush1.msra.mxu0 %v137
  %1824 = vmatprep.subr.mxu0 %v134
  %1825 = vmatpush1.msra.mxu0 %v133
  %1826 = vmatprep.subr.mxu0 %v130
  %1827 = vmatpush1.msra.mxu0 %v129
  %1828 = vmatprep.subr.mxu0 %v126
  %1829 = vmatpush1.msra.mxu0 %v125
  %1830 = vmatprep.subr.mxu0 %v122
  %1831 = vmatpush1.msra.mxu0 %v121
  %1832 = vmatprep.subr.mxu0 %v118
  %1833 = vmatpush1.msra.mxu0 %v117
  %1834 = vmatprep.subr.mxu0 %v114
  %1835 = vmatpush1.msra.mxu0 %v113
  %1836 = vmatprep.subr.mxu0 %v110
  %1837 = vmatpush1.msra.mxu0 %v109
  %1838 = vmatprep.subr.mxu0 %v106
  %1839 = vmatpush1.msra.mxu0 %v105
  %1840 = vmatprep.subr.mxu0 %v102
  %1841 = vmatpush1.msra.mxu0 %v101
  %1842 = vmatprep.subr.mxu0 %v98
  %1843 = vmatpush1.msra.mxu0 %v97
  %1844 = vmatprep.subr.mxu0 %v94
  %1845 = vmatpush1.msra.mxu0 %v93
  %1846 = vmatprep.subr.mxu0 %v90
  %1847 = vmatpush1.msra.mxu0 %v89
  %1848 = vmatprep.subr.mxu0 %v86
  %1849 = vmatpush1.msra.mxu0 %v85
  %1850 = vmatprep.subr.mxu0 %v82
  %1851 = vmatpush1.msra.mxu0 %v81
  %1852 = vmatprep.subr.mxu0 %v78
  %1853 = vmatpush1.msra.mxu0 %v77
  %1854 = vmatprep.subr.mxu0 0.0
  %1855 = vmatpush2.msra.mxu0 0.0
  %1856 = vmatprep.subr.mxu0 0.0
  %1857 = vmatpush2.msra.mxu0 0.0
  %1858 = vmatprep.subr.mxu0 0.0
  %1859 = vmatpush2.msra.mxu0 0.0
  %1860 = vmatprep.subr.mxu0 0.0
  %1861 = vmatpush2.msra.mxu0 0.0
  %1862 = vmatprep.subr.mxu0 0.0
  %1863 = vmatpush2.msra.mxu0 0.0
  %1864 = vmatprep.subr.mxu0 0.0
  %1865 = vmatpush2.msra.mxu0 0.0
  %1866 = vmatprep.subr.mxu0 0.0
  %1867 = vmatpush2.msra.mxu0 0.0
  %1868 = vmatprep.subr.mxu0 0.0
  %1869 = vmatpush2.msra.mxu0 0.0
  %1870 = vmatprep.subr.mxu0 0.0
  %1871 = vmatpush2.msra.mxu0 0.0
  %1872 = vmatprep.subr.mxu0 0.0
  %1873 = vmatpush2.msra.mxu0 0.0
  %1874 = vmatprep.subr.mxu0 0.0
  %1875 = vmatpush2.msra.mxu0 0.0
  %1876 = vmatprep.subr.mxu0 0.0
  %1877 = vmatpush2.msra.mxu0 0.0
  %1878 = vmatprep.subr.mxu0 0.0
  %1879 = vmatpush2.msra.mxu0 0.0
  %1880 = vmatprep.subr.mxu0 0.0
  %1881 = vmatpush2.msra.mxu0 0.0
  %1882 = vmatprep.subr.mxu0 0.0
  %1883 = vmatpush2.msra.mxu0 0.0
  %1884 = vmatprep.subr.mxu0 0.0
  %1885 = vmatpush2.msra.mxu0 0.0
  %1886 = vmatprep.mubr.f32.mxu0 0.0
  %1887 = vmatmul.mubr.f32.gmra.mxu0 %v1749
  %v1888 = vpop.f32.mrf.mxu0
  %v1889 = vadd.f32 0.0, %v1888
  %v1890 = vpop.f32.mrf.mxu0
  %v1891 = vadd.f32 0.0, %v1890
  %1892 = vdwg.mxu0
  %v1893 = vadd.f32 %v1745, %v1818
  %v1894 = vadd.f32 %v1746, %v1820
  %v1895 = vadd.f32 %v1747, %v1889
  %v1896 = vadd.f32 %v1748, %v1891
  %v1897 = vxor.u32 %v1893, 2147483648
  %v1898 = vmul.f32 %v1897, 1.442695
  %v1899 = vpow.pop %v1898
  %v1900 = vadd.f32 %v1899, 1.0
  %v1901 = vrcp.pop %v1900
  %v1902 = vmul.f32 1.0, %v1901
  %v1903 = vxor.u32 %v1894, 2147483648
  %v1904 = vmul.f32 %v1903, 1.442695
  %v1905 = vpow.pop %v1904
  %v1906 = vadd.f32 %v1905, 1.0
  %v1907 = vrcp.pop %v1906
  %v1908 = vmul.f32 1.0, %v1907
  %v1909 = vtanh.pop %v1895
  %v1910 = vxor.u32 %v1896, 2147483648
  %v1911 = vmul.f32 %v1910, 1.442695
  %v1912 = vpow.pop %v1911
  %v1913 = vadd.f32 %v1912, 1.0
  %v1914 = vrcp.pop %v1913
  %v1915 = vmul.f32 1.0, %v1914
  %v1916 = vmul.f32 %v1908, %v1750
  %v1917 = vmul.f32 %v1902, %v1909
  %v1918 = vadd.f32 %v1916, %v1917
  %v1919 = vtanh.pop %v1918
  %v1920 = vmul.f32 %v1915, %v1919
  %s1921 = sadd.s32 %s72, 4
  %v1922 = vstv %s1921
  %vm1923 = vcmp.gt.s32.totalorder %v71, %v1922
  %v1924 = vsel %vm1923, 1, 0
  %1925 = vset.pattern.permute.xlu0 0
  %1926 = vperm.xlu0 %1925, %v1924
  %v1927 = vpop.permute.xlu0 %1926
  %vm1928 = vcmp.eq.s32.totalorder %v1927, 1
  %v1929 = vsel %vm1928, %v1920, %v1749
  %1930 = vst [vmem:[#allocation2] sm:$0xff] %v1929
  %v1931 = vld [vmem:[#allocation3] sm:$0xff]
  %v1932 = vsel %vm1928, %v1918, %v1931
  %1933 = vst [vmem:[#allocation3] sm:$0xff] %v1932
  %v1934 = vsel %vm1928, %v1920, 0.0
  %s1935 = scalar_lea.vmem %s5, 32
  %1936 = vst [vmem:[%s1935] sm:$0xff] %v1934
  %s1937 = scalar_lea.vmem %s52, 96
  %v1938 = vld [vmem:[%s1937] sm:$0xff]
  %v1939 = vld [vmem:[%s1937 + $0x8] sm:$0xff]
  %v1940 = vld [vmem:[%s1937 + $0x10] sm:$0xff]
  %v1941 = vld [vmem:[%s1937 + $0x18] sm:$0xff]
  %v1942 = vld [vmem:[#allocation4] sm:$0xff]
  %v1943 = vld [vmem:[#allocation5] sm:$0xff]
  %1944 = vmatprep.subr.mxu0 %v200
  %1945 = vmatpush1.msra.mxu0 %v199
  %1946 = vmatprep.subr.mxu0 %v196
  %1947 = vmatpush1.msra.mxu0 %v195
  %1948 = vmatprep.subr.mxu0 %v192
  %1949 = vmatpush1.msra.mxu0 %v191
  %1950 = vmatprep.subr.mxu0 %v188
  %1951 = vmatpush1.msra.mxu0 %v187
  %1952 = vmatprep.subr.mxu0 %v184
  %1953 = vmatpush1.msra.mxu0 %v183
  %1954 = vmatprep.subr.mxu0 %v180
  %1955 = vmatpush1.msra.mxu0 %v179
  %1956 = vmatprep.subr.mxu0 %v176
  %1957 = vmatpush1.msra.mxu0 %v175
  %1958 = vmatprep.subr.mxu0 %v172
  %1959 = vmatpush1.msra.mxu0 %v171
  %1960 = vmatprep.subr.mxu0 %v168
  %1961 = vmatpush1.msra.mxu0 %v167
  %1962 = vmatprep.subr.mxu0 %v164
  %1963 = vmatpush1.msra.mxu0 %v163
  %1964 = vmatprep.subr.mxu0 %v160
  %1965 = vmatpush1.msra.mxu0 %v159
  %1966 = vmatprep.subr.mxu0 %v156
  %1967 = vmatpush1.msra.mxu0 %v155
  %1968 = vmatprep.subr.mxu0 %v152
  %1969 = vmatpush1.msra.mxu0 %v151
  %1970 = vmatprep.subr.mxu0 %v148
  %1971 = vmatpush1.msra.mxu0 %v147
  %1972 = vmatprep.subr.mxu0 %v144
  %1973 = vmatpush1.msra.mxu0 %v143
  %1974 = vmatprep.subr.mxu0 %v140
  %1975 = vmatpush1.msra.mxu0 %v139
  %1976 = vmatprep.subr.mxu0 0.0
  %1977 = vmatpush2.msra.mxu0 0.0
  %1978 = vmatprep.subr.mxu0 0.0
  %1979 = vmatpush2.msra.mxu0 0.0
  %1980 = vmatprep.subr.mxu0 0.0
  %1981 = vmatpush2.msra.mxu0 0.0
  %1982 = vmatprep.subr.mxu0 0.0
  %1983 = vmatpush2.msra.mxu0 0.0
  %1984 = vmatprep.subr.mxu0 0.0
  %1985 = vmatpush2.msra.mxu0 0.0
  %1986 = vmatprep.subr.mxu0 0.0
  %1987 = vmatpush2.msra.mxu0 0.0
  %1988 = vmatprep.subr.mxu0 0.0
  %1989 = vmatpush2.msra.mxu0 0.0
  %1990 = vmatprep.subr.mxu0 0.0
  %1991 = vmatpush2.msra.mxu0 0.0
  %1992 = vmatprep.subr.mxu0 0.0
  %1993 = vmatpush2.msra.mxu0 0.0
  %1994 = vmatprep.subr.mxu0 0.0
  %1995 = vmatpush2.msra.mxu0 0.0
  %1996 = vmatprep.subr.mxu0 0.0
  %1997 = vmatpush2.msra.mxu0 0.0
  %1998 = vmatprep.subr.mxu0 0.0
  %1999 = vmatpush2.msra.mxu0 0.0
  %2000 = vmatprep.subr.mxu0 0.0
  %2001 = vmatpush2.msra.mxu0 0.0
  %2002 = vmatprep.subr.mxu0 0.0
  %2003 = vmatpush2.msra.mxu0 0.0
  %2004 = vmatprep.subr.mxu0 0.0
  %2005 = vmatpush2.msra.mxu0 0.0
  %2006 = vmatprep.subr.mxu0 0.0
  %2007 = vmatpush2.msra.mxu0 0.0
  %2008 = vmatprep.mubr.f32.mxu0 0.0
  %2009 = vmatmul.mubr.f32.gmra.mxu0 %v1942
  %v2010 = vpop.f32.mrf.mxu0
  %v2011 = vadd.f32 0.0, %v2010
  %v2012 = vpop.f32.mrf.mxu0
  %v2013 = vadd.f32 0.0, %v2012
  %2014 = vdwg.mxu0
  %2015 = vmatprep.subr.mxu0 %v202
  %2016 = vmatpush1.msra.mxu0 %v201
  %2017 = vmatprep.subr.mxu0 %v198
  %2018 = vmatpush1.msra.mxu0 %v197
  %2019 = vmatprep.subr.mxu0 %v194
  %2020 = vmatpush1.msra.mxu0 %v193
  %2021 = vmatprep.subr.mxu0 %v190
  %2022 = vmatpush1.msra.mxu0 %v189
  %2023 = vmatprep.subr.mxu0 %v186
  %2024 = vmatpush1.msra.mxu0 %v185
  %2025 = vmatprep.subr.mxu0 %v182
  %2026 = vmatpush1.msra.mxu0 %v181
  %2027 = vmatprep.subr.mxu0 %v178
  %2028 = vmatpush1.msra.mxu0 %v177
  %2029 = vmatprep.subr.mxu0 %v174
  %2030 = vmatpush1.msra.mxu0 %v173
  %2031 = vmatprep.subr.mxu0 %v170
  %2032 = vmatpush1.msra.mxu0 %v169
  %2033 = vmatprep.subr.mxu0 %v166
  %2034 = vmatpush1.msra.mxu0 %v165
  %2035 = vmatprep.subr.mxu0 %v162
  %2036 = vmatpush1.msra.mxu0 %v161
  %2037 = vmatprep.subr.mxu0 %v158
  %2038 = vmatpush1.msra.mxu0 %v157
  %2039 = vmatprep.subr.mxu0 %v154
  %2040 = vmatpush1.msra.mxu0 %v153
  %2041 = vmatprep.subr.mxu0 %v150
  %2042 = vmatpush1.msra.mxu0 %v149
  %2043 = vmatprep.subr.mxu0 %v146
  %2044 = vmatpush1.msra.mxu0 %v145
  %2045 = vmatprep.subr.mxu0 %v142
  %2046 = vmatpush1.msra.mxu0 %v141
  %2047 = vmatprep.subr.mxu0 0.0
  %2048 = vmatpush2.msra.mxu0 0.0
  %2049 = vmatprep.subr.mxu0 0.0
  %2050 = vmatpush2.msra.mxu0 0.0
  %2051 = vmatprep.subr.mxu0 0.0
  %2052 = vmatpush2.msra.mxu0 0.0
  %2053 = vmatprep.subr.mxu0 0.0
  %2054 = vmatpush2.msra.mxu0 0.0
  %2055 = vmatprep.subr.mxu0 0.0
  %2056 = vmatpush2.msra.mxu0 0.0
  %2057 = vmatprep.subr.mxu0 0.0
  %2058 = vmatpush2.msra.mxu0 0.0
  %2059 = vmatprep.subr.mxu0 0.0
  %2060 = vmatpush2.msra.mxu0 0.0
  %2061 = vmatprep.subr.mxu0 0.0
  %2062 = vmatpush2.msra.mxu0 0.0
  %2063 = vmatprep.subr.mxu0 0.0
  %2064 = vmatpush2.msra.mxu0 0.0
  %2065 = vmatprep.subr.mxu0 0.0
  %2066 = vmatpush2.msra.mxu0 0.0
  %2067 = vmatprep.subr.mxu0 0.0
  %2068 = vmatpush2.msra.mxu0 0.0
  %2069 = vmatprep.subr.mxu0 0.0
  %2070 = vmatpush2.msra.mxu0 0.0
  %2071 = vmatprep.subr.mxu0 0.0
  %2072 = vmatpush2.msra.mxu0 0.0
  %2073 = vmatprep.subr.mxu0 0.0
  %2074 = vmatpush2.msra.mxu0 0.0
  %2075 = vmatprep.subr.mxu0 0.0
  %2076 = vmatpush2.msra.mxu0 0.0
  %2077 = vmatprep.subr.mxu0 0.0
  %2078 = vmatpush2.msra.mxu0 0.0
  %2079 = vmatprep.mubr.f32.mxu0 0.0
  %2080 = vmatmul.mubr.f32.gmra.mxu0 %v1942
  %v2081 = vpop.f32.mrf.mxu0
  %v2082 = vadd.f32 0.0, %v2081
  %v2083 = vpop.f32.mrf.mxu0
  %v2084 = vadd.f32 0.0, %v2083
  %2085 = vdwg.mxu0
  %v2086 = vadd.f32 %v1938, %v2011
  %v2087 = vadd.f32 %v1939, %v2013
  %v2088 = vadd.f32 %v1940, %v2082
  %v2089 = vadd.f32 %v1941, %v2084
  %v2090 = vxor.u32 %v2086, 2147483648
  %v2091 = vmul.f32 %v2090, 1.442695
  %v2092 = vpow.pop %v2091
  %v2093 = vadd.f32 %v2092, 1.0
  %v2094 = vrcp.pop %v2093
  %v2095 = vmul.f32 1.0, %v2094
  %v2096 = vxor.u32 %v2087, 2147483648
  %v2097 = vmul.f32 %v2096, 1.442695
  %v2098 = vpow.pop %v2097
  %v2099 = vadd.f32 %v2098, 1.0
  %v2100 = vrcp.pop %v2099
  %v2101 = vmul.f32 1.0, %v2100
  %v2102 = vtanh.pop %v2088
  %v2103 = vxor.u32 %v2089, 2147483648
  %v2104 = vmul.f32 %v2103, 1.442695
  %v2105 = vpow.pop %v2104
  %v2106 = vadd.f32 %v2105, 1.0
  %v2107 = vrcp.pop %v2106
  %v2108 = vmul.f32 1.0, %v2107
  %v2109 = vmul.f32 %v2101, %v1943
  %v2110 = vmul.f32 %v2095, %v2102
  %v2111 = vadd.f32 %v2109, %v2110
  %v2112 = vtanh.pop %v2111
  %v2113 = vmul.f32 %v2108, %v2112
  %s2114 = sadd.s32 %s74, 3
  %v2115 = vstv %s2114
  %vm2116 = vcmp.gt.s32.totalorder %v71, %v2115
  %v2117 = vsel %vm2116, 1, 0
  %2118 = vset.pattern.permute.xlu0 0
  %2119 = vperm.xlu0 %2118, %v2117
  %v2120 = vpop.permute.xlu0 %2119
  %vm2121 = vcmp.eq.s32.totalorder %v2120, 1
  %v2122 = vsel %vm2121, %v2113, %v1942
  %2123 = vst [vmem:[#allocation4] sm:$0xff] %v2122
  %v2124 = vld [vmem:[#allocation5] sm:$0xff]
  %v2125 = vsel %vm2121, %v2111, %v2124
  %2126 = vst [vmem:[#allocation5] sm:$0xff] %v2125
  %v2127 = vsel %vm2121, %v2113, 0.0
  %s2128 = scalar_lea.vmem %s60, 24
  %2129 = vst [vmem:[%s2128] sm:$0xff] %v2127
  %s2130 = scalar_lea.vmem %s1, 160
  %v2131 = vld [vmem:[%s2130] sm:$0xff]
  %v2132 = vld [vmem:[%s2130 + $0x8] sm:$0xff]
  %v2133 = vld [vmem:[%s2130 + $0x10] sm:$0xff]
  %v2134 = vld [vmem:[%s2130 + $0x18] sm:$0xff]
  %v2135 = vld [vmem:[#allocation2] sm:$0xff]
  %v2136 = vld [vmem:[#allocation3] sm:$0xff]
  %2137 = vmatprep.subr.mxu0 %v136
  %2138 = vmatpush1.msra.mxu0 %v135
  %2139 = vmatprep.subr.mxu0 %v132
  %2140 = vmatpush1.msra.mxu0 %v131
  %2141 = vmatprep.subr.mxu0 %v128
  %2142 = vmatpush1.msra.mxu0 %v127
  %2143 = vmatprep.subr.mxu0 %v124
  %2144 = vmatpush1.msra.mxu0 %v123
  %2145 = vmatprep.subr.mxu0 %v120
  %2146 = vmatpush1.msra.mxu0 %v119
  %2147 = vmatprep.subr.mxu0 %v116
  %2148 = vmatpush1.msra.mxu0 %v115
  %2149 = vmatprep.subr.mxu0 %v112
  %2150 = vmatpush1.msra.mxu0 %v111
  %2151 = vmatprep.subr.mxu0 %v108
  %2152 = vmatpush1.msra.mxu0 %v107
  %2153 = vmatprep.subr.mxu0 %v104
  %2154 = vmatpush1.msra.mxu0 %v103
  %2155 = vmatprep.subr.mxu0 %v100
  %2156 = vmatpush1.msra.mxu0 %v99
  %2157 = vmatprep.subr.mxu0 %v96
  %2158 = vmatpush1.msra.mxu0 %v95
  %2159 = vmatprep.subr.mxu0 %v92
  %2160 = vmatpush1.msra.mxu0 %v91
  %2161 = vmatprep.subr.mxu0 %v88
  %2162 = vmatpush1.msra.mxu0 %v87
  %2163 = vmatprep.subr.mxu0 %v84
  %2164 = vmatpush1.msra.mxu0 %v83
  %2165 = vmatprep.subr.mxu0 %v80
  %2166 = vmatpush1.msra.mxu0 %v79
  %2167 = vmatprep.subr.mxu0 %v76
  %2168 = vmatpush1.msra.mxu0 %v75
  %2169 = vmatprep.subr.mxu0 0.0
  %2170 = vmatpush2.msra.mxu0 0.0
  %2171 = vmatprep.subr.mxu0 0.0
  %2172 = vmatpush2.msra.mxu0 0.0
  %2173 = vmatprep.subr.mxu0 0.0
  %2174 = vmatpush2.msra.mxu0 0.0
  %2175 = vmatprep.subr.mxu0 0.0
  %2176 = vmatpush2.msra.mxu0 0.0
  %2177 = vmatprep.subr.mxu0 0.0
  %2178 = vmatpush2.msra.mxu0 0.0
  %2179 = vmatprep.subr.mxu0 0.0
  %2180 = vmatpush2.msra.mxu0 0.0
  %2181 = vmatprep.subr.mxu0 0.0
  %2182 = vmatpush2.msra.mxu0 0.0
  %2183 = vmatprep.subr.mxu0 0.0
  %2184 = vmatpush2.msra.mxu0 0.0
  %2185 = vmatprep.subr.mxu0 0.0
  %2186 = vmatpush2.msra.mxu0 0.0
  %2187 = vmatprep.subr.mxu0 0.0
  %2188 = vmatpush2.msra.mxu0 0.0
  %2189 = vmatprep.subr.mxu0 0.0
  %2190 = vmatpush2.msra.mxu0 0.0
  %2191 = vmatprep.subr.mxu0 0.0
  %2192 = vmatpush2.msra.mxu0 0.0
  %2193 = vmatprep.subr.mxu0 0.0
  %2194 = vmatpush2.msra.mxu0 0.0
  %2195 = vmatprep.subr.mxu0 0.0
  %2196 = vmatpush2.msra.mxu0 0.0
  %2197 = vmatprep.subr.mxu0 0.0
  %2198 = vmatpush2.msra.mxu0 0.0
  %2199 = vmatprep.subr.mxu0 0.0
  %2200 = vmatpush2.msra.mxu0 0.0
  %2201 = vmatprep.mubr.f32.mxu0 0.0
  %2202 = vmatmul.mubr.f32.gmra.mxu0 %v2135
  %v2203 = vpop.f32.mrf.mxu0
  %v2204 = vadd.f32 0.0, %v2203
  %v2205 = vpop.f32.mrf.mxu0
  %v2206 = vadd.f32 0.0, %v2205
  %2207 = vdwg.mxu0
  %2208 = vmatprep.subr.mxu0 %v138
  %2209 = vmatpush1.msra.mxu0 %v137
  %2210 = vmatprep.subr.mxu0 %v134
  %2211 = vmatpush1.msra.mxu0 %v133
  %2212 = vmatprep.subr.mxu0 %v130
  %2213 = vmatpush1.msra.mxu0 %v129
  %2214 = vmatprep.subr.mxu0 %v126
  %2215 = vmatpush1.msra.mxu0 %v125
  %2216 = vmatprep.subr.mxu0 %v122
  %2217 = vmatpush1.msra.mxu0 %v121
  %2218 = vmatprep.subr.mxu0 %v118
  %2219 = vmatpush1.msra.mxu0 %v117
  %2220 = vmatprep.subr.mxu0 %v114
  %2221 = vmatpush1.msra.mxu0 %v113
  %2222 = vmatprep.subr.mxu0 %v110
  %2223 = vmatpush1.msra.mxu0 %v109
  %2224 = vmatprep.subr.mxu0 %v106
  %2225 = vmatpush1.msra.mxu0 %v105
  %2226 = vmatprep.subr.mxu0 %v102
  %2227 = vmatpush1.msra.mxu0 %v101
  %2228 = vmatprep.subr.mxu0 %v98
  %2229 = vmatpush1.msra.mxu0 %v97
  %2230 = vmatprep.subr.mxu0 %v94
  %2231 = vmatpush1.msra.mxu0 %v93
  %2232 = vmatprep.subr.mxu0 %v90
  %2233 = vmatpush1.msra.mxu0 %v89
  %2234 = vmatprep.subr.mxu0 %v86
  %2235 = vmatpush1.msra.mxu0 %v85
  %2236 = vmatprep.subr.mxu0 %v82
  %2237 = vmatpush1.msra.mxu0 %v81
  %2238 = vmatprep.subr.mxu0 %v78
  %2239 = vmatpush1.msra.mxu0 %v77
  %2240 = vmatprep.subr.mxu0 0.0
  %2241 = vmatpush2.msra.mxu0 0.0
  %2242 = vmatprep.subr.mxu0 0.0
  %2243 = vmatpush2.msra.mxu0 0.0
  %2244 = vmatprep.subr.mxu0 0.0
  %2245 = vmatpush2.msra.mxu0 0.0
  %2246 = vmatprep.subr.mxu0 0.0
  %2247 = vmatpush2.msra.mxu0 0.0
  %2248 = vmatprep.subr.mxu0 0.0
  %2249 = vmatpush2.msra.mxu0 0.0
  %2250 = vmatprep.subr.mxu0 0.0
  %2251 = vmatpush2.msra.mxu0 0.0
  %2252 = vmatprep.subr.mxu0 0.0
  %2253 = vmatpush2.msra.mxu0 0.0
  %2254 = vmatprep.subr.mxu0 0.0
  %2255 = vmatpush2.msra.mxu0 0.0
  %2256 = vmatprep.subr.mxu0 0.0
  %2257 = vmatpush2.msra.mxu0 0.0
  %2258 = vmatprep.subr.mxu0 0.0
  %2259 = vmatpush2.msra.mxu0 0.0
  %2260 = vmatprep.subr.mxu0 0.0
  %2261 = vmatpush2.msra.mxu0 0.0
  %2262 = vmatprep.subr.mxu0 0.0
  %2263 = vmatpush2.msra.mxu0 0.0
  %2264 = vmatprep.subr.mxu0 0.0
  %2265 = vmatpush2.msra.mxu0 0.0
  %2266 = vmatprep.subr.mxu0 0.0
  %2267 = vmatpush2.msra.mxu0 0.0
  %2268 = vmatprep.subr.mxu0 0.0
  %2269 = vmatpush2.msra.mxu0 0.0
  %2270 = vmatprep.subr.mxu0 0.0
  %2271 = vmatpush2.msra.mxu0 0.0
  %2272 = vmatprep.mubr.f32.mxu0 0.0
  %2273 = vmatmul.mubr.f32.gmra.mxu0 %v2135
  %v2274 = vpop.f32.mrf.mxu0
  %v2275 = vadd.f32 0.0, %v2274
  %v2276 = vpop.f32.mrf.mxu0
  %v2277 = vadd.f32 0.0, %v2276
  %2278 = vdwg.mxu0
  %v2279 = vadd.f32 %v2131, %v2204
  %v2280 = vadd.f32 %v2132, %v2206
  %v2281 = vadd.f32 %v2133, %v2275
  %v2282 = vadd.f32 %v2134, %v2277
  %v2283 = vxor.u32 %v2279, 2147483648
  %v2284 = vmul.f32 %v2283, 1.442695
  %v2285 = vpow.pop %v2284
  %v2286 = vadd.f32 %v2285, 1.0
  %v2287 = vrcp.pop %v2286
  %v2288 = vmul.f32 1.0, %v2287
  %v2289 = vxor.u32 %v2280, 2147483648
  %v2290 = vmul.f32 %v2289, 1.442695
  %v2291 = vpow.pop %v2290
  %v2292 = vadd.f32 %v2291, 1.0
  %v2293 = vrcp.pop %v2292
  %v2294 = vmul.f32 1.0, %v2293
  %v2295 = vtanh.pop %v2281
  %v2296 = vxor.u32 %v2282, 2147483648
  %v2297 = vmul.f32 %v2296, 1.442695
  %v2298 = vpow.pop %v2297
  %v2299 = vadd.f32 %v2298, 1.0
  %v2300 = vrcp.pop %v2299
  %v2301 = vmul.f32 1.0, %v2300
  %v2302 = vmul.f32 %v2294, %v2136
  %v2303 = vmul.f32 %v2288, %v2295
  %v2304 = vadd.f32 %v2302, %v2303
  %v2305 = vtanh.pop %v2304
  %v2306 = vmul.f32 %v2301, %v2305
  %s2307 = sadd.s32 %s72, 5
  %v2308 = vstv %s2307
  %vm2309 = vcmp.gt.s32.totalorder %v71, %v2308
  %v2310 = vsel %vm2309, 1, 0
  %2311 = vset.pattern.permute.xlu0 0
  %2312 = vperm.xlu0 %2311, %v2310
  %v2313 = vpop.permute.xlu0 %2312
  %vm2314 = vcmp.eq.s32.totalorder %v2313, 1
  %v2315 = vsel %vm2314, %v2306, %v2135
  %2316 = vst [vmem:[#allocation2] sm:$0xff] %v2315
  %v2317 = vld [vmem:[#allocation3] sm:$0xff]
  %v2318 = vsel %vm2314, %v2304, %v2317
  %2319 = vst [vmem:[#allocation3] sm:$0xff] %v2318
  %v2320 = vsel %vm2314, %v2306, 0.0
  %s2321 = scalar_lea.vmem %s5, 40
  %2322 = vst [vmem:[%s2321] sm:$0xff] %v2320
  %s2323 = scalar_lea.vmem %s52, 64
  %v2324 = vld [vmem:[%s2323] sm:$0xff]
  %v2325 = vld [vmem:[%s2323 + $0x8] sm:$0xff]
  %v2326 = vld [vmem:[%s2323 + $0x10] sm:$0xff]
  %v2327 = vld [vmem:[%s2323 + $0x18] sm:$0xff]
  %v2328 = vld [vmem:[#allocation4] sm:$0xff]
  %v2329 = vld [vmem:[#allocation5] sm:$0xff]
  %2330 = vmatprep.subr.mxu0 %v200
  %2331 = vmatpush1.msra.mxu0 %v199
  %2332 = vmatprep.subr.mxu0 %v196
  %2333 = vmatpush1.msra.mxu0 %v195
  %2334 = vmatprep.subr.mxu0 %v192
  %2335 = vmatpush1.msra.mxu0 %v191
  %2336 = vmatprep.subr.mxu0 %v188
  %2337 = vmatpush1.msra.mxu0 %v187
  %2338 = vmatprep.subr.mxu0 %v184
  %2339 = vmatpush1.msra.mxu0 %v183
  %2340 = vmatprep.subr.mxu0 %v180
  %2341 = vmatpush1.msra.mxu0 %v179
  %2342 = vmatprep.subr.mxu0 %v176
  %2343 = vmatpush1.msra.mxu0 %v175
  %2344 = vmatprep.subr.mxu0 %v172
  %2345 = vmatpush1.msra.mxu0 %v171
  %2346 = vmatprep.subr.mxu0 %v168
  %2347 = vmatpush1.msra.mxu0 %v167
  %2348 = vmatprep.subr.mxu0 %v164
  %2349 = vmatpush1.msra.mxu0 %v163
  %2350 = vmatprep.subr.mxu0 %v160
  %2351 = vmatpush1.msra.mxu0 %v159
  %2352 = vmatprep.subr.mxu0 %v156
  %2353 = vmatpush1.msra.mxu0 %v155
  %2354 = vmatprep.subr.mxu0 %v152
  %2355 = vmatpush1.msra.mxu0 %v151
  %2356 = vmatprep.subr.mxu0 %v148
  %2357 = vmatpush1.msra.mxu0 %v147
  %2358 = vmatprep.subr.mxu0 %v144
  %2359 = vmatpush1.msra.mxu0 %v143
  %2360 = vmatprep.subr.mxu0 %v140
  %2361 = vmatpush1.msra.mxu0 %v139
  %2362 = vmatprep.subr.mxu0 0.0
  %2363 = vmatpush2.msra.mxu0 0.0
  %2364 = vmatprep.subr.mxu0 0.0
  %2365 = vmatpush2.msra.mxu0 0.0
  %2366 = vmatprep.subr.mxu0 0.0
  %2367 = vmatpush2.msra.mxu0 0.0
  %2368 = vmatprep.subr.mxu0 0.0
  %2369 = vmatpush2.msra.mxu0 0.0
  %2370 = vmatprep.subr.mxu0 0.0
  %2371 = vmatpush2.msra.mxu0 0.0
  %2372 = vmatprep.subr.mxu0 0.0
  %2373 = vmatpush2.msra.mxu0 0.0
  %2374 = vmatprep.subr.mxu0 0.0
  %2375 = vmatpush2.msra.mxu0 0.0
  %2376 = vmatprep.subr.mxu0 0.0
  %2377 = vmatpush2.msra.mxu0 0.0
  %2378 = vmatprep.subr.mxu0 0.0
  %2379 = vmatpush2.msra.mxu0 0.0
  %2380 = vmatprep.subr.mxu0 0.0
  %2381 = vmatpush2.msra.mxu0 0.0
  %2382 = vmatprep.subr.mxu0 0.0
  %2383 = vmatpush2.msra.mxu0 0.0
  %2384 = vmatprep.subr.mxu0 0.0
  %2385 = vmatpush2.msra.mxu0 0.0
  %2386 = vmatprep.subr.mxu0 0.0
  %2387 = vmatpush2.msra.mxu0 0.0
  %2388 = vmatprep.subr.mxu0 0.0
  %2389 = vmatpush2.msra.mxu0 0.0
  %2390 = vmatprep.subr.mxu0 0.0
  %2391 = vmatpush2.msra.mxu0 0.0
  %2392 = vmatprep.subr.mxu0 0.0
  %2393 = vmatpush2.msra.mxu0 0.0
  %2394 = vmatprep.mubr.f32.mxu0 0.0
  %2395 = vmatmul.mubr.f32.gmra.mxu0 %v2328
  %v2396 = vpop.f32.mrf.mxu0
  %v2397 = vadd.f32 0.0, %v2396
  %v2398 = vpop.f32.mrf.mxu0
  %v2399 = vadd.f32 0.0, %v2398
  %2400 = vdwg.mxu0
  %2401 = vmatprep.subr.mxu0 %v202
  %2402 = vmatpush1.msra.mxu0 %v201
  %2403 = vmatprep.subr.mxu0 %v198
  %2404 = vmatpush1.msra.mxu0 %v197
  %2405 = vmatprep.subr.mxu0 %v194
  %2406 = vmatpush1.msra.mxu0 %v193
  %2407 = vmatprep.subr.mxu0 %v190
  %2408 = vmatpush1.msra.mxu0 %v189
  %2409 = vmatprep.subr.mxu0 %v186
  %2410 = vmatpush1.msra.mxu0 %v185
  %2411 = vmatprep.subr.mxu0 %v182
  %2412 = vmatpush1.msra.mxu0 %v181
  %2413 = vmatprep.subr.mxu0 %v178
  %2414 = vmatpush1.msra.mxu0 %v177
  %2415 = vmatprep.subr.mxu0 %v174
  %2416 = vmatpush1.msra.mxu0 %v173
  %2417 = vmatprep.subr.mxu0 %v170
  %2418 = vmatpush1.msra.mxu0 %v169
  %2419 = vmatprep.subr.mxu0 %v166
  %2420 = vmatpush1.msra.mxu0 %v165
  %2421 = vmatprep.subr.mxu0 %v162
  %2422 = vmatpush1.msra.mxu0 %v161
  %2423 = vmatprep.subr.mxu0 %v158
  %2424 = vmatpush1.msra.mxu0 %v157
  %2425 = vmatprep.subr.mxu0 %v154
  %2426 = vmatpush1.msra.mxu0 %v153
  %2427 = vmatprep.subr.mxu0 %v150
  %2428 = vmatpush1.msra.mxu0 %v149
  %2429 = vmatprep.subr.mxu0 %v146
  %2430 = vmatpush1.msra.mxu0 %v145
  %2431 = vmatprep.subr.mxu0 %v142
  %2432 = vmatpush1.msra.mxu0 %v141
  %2433 = vmatprep.subr.mxu0 0.0
  %2434 = vmatpush2.msra.mxu0 0.0
  %2435 = vmatprep.subr.mxu0 0.0
  %2436 = vmatpush2.msra.mxu0 0.0
  %2437 = vmatprep.subr.mxu0 0.0
  %2438 = vmatpush2.msra.mxu0 0.0
  %2439 = vmatprep.subr.mxu0 0.0
  %2440 = vmatpush2.msra.mxu0 0.0
  %2441 = vmatprep.subr.mxu0 0.0
  %2442 = vmatpush2.msra.mxu0 0.0
  %2443 = vmatprep.subr.mxu0 0.0
  %2444 = vmatpush2.msra.mxu0 0.0
  %2445 = vmatprep.subr.mxu0 0.0
  %2446 = vmatpush2.msra.mxu0 0.0
  %2447 = vmatprep.subr.mxu0 0.0
  %2448 = vmatpush2.msra.mxu0 0.0
  %2449 = vmatprep.subr.mxu0 0.0
  %2450 = vmatpush2.msra.mxu0 0.0
  %2451 = vmatprep.subr.mxu0 0.0
  %2452 = vmatpush2.msra.mxu0 0.0
  %2453 = vmatprep.subr.mxu0 0.0
  %2454 = vmatpush2.msra.mxu0 0.0
  %2455 = vmatprep.subr.mxu0 0.0
  %2456 = vmatpush2.msra.mxu0 0.0
  %2457 = vmatprep.subr.mxu0 0.0
  %2458 = vmatpush2.msra.mxu0 0.0
  %2459 = vmatprep.subr.mxu0 0.0
  %2460 = vmatpush2.msra.mxu0 0.0
  %2461 = vmatprep.subr.mxu0 0.0
  %2462 = vmatpush2.msra.mxu0 0.0
  %2463 = vmatprep.subr.mxu0 0.0
  %2464 = vmatpush2.msra.mxu0 0.0
  %2465 = vmatprep.mubr.f32.mxu0 0.0
  %2466 = vmatmul.mubr.f32.gmra.mxu0 %v2328
  %v2467 = vpop.f32.mrf.mxu0
  %v2468 = vadd.f32 0.0, %v2467
  %v2469 = vpop.f32.mrf.mxu0
  %v2470 = vadd.f32 0.0, %v2469
  %2471 = vdwg.mxu0
  %v2472 = vadd.f32 %v2324, %v2397
  %v2473 = vadd.f32 %v2325, %v2399
  %v2474 = vadd.f32 %v2326, %v2468
  %v2475 = vadd.f32 %v2327, %v2470
  %v2476 = vxor.u32 %v2472, 2147483648
  %v2477 = vmul.f32 %v2476, 1.442695
  %v2478 = vpow.pop %v2477
  %v2479 = vadd.f32 %v2478, 1.0
  %v2480 = vrcp.pop %v2479
  %v2481 = vmul.f32 1.0, %v2480
  %v2482 = vxor.u32 %v2473, 2147483648
  %v2483 = vmul.f32 %v2482, 1.442695
  %v2484 = vpow.pop %v2483
  %v2485 = vadd.f32 %v2484, 1.0
  %v2486 = vrcp.pop %v2485
  %v2487 = vmul.f32 1.0, %v2486
  %v2488 = vtanh.pop %v2474
  %v2489 = vxor.u32 %v2475, 2147483648
  %v2490 = vmul.f32 %v2489, 1.442695
  %v2491 = vpow.pop %v2490
  %v2492 = vadd.f32 %v2491, 1.0
  %v2493 = vrcp.pop %v2492
  %v2494 = vmul.f32 1.0, %v2493
  %v2495 = vmul.f32 %v2487, %v2329
  %v2496 = vmul.f32 %v2481, %v2488
  %v2497 = vadd.f32 %v2495, %v2496
  %v2498 = vtanh.pop %v2497
  %v2499 = vmul.f32 %v2494, %v2498
  %s2500 = sadd.s32 %s74, 2
  %v2501 = vstv %s2500
  %vm2502 = vcmp.gt.s32.totalorder %v71, %v2501
  %v2503 = vsel %vm2502, 1, 0
  %2504 = vset.pattern.permute.xlu0 0
  %2505 = vperm.xlu0 %2504, %v2503
  %v2506 = vpop.permute.xlu0 %2505
  %vm2507 = vcmp.eq.s32.totalorder %v2506, 1
  %v2508 = vsel %vm2507, %v2499, %v2328
  %2509 = vst [vmem:[#allocation4] sm:$0xff] %v2508
  %v2510 = vld [vmem:[#allocation5] sm:$0xff]
  %v2511 = vsel %vm2507, %v2497, %v2510
  %2512 = vst [vmem:[#allocation5] sm:$0xff] %v2511
  %v2513 = vsel %vm2507, %v2499, 0.0
  %s2514 = scalar_lea.vmem %s60, 16
  %2515 = vst [vmem:[%s2514] sm:$0xff] %v2513
  %s2516 = scalar_lea.vmem %s1, 192
  %v2517 = vld [vmem:[%s2516] sm:$0xff]
  %v2518 = vld [vmem:[%s2516 + $0x8] sm:$0xff]
  %v2519 = vld [vmem:[%s2516 + $0x10] sm:$0xff]
  %v2520 = vld [vmem:[%s2516 + $0x18] sm:$0xff]
  %v2521 = vld [vmem:[#allocation2] sm:$0xff]
  %v2522 = vld [vmem:[#allocation3] sm:$0xff]
  %2523 = vmatprep.subr.mxu0 %v136
  %2524 = vmatpush1.msra.mxu0 %v135
  %2525 = vmatprep.subr.mxu0 %v132
  %2526 = vmatpush1.msra.mxu0 %v131
  %2527 = vmatprep.subr.mxu0 %v128
  %2528 = vmatpush1.msra.mxu0 %v127
  %2529 = vmatprep.subr.mxu0 %v124
  %2530 = vmatpush1.msra.mxu0 %v123
  %2531 = vmatprep.subr.mxu0 %v120
  %2532 = vmatpush1.msra.mxu0 %v119
  %2533 = vmatprep.subr.mxu0 %v116
  %2534 = vmatpush1.msra.mxu0 %v115
  %2535 = vmatprep.subr.mxu0 %v112
  %2536 = vmatpush1.msra.mxu0 %v111
  %2537 = vmatprep.subr.mxu0 %v108
  %2538 = vmatpush1.msra.mxu0 %v107
  %2539 = vmatprep.subr.mxu0 %v104
  %2540 = vmatpush1.msra.mxu0 %v103
  %2541 = vmatprep.subr.mxu0 %v100
  %2542 = vmatpush1.msra.mxu0 %v99
  %2543 = vmatprep.subr.mxu0 %v96
  %2544 = vmatpush1.msra.mxu0 %v95
  %2545 = vmatprep.subr.mxu0 %v92
  %2546 = vmatpush1.msra.mxu0 %v91
  %2547 = vmatprep.subr.mxu0 %v88
  %2548 = vmatpush1.msra.mxu0 %v87
  %2549 = vmatprep.subr.mxu0 %v84
  %2550 = vmatpush1.msra.mxu0 %v83
  %2551 = vmatprep.subr.mxu0 %v80
  %2552 = vmatpush1.msra.mxu0 %v79
  %2553 = vmatprep.subr.mxu0 %v76
  %2554 = vmatpush1.msra.mxu0 %v75
  %2555 = vmatprep.subr.mxu0 0.0
  %2556 = vmatpush2.msra.mxu0 0.0
  %2557 = vmatprep.subr.mxu0 0.0
  %2558 = vmatpush2.msra.mxu0 0.0
  %2559 = vmatprep.subr.mxu0 0.0
  %2560 = vmatpush2.msra.mxu0 0.0
  %2561 = vmatprep.subr.mxu0 0.0
  %2562 = vmatpush2.msra.mxu0 0.0
  %2563 = vmatprep.subr.mxu0 0.0
  %2564 = vmatpush2.msra.mxu0 0.0
  %2565 = vmatprep.subr.mxu0 0.0
  %2566 = vmatpush2.msra.mxu0 0.0
  %2567 = vmatprep.subr.mxu0 0.0
  %2568 = vmatpush2.msra.mxu0 0.0
  %2569 = vmatprep.subr.mxu0 0.0
  %2570 = vmatpush2.msra.mxu0 0.0
  %2571 = vmatprep.subr.mxu0 0.0
  %2572 = vmatpush2.msra.mxu0 0.0
  %2573 = vmatprep.subr.mxu0 0.0
  %2574 = vmatpush2.msra.mxu0 0.0
  %2575 = vmatprep.subr.mxu0 0.0
  %2576 = vmatpush2.msra.mxu0 0.0
  %2577 = vmatprep.subr.mxu0 0.0
  %2578 = vmatpush2.msra.mxu0 0.0
  %2579 = vmatprep.subr.mxu0 0.0
  %2580 = vmatpush2.msra.mxu0 0.0
  %2581 = vmatprep.subr.mxu0 0.0
  %2582 = vmatpush2.msra.mxu0 0.0
  %2583 = vmatprep.subr.mxu0 0.0
  %2584 = vmatpush2.msra.mxu0 0.0
  %2585 = vmatprep.subr.mxu0 0.0
  %2586 = vmatpush2.msra.mxu0 0.0
  %2587 = vmatprep.mubr.f32.mxu0 0.0
  %2588 = vmatmul.mubr.f32.gmra.mxu0 %v2521
  %v2589 = vpop.f32.mrf.mxu0
  %v2590 = vadd.f32 0.0, %v2589
  %v2591 = vpop.f32.mrf.mxu0
  %v2592 = vadd.f32 0.0, %v2591
  %2593 = vdwg.mxu0
  %2594 = vmatprep.subr.mxu0 %v138
  %2595 = vmatpush1.msra.mxu0 %v137
  %2596 = vmatprep.subr.mxu0 %v134
  %2597 = vmatpush1.msra.mxu0 %v133
  %2598 = vmatprep.subr.mxu0 %v130
  %2599 = vmatpush1.msra.mxu0 %v129
  %2600 = vmatprep.subr.mxu0 %v126
  %2601 = vmatpush1.msra.mxu0 %v125
  %2602 = vmatprep.subr.mxu0 %v122
  %2603 = vmatpush1.msra.mxu0 %v121
  %2604 = vmatprep.subr.mxu0 %v118
  %2605 = vmatpush1.msra.mxu0 %v117
  %2606 = vmatprep.subr.mxu0 %v114
  %2607 = vmatpush1.msra.mxu0 %v113
  %2608 = vmatprep.subr.mxu0 %v110
  %2609 = vmatpush1.msra.mxu0 %v109
  %2610 = vmatprep.subr.mxu0 %v106
  %2611 = vmatpush1.msra.mxu0 %v105
  %2612 = vmatprep.subr.mxu0 %v102
  %2613 = vmatpush1.msra.mxu0 %v101
  %2614 = vmatprep.subr.mxu0 %v98
  %2615 = vmatpush1.msra.mxu0 %v97
  %2616 = vmatprep.subr.mxu0 %v94
  %2617 = vmatpush1.msra.mxu0 %v93
  %2618 = vmatprep.subr.mxu0 %v90
  %2619 = vmatpush1.msra.mxu0 %v89
  %2620 = vmatprep.subr.mxu0 %v86
  %2621 = vmatpush1.msra.mxu0 %v85
  %2622 = vmatprep.subr.mxu0 %v82
  %2623 = vmatpush1.msra.mxu0 %v81
  %2624 = vmatprep.subr.mxu0 %v78
  %2625 = vmatpush1.msra.mxu0 %v77
  %2626 = vmatprep.subr.mxu0 0.0
  %2627 = vmatpush2.msra.mxu0 0.0
  %2628 = vmatprep.subr.mxu0 0.0
  %2629 = vmatpush2.msra.mxu0 0.0
  %2630 = vmatprep.subr.mxu0 0.0
  %2631 = vmatpush2.msra.mxu0 0.0
  %2632 = vmatprep.subr.mxu0 0.0
  %2633 = vmatpush2.msra.mxu0 0.0
  %2634 = vmatprep.subr.mxu0 0.0
  %2635 = vmatpush2.msra.mxu0 0.0
  %2636 = vmatprep.subr.mxu0 0.0
  %2637 = vmatpush2.msra.mxu0 0.0
  %2638 = vmatprep.subr.mxu0 0.0
  %2639 = vmatpush2.msra.mxu0 0.0
  %2640 = vmatprep.subr.mxu0 0.0
  %2641 = vmatpush2.msra.mxu0 0.0
  %2642 = vmatprep.subr.mxu0 0.0
  %2643 = vmatpush2.msra.mxu0 0.0
  %2644 = vmatprep.subr.mxu0 0.0
  %2645 = vmatpush2.msra.mxu0 0.0
  %2646 = vmatprep.subr.mxu0 0.0
  %2647 = vmatpush2.msra.mxu0 0.0
  %2648 = vmatprep.subr.mxu0 0.0
  %2649 = vmatpush2.msra.mxu0 0.0
  %2650 = vmatprep.subr.mxu0 0.0
  %2651 = vmatpush2.msra.mxu0 0.0
  %2652 = vmatprep.subr.mxu0 0.0
  %2653 = vmatpush2.msra.mxu0 0.0
  %2654 = vmatprep.subr.mxu0 0.0
  %2655 = vmatpush2.msra.mxu0 0.0
  %2656 = vmatprep.subr.mxu0 0.0
  %2657 = vmatpush2.msra.mxu0 0.0
  %2658 = vmatprep.mubr.f32.mxu0 0.0
  %2659 = vmatmul.mubr.f32.gmra.mxu0 %v2521
  %v2660 = vpop.f32.mrf.mxu0
  %v2661 = vadd.f32 0.0, %v2660
  %v2662 = vpop.f32.mrf.mxu0
  %v2663 = vadd.f32 0.0, %v2662
  %2664 = vdwg.mxu0
  %v2665 = vadd.f32 %v2517, %v2590
  %v2666 = vadd.f32 %v2518, %v2592
  %v2667 = vadd.f32 %v2519, %v2661
  %v2668 = vadd.f32 %v2520, %v2663
  %v2669 = vxor.u32 %v2665, 2147483648
  %v2670 = vmul.f32 %v2669, 1.442695
  %v2671 = vpow.pop %v2670
  %v2672 = vadd.f32 %v2671, 1.0
  %v2673 = vrcp.pop %v2672
  %v2674 = vmul.f32 1.0, %v2673
  %v2675 = vxor.u32 %v2666, 2147483648
  %v2676 = vmul.f32 %v2675, 1.442695
  %v2677 = vpow.pop %v2676
  %v2678 = vadd.f32 %v2677, 1.0
  %v2679 = vrcp.pop %v2678
  %v2680 = vmul.f32 1.0, %v2679
  %v2681 = vtanh.pop %v2667
  %v2682 = vxor.u32 %v2668, 2147483648
  %v2683 = vmul.f32 %v2682, 1.442695
  %v2684 = vpow.pop %v2683
  %v2685 = vadd.f32 %v2684, 1.0
  %v2686 = vrcp.pop %v2685
  %v2687 = vmul.f32 1.0, %v2686
  %v2688 = vmul.f32 %v2680, %v2522
  %v2689 = vmul.f32 %v2674, %v2681
  %v2690 = vadd.f32 %v2688, %v2689
  %v2691 = vtanh.pop %v2690
  %v2692 = vmul.f32 %v2687, %v2691
  %s2693 = sadd.s32 %s72, 6
  %v2694 = vstv %s2693
  %vm2695 = vcmp.gt.s32.totalorder %v71, %v2694
  %v2696 = vsel %vm2695, 1, 0
  %2697 = vset.pattern.permute.xlu0 0
  %2698 = vperm.xlu0 %2697, %v2696
  %v2699 = vpop.permute.xlu0 %2698
  %vm2700 = vcmp.eq.s32.totalorder %v2699, 1
  %v2701 = vsel %vm2700, %v2692, %v2521
  %2702 = vst [vmem:[#allocation2] sm:$0xff] %v2701
  %v2703 = vld [vmem:[#allocation3] sm:$0xff]
  %v2704 = vsel %vm2700, %v2690, %v2703
  %2705 = vst [vmem:[#allocation3] sm:$0xff] %v2704
  %v2706 = vsel %vm2700, %v2692, 0.0
  %s2707 = scalar_lea.vmem %s5, 48
  %2708 = vst [vmem:[%s2707] sm:$0xff] %v2706
  %s2709 = scalar_lea.vmem %s52, 32
  %v2710 = vld [vmem:[%s2709] sm:$0xff]
  %v2711 = vld [vmem:[%s2709 + $0x8] sm:$0xff]
  %v2712 = vld [vmem:[%s2709 + $0x10] sm:$0xff]
  %v2713 = vld [vmem:[%s2709 + $0x18] sm:$0xff]
  %v2714 = vld [vmem:[#allocation4] sm:$0xff]
  %v2715 = vld [vmem:[#allocation5] sm:$0xff]
  %2716 = vmatprep.subr.mxu0 %v200
  %2717 = vmatpush1.msra.mxu0 %v199
  %2718 = vmatprep.subr.mxu0 %v196
  %2719 = vmatpush1.msra.mxu0 %v195
  %2720 = vmatprep.subr.mxu0 %v192
  %2721 = vmatpush1.msra.mxu0 %v191
  %2722 = vmatprep.subr.mxu0 %v188
  %2723 = vmatpush1.msra.mxu0 %v187
  %2724 = vmatprep.subr.mxu0 %v184
  %2725 = vmatpush1.msra.mxu0 %v183
  %2726 = vmatprep.subr.mxu0 %v180
  %2727 = vmatpush1.msra.mxu0 %v179
  %2728 = vmatprep.subr.mxu0 %v176
  %2729 = vmatpush1.msra.mxu0 %v175
  %2730 = vmatprep.subr.mxu0 %v172
  %2731 = vmatpush1.msra.mxu0 %v171
  %2732 = vmatprep.subr.mxu0 %v168
  %2733 = vmatpush1.msra.mxu0 %v167
  %2734 = vmatprep.subr.mxu0 %v164
  %2735 = vmatpush1.msra.mxu0 %v163
  %2736 = vmatprep.subr.mxu0 %v160
  %2737 = vmatpush1.msra.mxu0 %v159
  %2738 = vmatprep.subr.mxu0 %v156
  %2739 = vmatpush1.msra.mxu0 %v155
  %2740 = vmatprep.subr.mxu0 %v152
  %2741 = vmatpush1.msra.mxu0 %v151
  %2742 = vmatprep.subr.mxu0 %v148
  %2743 = vmatpush1.msra.mxu0 %v147
  %2744 = vmatprep.subr.mxu0 %v144
  %2745 = vmatpush1.msra.mxu0 %v143
  %2746 = vmatprep.subr.mxu0 %v140
  %2747 = vmatpush1.msra.mxu0 %v139
  %2748 = vmatprep.subr.mxu0 0.0
  %2749 = vmatpush2.msra.mxu0 0.0
  %2750 = vmatprep.subr.mxu0 0.0
  %2751 = vmatpush2.msra.mxu0 0.0
  %2752 = vmatprep.subr.mxu0 0.0
  %2753 = vmatpush2.msra.mxu0 0.0
  %2754 = vmatprep.subr.mxu0 0.0
  %2755 = vmatpush2.msra.mxu0 0.0
  %2756 = vmatprep.subr.mxu0 0.0
  %2757 = vmatpush2.msra.mxu0 0.0
  %2758 = vmatprep.subr.mxu0 0.0
  %2759 = vmatpush2.msra.mxu0 0.0
  %2760 = vmatprep.subr.mxu0 0.0
  %2761 = vmatpush2.msra.mxu0 0.0
  %2762 = vmatprep.subr.mxu0 0.0
  %2763 = vmatpush2.msra.mxu0 0.0
  %2764 = vmatprep.subr.mxu0 0.0
  %2765 = vmatpush2.msra.mxu0 0.0
  %2766 = vmatprep.subr.mxu0 0.0
  %2767 = vmatpush2.msra.mxu0 0.0
  %2768 = vmatprep.subr.mxu0 0.0
  %2769 = vmatpush2.msra.mxu0 0.0
  %2770 = vmatprep.subr.mxu0 0.0
  %2771 = vmatpush2.msra.mxu0 0.0
  %2772 = vmatprep.subr.mxu0 0.0
  %2773 = vmatpush2.msra.mxu0 0.0
  %2774 = vmatprep.subr.mxu0 0.0
  %2775 = vmatpush2.msra.mxu0 0.0
  %2776 = vmatprep.subr.mxu0 0.0
  %2777 = vmatpush2.msra.mxu0 0.0
  %2778 = vmatprep.subr.mxu0 0.0
  %2779 = vmatpush2.msra.mxu0 0.0
  %2780 = vmatprep.mubr.f32.mxu0 0.0
  %2781 = vmatmul.mubr.f32.gmra.mxu0 %v2714
  %v2782 = vpop.f32.mrf.mxu0
  %v2783 = vadd.f32 0.0, %v2782
  %v2784 = vpop.f32.mrf.mxu0
  %v2785 = vadd.f32 0.0, %v2784
  %2786 = vdwg.mxu0
  %2787 = vmatprep.subr.mxu0 %v202
  %2788 = vmatpush1.msra.mxu0 %v201
  %2789 = vmatprep.subr.mxu0 %v198
  %2790 = vmatpush1.msra.mxu0 %v197
  %2791 = vmatprep.subr.mxu0 %v194
  %2792 = vmatpush1.msra.mxu0 %v193
  %2793 = vmatprep.subr.mxu0 %v190
  %2794 = vmatpush1.msra.mxu0 %v189
  %2795 = vmatprep.subr.mxu0 %v186
  %2796 = vmatpush1.msra.mxu0 %v185
  %2797 = vmatprep.subr.mxu0 %v182
  %2798 = vmatpush1.msra.mxu0 %v181
  %2799 = vmatprep.subr.mxu0 %v178
  %2800 = vmatpush1.msra.mxu0 %v177
  %2801 = vmatprep.subr.mxu0 %v174
  %2802 = vmatpush1.msra.mxu0 %v173
  %2803 = vmatprep.subr.mxu0 %v170
  %2804 = vmatpush1.msra.mxu0 %v169
  %2805 = vmatprep.subr.mxu0 %v166
  %2806 = vmatpush1.msra.mxu0 %v165
  %2807 = vmatprep.subr.mxu0 %v162
  %2808 = vmatpush1.msra.mxu0 %v161
  %2809 = vmatprep.subr.mxu0 %v158
  %2810 = vmatpush1.msra.mxu0 %v157
  %2811 = vmatprep.subr.mxu0 %v154
  %2812 = vmatpush1.msra.mxu0 %v153
  %2813 = vmatprep.subr.mxu0 %v150
  %2814 = vmatpush1.msra.mxu0 %v149
  %2815 = vmatprep.subr.mxu0 %v146
  %2816 = vmatpush1.msra.mxu0 %v145
  %2817 = vmatprep.subr.mxu0 %v142
  %2818 = vmatpush1.msra.mxu0 %v141
  %2819 = vmatprep.subr.mxu0 0.0
  %2820 = vmatpush2.msra.mxu0 0.0
  %2821 = vmatprep.subr.mxu0 0.0
  %2822 = vmatpush2.msra.mxu0 0.0
  %2823 = vmatprep.subr.mxu0 0.0
  %2824 = vmatpush2.msra.mxu0 0.0
  %2825 = vmatprep.subr.mxu0 0.0
  %2826 = vmatpush2.msra.mxu0 0.0
  %2827 = vmatprep.subr.mxu0 0.0
  %2828 = vmatpush2.msra.mxu0 0.0
  %2829 = vmatprep.subr.mxu0 0.0
  %2830 = vmatpush2.msra.mxu0 0.0
  %2831 = vmatprep.subr.mxu0 0.0
  %2832 = vmatpush2.msra.mxu0 0.0
  %2833 = vmatprep.subr.mxu0 0.0
  %2834 = vmatpush2.msra.mxu0 0.0
  %2835 = vmatprep.subr.mxu0 0.0
  %2836 = vmatpush2.msra.mxu0 0.0
  %2837 = vmatprep.subr.mxu0 0.0
  %2838 = vmatpush2.msra.mxu0 0.0
  %2839 = vmatprep.subr.mxu0 0.0
  %2840 = vmatpush2.msra.mxu0 0.0
  %2841 = vmatprep.subr.mxu0 0.0
  %2842 = vmatpush2.msra.mxu0 0.0
  %2843 = vmatprep.subr.mxu0 0.0
  %2844 = vmatpush2.msra.mxu0 0.0
  %2845 = vmatprep.subr.mxu0 0.0
  %2846 = vmatpush2.msra.mxu0 0.0
  %2847 = vmatprep.subr.mxu0 0.0
  %2848 = vmatpush2.msra.mxu0 0.0
  %2849 = vmatprep.subr.mxu0 0.0
  %2850 = vmatpush2.msra.mxu0 0.0
  %2851 = vmatprep.mubr.f32.mxu0 0.0
  %2852 = vmatmul.mubr.f32.gmra.mxu0 %v2714
  %v2853 = vpop.f32.mrf.mxu0
  %v2854 = vadd.f32 0.0, %v2853
  %v2855 = vpop.f32.mrf.mxu0
  %v2856 = vadd.f32 0.0, %v2855
  %2857 = vdwg.mxu0
  %v2858 = vadd.f32 %v2710, %v2783
  %v2859 = vadd.f32 %v2711, %v2785
  %v2860 = vadd.f32 %v2712, %v2854
  %v2861 = vadd.f32 %v2713, %v2856
  %v2862 = vxor.u32 %v2858, 2147483648
  %v2863 = vmul.f32 %v2862, 1.442695
  %v2864 = vpow.pop %v2863
  %v2865 = vadd.f32 %v2864, 1.0
  %v2866 = vrcp.pop %v2865
  %v2867 = vmul.f32 1.0, %v2866
  %v2868 = vxor.u32 %v2859, 2147483648
  %v2869 = vmul.f32 %v2868, 1.442695
  %v2870 = vpow.pop %v2869
  %v2871 = vadd.f32 %v2870, 1.0
  %v2872 = vrcp.pop %v2871
  %v2873 = vmul.f32 1.0, %v2872
  %v2874 = vtanh.pop %v2860
  %v2875 = vxor.u32 %v2861, 2147483648
  %v2876 = vmul.f32 %v2875, 1.442695
  %v2877 = vpow.pop %v2876
  %v2878 = vadd.f32 %v2877, 1.0
  %v2879 = vrcp.pop %v2878
  %v2880 = vmul.f32 1.0, %v2879
  %v2881 = vmul.f32 %v2873, %v2715
  %v2882 = vmul.f32 %v2867, %v2874
  %v2883 = vadd.f32 %v2881, %v2882
  %v2884 = vtanh.pop %v2883
  %v2885 = vmul.f32 %v2880, %v2884
  %s2886 = sadd.s32 %s74, 1
  %v2887 = vstv %s2886
  %vm2888 = vcmp.gt.s32.totalorder %v71, %v2887
  %v2889 = vsel %vm2888, 1, 0
  %2890 = vset.pattern.permute.xlu0 0
  %2891 = vperm.xlu0 %2890, %v2889
  %v2892 = vpop.permute.xlu0 %2891
  %vm2893 = vcmp.eq.s32.totalorder %v2892, 1
  %v2894 = vsel %vm2893, %v2885, %v2714
  %2895 = vst [vmem:[#allocation4] sm:$0xff] %v2894
  %v2896 = vld [vmem:[#allocation5] sm:$0xff]
  %v2897 = vsel %vm2893, %v2883, %v2896
  %2898 = vst [vmem:[#allocation5] sm:$0xff] %v2897
  %v2899 = vsel %vm2893, %v2885, 0.0
  %s2900 = scalar_lea.vmem %s60, 8
  %2901 = vst [vmem:[%s2900] sm:$0xff] %v2899
  %s2902 = scalar_lea.vmem %s1, 224
  %v2903 = vld [vmem:[%s2902] sm:$0xff]
  %v2904 = vld [vmem:[%s2902 + $0x8] sm:$0xff]
  %v2905 = vld [vmem:[%s2902 + $0x10] sm:$0xff]
  %v2906 = vld [vmem:[%s2902 + $0x18] sm:$0xff]
  %v2907 = vld [vmem:[#allocation2] sm:$0xff]
  %v2908 = vld [vmem:[#allocation3] sm:$0xff]
  %2909 = vmatprep.subr.mxu0 %v136
  %2910 = vmatpush1.msra.mxu0 %v135
  %2911 = vmatprep.subr.mxu0 %v132
  %2912 = vmatpush1.msra.mxu0 %v131
  %2913 = vmatprep.subr.mxu0 %v128
  %2914 = vmatpush1.msra.mxu0 %v127
  %2915 = vmatprep.subr.mxu0 %v124
  %2916 = vmatpush1.msra.mxu0 %v123
  %2917 = vmatprep.subr.mxu0 %v120
  %2918 = vmatpush1.msra.mxu0 %v119
  %2919 = vmatprep.subr.mxu0 %v116
  %2920 = vmatpush1.msra.mxu0 %v115
  %2921 = vmatprep.subr.mxu0 %v112
  %2922 = vmatpush1.msra.mxu0 %v111
  %2923 = vmatprep.subr.mxu0 %v108
  %2924 = vmatpush1.msra.mxu0 %v107
  %2925 = vmatprep.subr.mxu0 %v104
  %2926 = vmatpush1.msra.mxu0 %v103
  %2927 = vmatprep.subr.mxu0 %v100
  %2928 = vmatpush1.msra.mxu0 %v99
  %2929 = vmatprep.subr.mxu0 %v96
  %2930 = vmatpush1.msra.mxu0 %v95
  %2931 = vmatprep.subr.mxu0 %v92
  %2932 = vmatpush1.msra.mxu0 %v91
  %2933 = vmatprep.subr.mxu0 %v88
  %2934 = vmatpush1.msra.mxu0 %v87
  %2935 = vmatprep.subr.mxu0 %v84
  %2936 = vmatpush1.msra.mxu0 %v83
  %2937 = vmatprep.subr.mxu0 %v80
  %2938 = vmatpush1.msra.mxu0 %v79
  %2939 = vmatprep.subr.mxu0 %v76
  %2940 = vmatpush1.msra.mxu0 %v75
  %2941 = vmatprep.subr.mxu0 0.0
  %2942 = vmatpush2.msra.mxu0 0.0
  %2943 = vmatprep.subr.mxu0 0.0
  %2944 = vmatpush2.msra.mxu0 0.0
  %2945 = vmatprep.subr.mxu0 0.0
  %2946 = vmatpush2.msra.mxu0 0.0
  %2947 = vmatprep.subr.mxu0 0.0
  %2948 = vmatpush2.msra.mxu0 0.0
  %2949 = vmatprep.subr.mxu0 0.0
  %2950 = vmatpush2.msra.mxu0 0.0
  %2951 = vmatprep.subr.mxu0 0.0
  %2952 = vmatpush2.msra.mxu0 0.0
  %2953 = vmatprep.subr.mxu0 0.0
  %2954 = vmatpush2.msra.mxu0 0.0
  %2955 = vmatprep.subr.mxu0 0.0
  %2956 = vmatpush2.msra.mxu0 0.0
  %2957 = vmatprep.subr.mxu0 0.0
  %2958 = vmatpush2.msra.mxu0 0.0
  %2959 = vmatprep.subr.mxu0 0.0
  %2960 = vmatpush2.msra.mxu0 0.0
  %2961 = vmatprep.subr.mxu0 0.0
  %2962 = vmatpush2.msra.mxu0 0.0
  %2963 = vmatprep.subr.mxu0 0.0
  %2964 = vmatpush2.msra.mxu0 0.0
  %2965 = vmatprep.subr.mxu0 0.0
  %2966 = vmatpush2.msra.mxu0 0.0
  %2967 = vmatprep.subr.mxu0 0.0
  %2968 = vmatpush2.msra.mxu0 0.0
  %2969 = vmatprep.subr.mxu0 0.0
  %2970 = vmatpush2.msra.mxu0 0.0
  %2971 = vmatprep.subr.mxu0 0.0
  %2972 = vmatpush2.msra.mxu0 0.0
  %2973 = vmatprep.mubr.f32.mxu0 0.0
  %2974 = vmatmul.mubr.f32.gmra.mxu0 %v2907
  %v2975 = vpop.f32.mrf.mxu0
  %v2976 = vadd.f32 0.0, %v2975
  %v2977 = vpop.f32.mrf.mxu0
  %v2978 = vadd.f32 0.0, %v2977
  %2979 = vdwg.mxu0
  %2980 = vmatprep.subr.mxu0 %v138
  %2981 = vmatpush1.msra.mxu0 %v137
  %2982 = vmatprep.subr.mxu0 %v134
  %2983 = vmatpush1.msra.mxu0 %v133
  %2984 = vmatprep.subr.mxu0 %v130
  %2985 = vmatpush1.msra.mxu0 %v129
  %2986 = vmatprep.subr.mxu0 %v126
  %2987 = vmatpush1.msra.mxu0 %v125
  %2988 = vmatprep.subr.mxu0 %v122
  %2989 = vmatpush1.msra.mxu0 %v121
  %2990 = vmatprep.subr.mxu0 %v118
  %2991 = vmatpush1.msra.mxu0 %v117
  %2992 = vmatprep.subr.mxu0 %v114
  %2993 = vmatpush1.msra.mxu0 %v113
  %2994 = vmatprep.subr.mxu0 %v110
  %2995 = vmatpush1.msra.mxu0 %v109
  %2996 = vmatprep.subr.mxu0 %v106
  %2997 = vmatpush1.msra.mxu0 %v105
  %2998 = vmatprep.subr.mxu0 %v102
  %2999 = vmatpush1.msra.mxu0 %v101
  %3000 = vmatprep.subr.mxu0 %v98
  %3001 = vmatpush1.msra.mxu0 %v97
  %3002 = vmatprep.subr.mxu0 %v94
  %3003 = vmatpush1.msra.mxu0 %v93
  %3004 = vmatprep.subr.mxu0 %v90
  %3005 = vmatpush1.msra.mxu0 %v89
  %3006 = vmatprep.subr.mxu0 %v86
  %3007 = vmatpush1.msra.mxu0 %v85
  %3008 = vmatprep.subr.mxu0 %v82
  %3009 = vmatpush1.msra.mxu0 %v81
  %3010 = vmatprep.subr.mxu0 %v78
  %3011 = vmatpush1.msra.mxu0 %v77
  %3012 = vmatprep.subr.mxu0 0.0
  %3013 = vmatpush2.msra.mxu0 0.0
  %3014 = vmatprep.subr.mxu0 0.0
  %3015 = vmatpush2.msra.mxu0 0.0
  %3016 = vmatprep.subr.mxu0 0.0
  %3017 = vmatpush2.msra.mxu0 0.0
  %3018 = vmatprep.subr.mxu0 0.0
  %3019 = vmatpush2.msra.mxu0 0.0
  %3020 = vmatprep.subr.mxu0 0.0
  %3021 = vmatpush2.msra.mxu0 0.0
  %3022 = vmatprep.subr.mxu0 0.0
  %3023 = vmatpush2.msra.mxu0 0.0
  %3024 = vmatprep.subr.mxu0 0.0
  %3025 = vmatpush2.msra.mxu0 0.0
  %3026 = vmatprep.subr.mxu0 0.0
  %3027 = vmatpush2.msra.mxu0 0.0
  %3028 = vmatprep.subr.mxu0 0.0
  %3029 = vmatpush2.msra.mxu0 0.0
  %3030 = vmatprep.subr.mxu0 0.0
  %3031 = vmatpush2.msra.mxu0 0.0
  %3032 = vmatprep.subr.mxu0 0.0
  %3033 = vmatpush2.msra.mxu0 0.0
  %3034 = vmatprep.subr.mxu0 0.0
  %3035 = vmatpush2.msra.mxu0 0.0
  %3036 = vmatprep.subr.mxu0 0.0
  %3037 = vmatpush2.msra.mxu0 0.0
  %3038 = vmatprep.subr.mxu0 0.0
  %3039 = vmatpush2.msra.mxu0 0.0
  %3040 = vmatprep.subr.mxu0 0.0
  %3041 = vmatpush2.msra.mxu0 0.0
  %3042 = vmatprep.subr.mxu0 0.0
  %3043 = vmatpush2.msra.mxu0 0.0
  %3044 = vmatprep.mubr.f32.mxu0 0.0
  %3045 = vmatmul.mubr.f32.gmra.mxu0 %v2907
  %v3046 = vpop.f32.mrf.mxu0
  %v3047 = vadd.f32 0.0, %v3046
  %v3048 = vpop.f32.mrf.mxu0
  %v3049 = vadd.f32 0.0, %v3048
  %3050 = vdwg.mxu0
  %v3051 = vadd.f32 %v2903, %v2976
  %v3052 = vadd.f32 %v2904, %v2978
  %v3053 = vadd.f32 %v2905, %v3047
  %v3054 = vadd.f32 %v2906, %v3049
  %v3055 = vxor.u32 %v3051, 2147483648
  %v3056 = vmul.f32 %v3055, 1.442695
  %v3057 = vpow.pop %v3056
  %v3058 = vadd.f32 %v3057, 1.0
  %v3059 = vrcp.pop %v3058
  %v3060 = vmul.f32 1.0, %v3059
  %v3061 = vxor.u32 %v3052, 2147483648
  %v3062 = vmul.f32 %v3061, 1.442695
  %v3063 = vpow.pop %v3062
  %v3064 = vadd.f32 %v3063, 1.0
  %v3065 = vrcp.pop %v3064
  %v3066 = vmul.f32 1.0, %v3065
  %v3067 = vtanh.pop %v3053
  %v3068 = vxor.u32 %v3054, 2147483648
  %v3069 = vmul.f32 %v3068, 1.442695
  %v3070 = vpow.pop %v3069
  %v3071 = vadd.f32 %v3070, 1.0
  %v3072 = vrcp.pop %v3071
  %v3073 = vmul.f32 1.0, %v3072
  %v3074 = vmul.f32 %v3066, %v2908
  %v3075 = vmul.f32 %v3060, %v3067
  %v3076 = vadd.f32 %v3074, %v3075
  %v3077 = vtanh.pop %v3076
  %v3078 = vmul.f32 %v3073, %v3077
  %s3079 = sadd.s32 %s72, 7
  %v3080 = vstv %s3079
  %vm3081 = vcmp.gt.s32.totalorder %v71, %v3080
  %v3082 = vsel %vm3081, 1, 0
  %3083 = vset.pattern.permute.xlu0 0
  %3084 = vperm.xlu0 %3083, %v3082
  %v3085 = vpop.permute.xlu0 %3084
  %vm3086 = vcmp.eq.s32.totalorder %v3085, 1
  %v3087 = vsel %vm3086, %v3078, %v2907
  %3088 = vst [vmem:[#allocation2] sm:$0xff] %v3087
  %v3089 = vld [vmem:[#allocation3] sm:$0xff]
  %v3090 = vsel %vm3086, %v3076, %v3089
  %3091 = vst [vmem:[#allocation3] sm:$0xff] %v3090
  %v3092 = vsel %vm3086, %v3078, 0.0
  %s3093 = scalar_lea.vmem %s5, 56
  %3094 = vst [vmem:[%s3093] sm:$0xff] %v3092
  %v3095 = vld [vmem:[%s52] sm:$0xff]
  %v3096 = vld [vmem:[%s52 + $0x8] sm:$0xff]
  %v3097 = vld [vmem:[%s52 + $0x10] sm:$0xff]
  %v3098 = vld [vmem:[%s52 + $0x18] sm:$0xff]
  %v3099 = vld [vmem:[#allocation4] sm:$0xff]
  %v3100 = vld [vmem:[#allocation5] sm:$0xff]
  %3101 = vmatprep.subr.mxu0 %v200
  %3102 = vmatpush1.msra.mxu0 %v199
  %3103 = vmatprep.subr.mxu0 %v196
  %3104 = vmatpush1.msra.mxu0 %v195
  %3105 = vmatprep.subr.mxu0 %v192
  %3106 = vmatpush1.msra.mxu0 %v191
  %3107 = vmatprep.subr.mxu0 %v188
  %3108 = vmatpush1.msra.mxu0 %v187
  %3109 = vmatprep.subr.mxu0 %v184
  %3110 = vmatpush1.msra.mxu0 %v183
  %3111 = vmatprep.subr.mxu0 %v180
  %3112 = vmatpush1.msra.mxu0 %v179
  %3113 = vmatprep.subr.mxu0 %v176
  %3114 = vmatpush1.msra.mxu0 %v175
  %3115 = vmatprep.subr.mxu0 %v172
  %3116 = vmatpush1.msra.mxu0 %v171
  %3117 = vmatprep.subr.mxu0 %v168
  %3118 = vmatpush1.msra.mxu0 %v167
  %3119 = vmatprep.subr.mxu0 %v164
  %3120 = vmatpush1.msra.mxu0 %v163
  %3121 = vmatprep.subr.mxu0 %v160
  %3122 = vmatpush1.msra.mxu0 %v159
  %3123 = vmatprep.subr.mxu0 %v156
  %3124 = vmatpush1.msra.mxu0 %v155
  %3125 = vmatprep.subr.mxu0 %v152
  %3126 = vmatpush1.msra.mxu0 %v151
  %3127 = vmatprep.subr.mxu0 %v148
  %3128 = vmatpush1.msra.mxu0 %v147
  %3129 = vmatprep.subr.mxu0 %v144
  %3130 = vmatpush1.msra.mxu0 %v143
  %3131 = vmatprep.subr.mxu0 %v140
  %3132 = vmatpush1.msra.mxu0 %v139
  %3133 = vmatprep.subr.mxu0 0.0
  %3134 = vmatpush2.msra.mxu0 0.0
  %3135 = vmatprep.subr.mxu0 0.0
  %3136 = vmatpush2.msra.mxu0 0.0
  %3137 = vmatprep.subr.mxu0 0.0
  %3138 = vmatpush2.msra.mxu0 0.0
  %3139 = vmatprep.subr.mxu0 0.0
  %3140 = vmatpush2.msra.mxu0 0.0
  %3141 = vmatprep.subr.mxu0 0.0
  %3142 = vmatpush2.msra.mxu0 0.0
  %3143 = vmatprep.subr.mxu0 0.0
  %3144 = vmatpush2.msra.mxu0 0.0
  %3145 = vmatprep.subr.mxu0 0.0
  %3146 = vmatpush2.msra.mxu0 0.0
  %3147 = vmatprep.subr.mxu0 0.0
  %3148 = vmatpush2.msra.mxu0 0.0
  %3149 = vmatprep.subr.mxu0 0.0
  %3150 = vmatpush2.msra.mxu0 0.0
  %3151 = vmatprep.subr.mxu0 0.0
  %3152 = vmatpush2.msra.mxu0 0.0
  %3153 = vmatprep.subr.mxu0 0.0
  %3154 = vmatpush2.msra.mxu0 0.0
  %3155 = vmatprep.subr.mxu0 0.0
  %3156 = vmatpush2.msra.mxu0 0.0
  %3157 = vmatprep.subr.mxu0 0.0
  %3158 = vmatpush2.msra.mxu0 0.0
  %3159 = vmatprep.subr.mxu0 0.0
  %3160 = vmatpush2.msra.mxu0 0.0
  %3161 = vmatprep.subr.mxu0 0.0
  %3162 = vmatpush2.msra.mxu0 0.0
  %3163 = vmatprep.subr.mxu0 0.0
  %3164 = vmatpush2.msra.mxu0 0.0
  %3165 = vmatprep.mubr.f32.mxu0 0.0
  %3166 = vmatmul.mubr.f32.gmra.mxu0 %v3099
  %v3167 = vpop.f32.mrf.mxu0
  %v3168 = vadd.f32 0.0, %v3167
  %v3169 = vpop.f32.mrf.mxu0
  %v3170 = vadd.f32 0.0, %v3169
  %3171 = vdwg.mxu0
  %3172 = vmatprep.subr.mxu0 %v202
  %3173 = vmatpush1.msra.mxu0 %v201
  %3174 = vmatprep.subr.mxu0 %v198
  %3175 = vmatpush1.msra.mxu0 %v197
  %3176 = vmatprep.subr.mxu0 %v194
  %3177 = vmatpush1.msra.mxu0 %v193
  %3178 = vmatprep.subr.mxu0 %v190
  %3179 = vmatpush1.msra.mxu0 %v189
  %3180 = vmatprep.subr.mxu0 %v186
  %3181 = vmatpush1.msra.mxu0 %v185
  %3182 = vmatprep.subr.mxu0 %v182
  %3183 = vmatpush1.msra.mxu0 %v181
  %3184 = vmatprep.subr.mxu0 %v178
  %3185 = vmatpush1.msra.mxu0 %v177
  %3186 = vmatprep.subr.mxu0 %v174
  %3187 = vmatpush1.msra.mxu0 %v173
  %3188 = vmatprep.subr.mxu0 %v170
  %3189 = vmatpush1.msra.mxu0 %v169
  %3190 = vmatprep.subr.mxu0 %v166
  %3191 = vmatpush1.msra.mxu0 %v165
  %3192 = vmatprep.subr.mxu0 %v162
  %3193 = vmatpush1.msra.mxu0 %v161
  %3194 = vmatprep.subr.mxu0 %v158
  %3195 = vmatpush1.msra.mxu0 %v157
  %3196 = vmatprep.subr.mxu0 %v154
  %3197 = vmatpush1.msra.mxu0 %v153
  %3198 = vmatprep.subr.mxu0 %v150
  %3199 = vmatpush1.msra.mxu0 %v149
  %3200 = vmatprep.subr.mxu0 %v146
  %3201 = vmatpush1.msra.mxu0 %v145
  %3202 = vmatprep.subr.mxu0 %v142
  %3203 = vmatpush1.msra.mxu0 %v141
  %3204 = vmatprep.subr.mxu0 0.0
  %3205 = vmatpush2.msra.mxu0 0.0
  %3206 = vmatprep.subr.mxu0 0.0
  %3207 = vmatpush2.msra.mxu0 0.0
  %3208 = vmatprep.subr.mxu0 0.0
  %3209 = vmatpush2.msra.mxu0 0.0
  %3210 = vmatprep.subr.mxu0 0.0
  %3211 = vmatpush2.msra.mxu0 0.0
  %3212 = vmatprep.subr.mxu0 0.0
  %3213 = vmatpush2.msra.mxu0 0.0
  %3214 = vmatprep.subr.mxu0 0.0
  %3215 = vmatpush2.msra.mxu0 0.0
  %3216 = vmatprep.subr.mxu0 0.0
  %3217 = vmatpush2.msra.mxu0 0.0
  %3218 = vmatprep.subr.mxu0 0.0
  %3219 = vmatpush2.msra.mxu0 0.0
  %3220 = vmatprep.subr.mxu0 0.0
  %3221 = vmatpush2.msra.mxu0 0.0
  %3222 = vmatprep.subr.mxu0 0.0
  %3223 = vmatpush2.msra.mxu0 0.0
  %3224 = vmatprep.subr.mxu0 0.0
  %3225 = vmatpush2.msra.mxu0 0.0
  %3226 = vmatprep.subr.mxu0 0.0
  %3227 = vmatpush2.msra.mxu0 0.0
  %3228 = vmatprep.subr.mxu0 0.0
  %3229 = vmatpush2.msra.mxu0 0.0
  %3230 = vmatprep.subr.mxu0 0.0
  %3231 = vmatpush2.msra.mxu0 0.0
  %3232 = vmatprep.subr.mxu0 0.0
  %3233 = vmatpush2.msra.mxu0 0.0
  %3234 = vmatprep.subr.mxu0 0.0
  %3235 = vmatpush2.msra.mxu0 0.0
  %3236 = vmatprep.mubr.f32.mxu0 0.0
  %3237 = vmatmul.mubr.f32.gmra.mxu0 %v3099
  %v3238 = vpop.f32.mrf.mxu0
  %v3239 = vadd.f32 0.0, %v3238
  %v3240 = vpop.f32.mrf.mxu0
  %v3241 = vadd.f32 0.0, %v3240
  %3242 = vdwg.mxu0
  %v3243 = vadd.f32 %v3095, %v3168
  %v3244 = vadd.f32 %v3096, %v3170
  %v3245 = vadd.f32 %v3097, %v3239
  %v3246 = vadd.f32 %v3098, %v3241
  %v3247 = vxor.u32 %v3243, 2147483648
  %v3248 = vmul.f32 %v3247, 1.442695
  %v3249 = vpow.pop %v3248
  %v3250 = vadd.f32 %v3249, 1.0
  %v3251 = vrcp.pop %v3250
  %v3252 = vmul.f32 1.0, %v3251
  %v3253 = vxor.u32 %v3244, 2147483648
  %v3254 = vmul.f32 %v3253, 1.442695
  %v3255 = vpow.pop %v3254
  %v3256 = vadd.f32 %v3255, 1.0
  %v3257 = vrcp.pop %v3256
  %v3258 = vmul.f32 1.0, %v3257
  %v3259 = vtanh.pop %v3245
  %v3260 = vxor.u32 %v3246, 2147483648
  %v3261 = vmul.f32 %v3260, 1.442695
  %v3262 = vpow.pop %v3261
  %v3263 = vadd.f32 %v3262, 1.0
  %v3264 = vrcp.pop %v3263
  %v3265 = vmul.f32 1.0, %v3264
  %v3266 = vmul.f32 %v3258, %v3100
  %v3267 = vmul.f32 %v3252, %v3259
  %v3268 = vadd.f32 %v3266, %v3267
  %v3269 = vtanh.pop %v3268
  %v3270 = vmul.f32 %v3265, %v3269
  %v3271 = vstv %s74
  %vm3272 = vcmp.gt.s32.totalorder %v71, %v3271
  %v3273 = vsel %vm3272, 1, 0
  %3274 = vset.pattern.permute.xlu0 0
  %3275 = vperm.xlu0 %3274, %v3273
  %v3276 = vpop.permute.xlu0 %3275
  %vm3277 = vcmp.eq.s32.totalorder %v3276, 1
  %v3278 = vsel %vm3277, %v3270, %v3099
  %3279 = vst [vmem:[#allocation4] sm:$0xff] %v3278
  %v3280 = vld [vmem:[#allocation5] sm:$0xff]
  %v3281 = vsel %vm3277, %v3268, %v3280
  %3282 = vst [vmem:[#allocation5] sm:$0xff] %v3281
  %v3283 = vsel %vm3277, %v3270, 0.0
  %3284 = vst [vmem:[%s60] sm:$0xff] %v3283
  %v3285 = vld [vmem:[#allocation2] sm:$0xff]
  %3286 = vst [vmem:[%s7] sm:$0xff] %v3285
  %v3287 = vld [vmem:[#allocation4] sm:$0xff]
  %s3288 = scalar_lea.vmem %s7, 8
  %3289 = vst [vmem:[%s3288] sm:$0xff] %v3287
  %v3290 = vld [vmem:[#allocation3] sm:$0xff]
  %3291 = vst [vmem:[%s8] sm:$0xff] %v3290
  %v3292 = vld [vmem:[#allocation5] sm:$0xff]
  %s3293 = scalar_lea.vmem %s8, 8
  %3294 = vst [vmem:[%s3293] sm:$0xff] %v3292
  %s3295 = ssub.s32 0, 0
  %s3296 = smul.u32 8, %s3295
  %p3297 = scmp.lt.s32.totalorder %s3296, 7
  %s3298 = scalar_select %p3297, %s3296, 7
  %s3299 = smul.addr %s3298, 8
  %s3300 = scalar_lea.vmem %s6, %s3299
  // Predicated region
  $region26: #{encoder_forward.3} parent=0 // pred_check
    _
  $region27: #{encoder_forward.3} parent=0 // pred_check_branch
    %3302 = sbr.rel (0) target = $region29
  $region28: #{encoder_forward.3} parent=0 // pred_region
    _
  $region29: #{encoder_forward.3} parent=0 // pred_fallthru
    _
  // Predicated region
  $region30: #{encoder_forward.3} parent=0 // pred_check
    _
  $region31: #{encoder_forward.3} parent=0 // pred_check_branch
    %3304 = sbr.rel (0) target = $region33
  $region32: #{encoder_forward.3} parent=0 // pred_region
    %s3305 = ssub.s32 0, 0
    %s3306 = smul.u32 8, %s3305
  $region33: #{encoder_forward.3} parent=0 // pred_fallthru
    _
  // Predicated region
  $region34: #{encoder_forward.3} parent=0 // pred_check
    _
  $region35: #{encoder_forward.3} parent=0 // pred_check_branch
    %3308 = sbr.rel (0) target = $region37
  $region36: #{encoder_forward.3} parent=0 // pred_region
    _
  $region37: #{encoder_forward.3} parent=0 // pred_fallthru
    _
  // Predicated region
  $region38: #{encoder_forward.3} parent=0 // pred_check
    _
  $region39: #{encoder_forward.3} parent=0 // pred_check_branch
    %3310 = sbr.rel (0) target = $region41
  $region40: #{encoder_forward.3} parent=0 // pred_region
    _
  $region41: #{encoder_forward.3} parent=0 // pred_fallthru
    _
  // Predicated region
  $region42: #{encoder_forward.3} parent=0 // pred_check
    _
  $region43: #{encoder_forward.3} parent=0 // pred_check_branch
    %3312 = sbr.rel (0) target = $region45
  $region44: #{encoder_forward.3} parent=0 // pred_region
    _
  $region45: #{encoder_forward.3} parent=0 // pred_fallthru
    _
  // Predicated region
  $region46: #{encoder_forward.3} parent=0 // pred_check
    _
  $region47: #{encoder_forward.3} parent=0 // pred_check_branch
    %3314 = sbr.rel (0) target = $region49
  $region48: #{encoder_forward.3} parent=0 // pred_region
    %s3315 = ssub.s32 0, 0
    %s3316 = smul.u32 8, %s3315
    %p3317 = scmp.lt.s32.totalorder %s3316, 7
    %s3318 = scalar_select %p3317, %s3316, 7
    %s3319 = smul.addr %s3318, 8
    %s3320 = scalar_lea.vmem %s6, %s3319
  $region49: #{encoder_forward.3} parent=0 // pred_fallthru
    _
  // Predicated region
  $region50: #{encoder_forward.3} parent=0 // pred_check
    _
  $region51: #{encoder_forward.3} parent=0 // pred_check_branch
    %3322 = sbr.rel (0) target = $region53
  $region52: #{encoder_forward.3} parent=0 // pred_region
    _
  $region53: #{encoder_forward.3} parent=0 // pred_fallthru
    _
  // Predicated region
  $region54: #{encoder_forward.3} parent=0 // pred_check
    _
  $region55: #{encoder_forward.3} parent=0 // pred_check_branch
    %3324 = sbr.rel (0) target = $region57
  $region56: #{encoder_forward.3} parent=0 // pred_region
    _
  $region57: #{encoder_forward.3} parent=0 // pred_fallthru
    _

</llo_original>
